<compile_context>
chip_gen: v6e
topology: v6e:2x2x1
jax: 0.10.0
libtpu: 0.0.40
codegen_flags: <defaults>
</compile_context>

<pallas_src>
import jax
import jax.numpy as jnp
from jax import lax
from jax.experimental import pallas as pl
from jax.experimental.pallas import tpu as pltpu

LN_EPS = 1e-5


def _round_up(x, m):
    return ((x + m - 1) // m) * m


def _gelu_tanh(y):
    # tanh-based GELU approximation (EUP-friendly).
    c = 0.7978845608028654  # sqrt(2/pi)
    return 0.5 * y * (1.0 + jnp.tanh(c * (y + 0.044715 * y * y * y)))


# ------------- fused (LayerNorm?) -> matmul -> +bias -> (GELU?) -> (+residual) kernel -------------
def _make_mm_kernel(apply_ln, act, has_bias, has_res, k_real):
    """o = [res +] act( LN?(x) @ w + bias ).  LN uses E[x^2]-mu^2 with the *real* K as divisor so
       zero-padded K columns (zero gamma/beta, zero w rows) are exactly neutral."""
    def kernel(*refs):
        idx = 0
        x_ref = refs[idx]; idx += 1
        if apply_ln:
            g_ref = refs[idx]; b_ref = refs[idx + 1]; idx += 2
        w_ref = refs[idx]; idx += 1
        if has_bias:
            bias_ref = refs[idx]; idx += 1
        if has_res:
            res_ref = refs[idx]; idx += 1
        o_ref = refs[idx]

        x = x_ref[...]
        if apply_ln:
            x = x.astype(jnp.float32)
            inv_k = 1.0 / k_real
            mu = jnp.sum(x, axis=-1, keepdims=True) * inv_k
            ex2 = jnp.sum(x * x, axis=-1, keepdims=True) * inv_k
            var = ex2 - mu * mu
            x = (x - mu) * lax.rsqrt(var + LN_EPS) * g_ref[...] + b_ref[...]
        y = jnp.dot(x.astype(jnp.bfloat16), w_ref[...],
                    preferred_element_type=jnp.float32)
        if has_bias:
            y = y + bias_ref[...]
        if act == "gelu":
            y = _gelu_tanh(y)
        if has_res:
            y = y + res_ref[...]
        o_ref[...] = y.astype(o_ref.dtype)
    return kernel


def _choose_tm(Mp0, Kp):
    budget = 4 * 1024 * 1024            # bytes for one f32 x block
    if Mp0 <= 1024 and Mp0 * Kp * 4 <= budget:
        return Mp0
    for tm in (512, 256, 128, 64, 32, 16):
        if tm * Kp * 4 <= budget:
            return tm
    return 16


def matmul_fused(x, w, bias=None, act="none", ln=None, residual=None,
                 out_dtype=jnp.float32):
    """y = [residual +] act( LN?(x) @ w + bias ).
       x: (M, K) activations (f32 or bf16); w: (K, N) bf16 weight (pre-transposed);
       bias: (N,) f32 or None; ln: None or (gamma, beta) each (K,);
       residual: (M, N) f32 or None (added after the activation)."""
    M, K = x.shape
    K2, N = w.shape
    assert K == K2
    Mp0 = _round_up(M, 16)
    Kp = _round_up(K, 128)
    Np = _round_up(N, 128)

    tm = _choose_tm(Mp0, Kp)
    Mp = _round_up(Mp0, tm)
    if Np <= 512:
        tn = Np
    elif Np % 512 == 0:
        tn = 512
    elif Np % 256 == 0:
        tn = 256
    else:
        tn = 128

    x_p = x if (Mp == M and Kp == K) else jnp.pad(x, ((0, Mp - M), (0, Kp - K)))
    w_p = w.astype(jnp.bfloat16)
    if Kp != K or Np != N:
        w_p = jnp.pad(w_p, ((0, Kp - K), (0, Np - N)))

    args = [x_p]
    in_specs = [pl.BlockSpec((tm, Kp), lambda i, j: (i, 0))]
    if ln is not None:
        g, be = ln
        g_p = g.astype(jnp.float32)
        be_p = be.astype(jnp.float32)
        if Kp != K:
            g_p = jnp.pad(g_p, (0, Kp - K))
            be_p = jnp.pad(be_p, (0, Kp - K))
        args += [g_p.reshape(1, Kp), be_p.reshape(1, Kp)]
        in_specs += [pl.BlockSpec((1, Kp), lambda i, j: (0, 0)),
                     pl.BlockSpec((1, Kp), lambda i, j: (0, 0))]
    args.append(w_p)
    in_specs.append(pl.BlockSpec((Kp, tn), lambda i, j: (0, j)))
    if bias is not None:
        b_p = bias.astype(jnp.float32)
        if Np != N:
            b_p = jnp.pad(b_p, (0, Np - N))
        args.append(b_p.reshape(1, Np))
        in_specs.append(pl.BlockSpec((1, tn), lambda i, j: (0, j)))
    if residual is not None:
        r_p = residual.astype(jnp.float32)
        if Mp != M or Np != N:
            r_p = jnp.pad(r_p, ((0, Mp - M), (0, Np - N)))
        args.append(r_p)
        in_specs.append(pl.BlockSpec((tm, tn), lambda i, j: (i, j)))

    out = pl.pallas_call(
        _make_mm_kernel(ln is not None, act, bias is not None, residual is not None, K),
        out_shape=jax.ShapeDtypeStruct((Mp, Np), out_dtype),
        grid=(Mp // tm, Np // tn),
        in_specs=in_specs,
        out_specs=pl.BlockSpec((tm, tn), lambda i, j: (i, j)),
        compiler_params=pltpu.CompilerParams(
            dimension_semantics=("parallel", "parallel")),
    )(*args)
    if Mp != M or Np != N:
        out = out[:M, :N]
    return out


# ------------------------------- standalone LayerNorm (SR path only) -------------------------------
def _make_ln_kernel(k_real):
    def kernel(x_ref, g_ref, b_ref, o_ref):
        x = x_ref[...]
        inv_k = 1.0 / k_real
        mu = jnp.sum(x, axis=-1, keepdims=True) * inv_k
        ex2 = jnp.sum(x * x, axis=-1, keepdims=True) * inv_k
        var = ex2 - mu * mu
        o_ref[...] = (x - mu) * lax.rsqrt(var + LN_EPS) * g_ref[...] + b_ref[...]
    return kernel


def layernorm(x, g, b):
    """Row-tiled LayerNorm; only used when norm1(x) must be materialised
       (sr_ratio > 4 path, where the normalised tokens are re-patched for the SR conv)."""
    M, K = x.shape
    Mp = _round_up(M, 8)
    Kp = _round_up(K, 128)
    tm = Mp if Mp <= 1024 else 512
    Mp = _round_up(Mp, tm)
    x_p = x if (Mp == M and Kp == K) else jnp.pad(x, ((0, Mp - M), (0, Kp - K)))
    g_p = g if Kp == K else jnp.pad(g, (0, Kp - K))
    b_p = b if Kp == K else jnp.pad(b, (0, Kp - K))
    out = pl.pallas_call(
        _make_ln_kernel(K),
        out_shape=jax.ShapeDtypeStruct((Mp, Kp), jnp.float32),
        grid=(Mp // tm,),
        in_specs=[pl.BlockSpec((tm, Kp), lambda i: (i, 0)),
                  pl.BlockSpec((1, Kp), lambda i: (0, 0)),
                  pl.BlockSpec((1, Kp), lambda i: (0, 0))],
        out_specs=pl.BlockSpec((tm, Kp), lambda i: (i, 0)),
        compiler_params=pltpu.CompilerParams(dimension_semantics=("parallel",)),
    )(x_p, g_p.reshape(1, Kp), b_p.reshape(1, Kp))
    if Mp != M or Kp != K:
        out = out[:M, :K]
    return out


# --------------------------------------- fused attention core ---------------------------------------
def _make_attn_kernel(nk_real, nk_pad, scale):
    def kernel(q_ref, k_ref, v_ref, o_ref):
        # scale q (fewer elements than the score matrix), in f32 for accuracy.
        q = (q_ref[...].astype(jnp.float32) * scale).astype(jnp.bfloat16)
        k = k_ref[...].astype(jnp.bfloat16)
        v = v_ref[...].astype(jnp.bfloat16)
        s = jnp.einsum('gqd,gkd->gqk', q, k, preferred_element_type=jnp.float32)
        if nk_pad > nk_real:  # mask zero-padded key positions out of the softmax
            col = lax.broadcasted_iota(jnp.int32, s.shape, 2)
            s = jnp.where(col < nk_real, s, -1e30)
        m = jnp.max(s, axis=-1, keepdims=True)
        e = jnp.exp(s - m)
        p = e * pl.reciprocal(jnp.sum(e, axis=-1, keepdims=True), approx=True)
        o = jnp.einsum('gqk,gkd->gqd', p.astype(jnp.bfloat16), v,
                       preferred_element_type=jnp.float32)
        o_ref[...] = o.astype(o_ref.dtype)
    return kernel


def fused_attention(q, k, v, scale):
    """softmax(q @ k^T * scale) @ v, several (batch*head) groups per grid step.
       q: (G, Nq, D), k/v: (G, Nk, D) -> (G, Nq, D), dtype preserved."""
    G, Nq, D = q.shape
    _, Nk, _ = k.shape
    Nqp = _round_up(Nq, 16)
    Nkp = _round_up(Nk, 128)
    Dp = _round_up(D, 128)

    esz = 2 if q.dtype == jnp.bfloat16 else 4
    # rough per-group VMEM footprint (double-buffered in/out + f32 score matrix)
    per_group = 2 * esz * (2 * Nqp * Dp + 2 * Nkp * Dp) + 4 * Nqp * Nkp
    cap = max(1, (6 * 1024 * 1024) // max(per_group, 1))
    gb = 1
    for d in range(1, G + 1):
        if G % d == 0 and d <= cap:
            gb = d

    q_p = q if (Nqp == Nq and Dp == D) else jnp.pad(q, ((0, 0), (0, Nqp - Nq), (0, Dp - D)))
    kv_pad = (Nkp != Nk) or (Dp != D)
    k_p = k if not kv_pad else jnp.pad(k, ((0, 0), (0, Nkp - Nk), (0, Dp - D)))
    v_p = v if not kv_pad else jnp.pad(v, ((0, 0), (0, Nkp - Nk), (0, Dp - D)))

    out = pl.pallas_call(
        _make_attn_kernel(Nk, Nkp, scale),
        out_shape=jax.ShapeDtypeStruct((G, Nqp, Dp), q.dtype),
        grid=(G // gb,),
        in_specs=[pl.BlockSpec((gb, Nqp, Dp), lambda g: (g, 0, 0)),
                  pl.BlockSpec((gb, Nkp, Dp), lambda g: (g, 0, 0)),
                  pl.BlockSpec((gb, Nkp, Dp), lambda g: (g, 0, 0))],
        out_specs=pl.BlockSpec((gb, Nqp, Dp), lambda g: (g, 0, 0)),
        compiler_params=pltpu.CompilerParams(dimension_semantics=("parallel",)),
    )(q_p, k_p, v_p)
    if Nqp != Nq or Dp != D:
        out = out[:, :Nq, :D]
    return out


# --------------------------------------------- Block ---------------------------------------------
def block_forward(x, H, W, p, num_heads, sr_ratio):
    """PVT Block (eval): x = x + Attn(norm1(x), H, W); x = x + Mlp(norm2(x)).
       Dropout / DropPath are identity in eval mode."""
    B, N, C = x.shape
    hd = C // num_heads
    scale = hd ** -0.5
    x2 = x.reshape(B * N, C)

    # ---------------- attention branch (norm1 fused into the q/kv matmuls) ----------------
    if sr_ratio > 4:
        # Reference forward applies the spatial-reduction conv only when sr_ratio > 4.
        h = layernorm(x2, p["n1_w"], p["n1_b"])            # norm1 materialised for re-patching
        q2 = matmul_fused(h, p["q_w"], out_dtype=jnp.bfloat16)       # qkv_bias = False
        s = sr_ratio
        Ho, Wo = H // s, W // s
        patches = h.reshape(B, Ho, s, Wo, s, C).transpose(0, 1, 3, 5, 2, 4)
        patches = patches.reshape(B * Ho * Wo, C * s * s)  # kernel==stride conv -> matmul
        x_sr = matmul_fused(patches, p["sr_w"], p["sr_b"])
        kv2 = matmul_fused(x_sr, p["kv_w"], ln=(p["srn_w"], p["srn_b"]),
                           out_dtype=jnp.bfloat16)         # sr-norm fused into kv
        Nk = Ho * Wo
    else:
        # one fused kernel: LayerNorm prologue + concatenated [q | kv] weight
        qkv2 = matmul_fused(x2, p["qkv_w"], ln=(p["n1_w"], p["n1_b"]),
                            out_dtype=jnp.bfloat16)
        q2, kv2 = qkv2[:, :C], qkv2[:, C:]
        Nk = N

    q = q2.reshape(B, N, num_heads, hd).transpose(0, 2, 1, 3).reshape(B * num_heads, N, hd)
    kv = kv2.reshape(B, Nk, 2, num_heads, hd).transpose(2, 0, 3, 1, 4)
    k = kv[0].reshape(B * num_heads, Nk, hd)
    v = kv[1].reshape(B * num_heads, Nk, hd)

    attn = fused_attention(q, k, v, scale)                  # (B*h, N, hd) bf16
    attn = attn.reshape(B, num_heads, N, hd).transpose(0, 2, 1, 3).reshape(B * N, C)
    # proj + bias + residual fused (y = x + proj(attn))
    x2 = matmul_fused(attn, p["proj_w"], p["proj_b"], residual=x2)

    # ---------------- MLP branch (norm2 + fc1 + GELU fused; fc2 + bias + residual fused) ----------------
    h1 = matmul_fused(x2, p["fc1_w"], p["fc1_b"], act="gelu",
                      ln=(p["n2_w"], p["n2_b"]), out_dtype=jnp.bfloat16)
    out2 = matmul_fused(h1, p["fc2_w"], p["fc2_b"], residual=x2)
    return out2.reshape(B, N, C)


# ------------------------------------ deterministic param init ------------------------------------
def init_block_params(key, dim, num_heads, mlp_ratio, sr_ratio):
    """Weights are stored pre-transposed as (in, out) in bf16 (native MXU dtype);
       LN params and biases stay f32."""
    ks = jax.random.split(key, 16)

    def w(k, shape, std=0.02):
        return (std * jax.random.normal(k, shape, jnp.float32)).astype(jnp.bfloat16)

    def b(k, n, std=0.02):
        return std * jax.random.normal(k, (n,), jnp.float32)

    hidden = int(dim * mlp_ratio)
    p = {
        "n1_w": jnp.ones((dim,), jnp.float32), "n1_b": jnp.zeros((dim,), jnp.float32),
        "n2_w": jnp.ones((dim,), jnp.float32), "n2_b": jnp.zeros((dim,), jnp.float32),
        "proj_w": w(ks[0], (dim, dim)), "proj_b": b(ks[1], dim),
        "fc1_w": w(ks[2], (dim, hidden)), "fc1_b": b(ks[3], hidden),
        "fc2_w": w(ks[4], (hidden, dim)), "fc2_b": b(ks[5], dim),
    }
    if sr_ratio > 4:
        p["q_w"] = w(ks[6], (dim, dim))
        p["kv_w"] = w(ks[7], (dim, 2 * dim))
        p["sr_w"] = w(ks[8], (dim * sr_ratio * sr_ratio, dim), std=0.01)
        p["sr_b"] = b(ks[9], dim)
        p["srn_w"] = jnp.ones((dim,), jnp.float32)
        p["srn_b"] = jnp.zeros((dim,), jnp.float32)
    else:
        p["qkv_w"] = w(ks[10], (dim, 3 * dim))   # concat of q (dim) and kv (2*dim) output columns
    return p


# --------------------------------------------- main ---------------------------------------------
if __name__ == "__main__":
    key = jax.random.PRNGKey(0)
    B, H, W, dim, heads, mlp_ratio = 2, 8, 8, 128, 2, 4.0
    N = H * W
    kx, k1, k2 = jax.random.split(key, 3)
    x = jax.random.normal(kx, (B, N, dim), dtype=jnp.float32)

    params_sr1 = init_block_params(k1, dim, heads, mlp_ratio, sr_ratio=1)   # full-length KV path
    params_sr8 = init_block_params(k2, dim, heads, mlp_ratio, sr_ratio=8)   # spatial-reduction path

    fwd_sr1 = jax.jit(lambda xx, pp: block_forward(xx, H, W, pp, heads, 1))
    fwd_sr8 = jax.jit(lambda xx, pp: block_forward(xx, H, W, pp, heads, 8))

    y1 = fwd_sr1(x, params_sr1)
    y8 = fwd_sr8(x, params_sr8)
    jax.block_until_ready((y1, y8))

    assert y1.shape == (B, N, dim) and y8.shape == (B, N, dim)
    assert bool(jnp.all(jnp.isfinite(y1))) and bool(jnp.all(jnp.isfinite(y8)))
    print("KERNEL_OK")
</pallas_src>

<mosaic_0001>
module attributes {stable_mosaic.version = 11 : i64} {
  func.func @kernel(%arg0: i32, %arg1: i32, %arg2: memref<128x128xf32, #tpu.memory_space<vmem>>, %arg3: memref<1x128xf32, #tpu.memory_space<vmem>>, %arg4: memref<1x128xf32, #tpu.memory_space<vmem>>, %arg5: memref<128x384xbf16, #tpu.memory_space<vmem>>, %arg6: memref<128x384xbf16, #tpu.memory_space<vmem>>) attributes {dimension_semantics = [#tpu.dimension_semantics<parallel>, #tpu.dimension_semantics<parallel>], iteration_bounds = array<i64: 1, 1>, scalar_prefetch = 0 : i64, scratch_operands = 0 : i64, tpu.core_type = #tpu.core_type<tc>, window_params = [{transform_indices = @transform_0, window_bounds = array<i64: 128, 128>}, {pipeline_mode = #tpu.pipeline_mode<synchronous>, transform_indices = @transform_1, window_bounds = array<i64: 1, 128>}, {pipeline_mode = #tpu.pipeline_mode<synchronous>, transform_indices = @transform_2, window_bounds = array<i64: 1, 128>}, {transform_indices = @transform_3, window_bounds = array<i64: 128, 384>}, {transform_indices = @transform_4, window_bounds = array<i64: 128, 384>}]} {
    %c0 = arith.constant 0 : index
    %c0_0 = arith.constant 0 : index
    %0 = vector.load %arg2[%c0, %c0_0] : memref<128x128xf32, #tpu.memory_space<vmem>>, vector<128x128xf32>
    %cst = arith.constant dense<0.000000e+00> : vector<128xf32>
    %1 = vector.multi_reduction <add>, %0, %cst [1] : vector<128x128xf32> to vector<128xf32>
    %2 = vector.shape_cast %1 : vector<128xf32> to vector<128x1xf32>
    %cst_1 = arith.constant 7.812500e-03 : f32
    %3 = vector.broadcast %cst_1 : f32 to vector<128x1xf32>
    %4 = arith.mulf %2, %3 : vector<128x1xf32>
    %5 = arith.mulf %0, %0 : vector<128x128xf32>
    %cst_2 = arith.constant dense<0.000000e+00> : vector<128xf32>
    %6 = vector.multi_reduction <add>, %5, %cst_2 [1] : vector<128x128xf32> to vector<128xf32>
    %7 = vector.shape_cast %6 : vector<128xf32> to vector<128x1xf32>
    %cst_3 = arith.constant 7.812500e-03 : f32
    %8 = vector.broadcast %cst_3 : f32 to vector<128x1xf32>
    %9 = arith.mulf %7, %8 : vector<128x1xf32>
    %10 = arith.mulf %4, %4 : vector<128x1xf32>
    %11 = arith.subf %9, %10 : vector<128x1xf32>
    %12 = vector.broadcast %4 : vector<128x1xf32> to vector<128x128xf32>
    %13 = arith.subf %0, %12 : vector<128x128xf32>
    %cst_4 = arith.constant 9.99999974E-6 : f32
    %14 = vector.broadcast %cst_4 : f32 to vector<128x1xf32>
    %15 = arith.addf %11, %14 : vector<128x1xf32>
    %16 = math.rsqrt %15 : vector<128x1xf32>
    %17 = vector.broadcast %16 : vector<128x1xf32> to vector<128x128xf32>
    %18 = arith.mulf %13, %17 : vector<128x128xf32>
    %c0_5 = arith.constant 0 : index
    %c0_6 = arith.constant 0 : index
    %19 = vector.load %arg3[%c0_5, %c0_6] : memref<1x128xf32, #tpu.memory_space<vmem>>, vector<1x128xf32>
    %20 = vector.broadcast %19 : vector<1x128xf32> to vector<128x128xf32>
    %21 = arith.mulf %18, %20 : vector<128x128xf32>
    %c0_7 = arith.constant 0 : index
    %c0_8 = arith.constant 0 : index
    %22 = vector.load %arg4[%c0_7, %c0_8] : memref<1x128xf32, #tpu.memory_space<vmem>>, vector<1x128xf32>
    %23 = vector.broadcast %22 : vector<1x128xf32> to vector<128x128xf32>
    %24 = arith.addf %21, %23 : vector<128x128xf32>
    %25 = arith.truncf %24 : vector<128x128xf32> to vector<128x128xbf16>
    %c0_9 = arith.constant 0 : index
    %c0_10 = arith.constant 0 : index
    %26 = vector.load %arg5[%c0_9, %c0_10] : memref<128x384xbf16, #tpu.memory_space<vmem>>, vector<128x384xbf16>
    %cst_11 = arith.constant dense<0.000000e+00> : vector<128x384xf32>
    %27 = tpu.matmul %25, %26, %cst_11 {dimension_numbers = #tpu.dot_dimension_numbers<[1], [0], [0], [1], [0, 0, 1, 1], [], []>} : vector<128x128xbf16>, vector<128x384xbf16>, vector<128x384xf32> -> vector<128x384xf32>
    %28 = arith.truncf %27 : vector<128x384xf32> to vector<128x384xbf16>
    %c0_12 = arith.constant 0 : index
    %c0_13 = arith.constant 0 : index
    %29 = vector.load %arg6[%c0_12, %c0_13] : memref<128x384xbf16, #tpu.memory_space<vmem>>, vector<128x384xbf16>
    tpu.vector_store %arg6[%c0_12, %c0_13], %28 {strides = array<i32>} : memref<128x384xbf16, #tpu.memory_space<vmem>>, vector<128x384xbf16>,
    return
  }
  func.func @transform_0(%arg0: i32, %arg1: i32) -> (i32, i32) {
    %c0_i32 = arith.constant 0 : i32
    %c0_i32_0 = arith.constant 0 : i32
    return %arg0, %c0_i32 : i32, i32
  }
  func.func @transform_1(%arg0: i32, %arg1: i32) -> (i32, i32) {
    %c0_i32 = arith.constant 0 : i32
    %c0_i32_0 = arith.constant 0 : i32
    %c0_i32_1 = arith.constant 0 : i32
    return %c0_i32, %c0_i32_0 : i32, i32
  }
  func.func @transform_2(%arg0: i32, %arg1: i32) -> (i32, i32) {
    %c0_i32 = arith.constant 0 : i32
    %c0_i32_0 = arith.constant 0 : i32
    %c0_i32_1 = arith.constant 0 : i32
    return %c0_i32, %c0_i32_0 : i32, i32
  }
  func.func @transform_3(%arg0: i32, %arg1: i32) -> (i32, i32) {
    %c0_i32 = arith.constant 0 : i32
    %c0_i32_0 = arith.constant 0 : i32
    return %c0_i32, %arg1 : i32, i32
  }
  func.func @transform_4(%arg0: i32, %arg1: i32) -> (i32, i32) {
    %c0_i32 = arith.constant 0 : i32
    return %arg0, %arg1 : i32, i32
  }
}

module attributes {stable_mosaic.version = 11 : i64} {
  func.func @kernel(%arg0: i32, %arg1: memref<4x64x128xbf16, #tpu.memory_space<vmem>>, %arg2: memref<4x128x128xbf16, #tpu.memory_space<vmem>>, %arg3: memref<4x128x128xbf16, #tpu.memory_space<vmem>>, %arg4: memref<4x64x128xbf16, #tpu.memory_space<vmem>>) attributes {dimension_semantics = [#tpu.dimension_semantics<parallel>], iteration_bounds = array<i64: 1>, scalar_prefetch = 0 : i64, scratch_operands = 0 : i64, tpu.core_type = #tpu.core_type<tc>, window_params = [{transform_indices = @transform_0, window_bounds = array<i64: 4, 64, 128>}, {transform_indices = @transform_1, window_bounds = array<i64: 4, 128, 128>}, {transform_indices = @transform_2, window_bounds = array<i64: 4, 128, 128>}, {transform_indices = @transform_3, window_bounds = array<i64: 4, 64, 128>}]} {
    %c0 = arith.constant 0 : index
    %c0_0 = arith.constant 0 : index
    %c0_1 = arith.constant 0 : index
    %0 = vector.load %arg1[%c0, %c0_0, %c0_1] : memref<4x64x128xbf16, #tpu.memory_space<vmem>>, vector<4x64x128xbf16>
    %1 = arith.extf %0 : vector<4x64x128xbf16> to vector<4x64x128xf32>
    %cst = arith.constant 1.250000e-01 : f32
    %2 = vector.broadcast %cst : f32 to vector<4x64x128xf32>
    %3 = arith.mulf %1, %2 : vector<4x64x128xf32>
    %4 = arith.truncf %3 : vector<4x64x128xf32> to vector<4x64x128xbf16>
    %c0_2 = arith.constant 0 : index
    %c0_3 = arith.constant 0 : index
    %c0_4 = arith.constant 0 : index
    %5 = vector.load %arg2[%c0_2, %c0_3, %c0_4] : memref<4x128x128xbf16, #tpu.memory_space<vmem>>, vector<4x128x128xbf16>
    %c0_5 = arith.constant 0 : index
    %c0_6 = arith.constant 0 : index
    %c0_7 = arith.constant 0 : index
    %6 = vector.load %arg3[%c0_5, %c0_6, %c0_7] : memref<4x128x128xbf16, #tpu.memory_space<vmem>>, vector<4x128x128xbf16>
    "tpu.trace_start"() <{level = 10 : i32, message = "gqd,gkd->gqk"}> : () -> ()
    %cst_8 = arith.constant dense<0.000000e+00> : vector<4x64x128xf32>
    %7 = tpu.matmul %4, %5, %cst_8 {dimension_numbers = #tpu.dot_dimension_numbers<[2], [2], [1], [1], [0, 0, 0, 1, 1, 1], [0], [0]>} : vector<4x64x128xbf16>, vector<4x128x128xbf16>, vector<4x64x128xf32> -> vector<4x64x128xf32>
    "tpu.trace_stop"() : () -> ()
    %8 = tpu.iota {dimensions = array<i32: 2>} : vector<4x64x128xi32>
    %c64_i32 = arith.constant 64 : i32
    %9 = vector.broadcast %c64_i32 : i32 to vector<4x64x128xi32>
    %10 = arith.cmpi slt, %8, %9 : vector<4x64x128xi32>
    %cst_9 = arith.constant -1.000000e+30 : f32
    %11 = vector.broadcast %cst_9 : f32 to vector<4x64x128xf32>
    %12 = arith.select %10, %7, %11 : vector<4x64x128xi1>, vector<4x64x128xf32>
    %cst_10 = arith.constant dense<0xFF800000> : vector<4x64xf32>
    %13 = vector.multi_reduction <maximumf>, %12, %cst_10 [2] : vector<4x64x128xf32> to vector<4x64xf32>
    %14 = vector.shape_cast %13 : vector<4x64xf32> to vector<4x64x1xf32>
    %15 = vector.broadcast %14 : vector<4x64x1xf32> to vector<4x64x128xf32>
    %16 = arith.subf %12, %15 : vector<4x64x128xf32>
    %17 = math.exp %16 : vector<4x64x128xf32>
    %cst_11 = arith.constant dense<0.000000e+00> : vector<4x64xf32>
    %18 = vector.multi_reduction <add>, %17, %cst_11 [2] : vector<4x64x128xf32> to vector<4x64xf32>
    %19 = vector.shape_cast %18 : vector<4x64xf32> to vector<4x64x1xf32>
    %20 = tpu.reciprocal %19 {approx = true} : vector<4x64x1xf32> -> vector<4x64x1xf32>
    %21 = vector.broadcast %20 : vector<4x64x1xf32> to vector<4x64x128xf32>
    %22 = arith.mulf %17, %21 : vector<4x64x128xf32>
    %23 = arith.truncf %22 : vector<4x64x128xf32> to vector<4x64x128xbf16>
    "tpu.trace_start"() <{level = 10 : i32, message = "gqk,gkd->gqd"}> : () -> ()
    %cst_12 = arith.constant dense<0.000000e+00> : vector<4x64x128xf32>
    %24 = tpu.matmul %23, %6, %cst_12 {dimension_numbers = #tpu.dot_dimension_numbers<[2], [1], [1], [2], [0, 0, 0, 1, 1, 2], [0], [0]>} : vector<4x64x128xbf16>, vector<4x128x128xbf16>, vector<4x64x128xf32> -> vector<4x64x128xf32>
    "tpu.trace_stop"() : () -> ()
    %25 = arith.truncf %24 : vector<4x64x128xf32> to vector<4x64x128xbf16>
    %c0_13 = arith.constant 0 : index
    %c0_14 = arith.constant 0 : index
    %c0_15 = arith.constant 0 : index
    %26 = vector.load %arg4[%c0_13, %c0_14, %c0_15] : memref<4x64x128xbf16, #tpu.memory_space<vmem>>, vector<4x64x128xbf16>
    tpu.vector_store %arg4[%c0_13, %c0_14, %c0_15], %25 {strides = array<i32>} : memref<4x64x128xbf16, #tpu.memory_space<vmem>>, vector<4x64x128xbf16>,
    return
  }
  func.func @transform_0(%arg0: i32) -> (i32, i32, i32) {
    %c0_i32 = arith.constant 0 : i32
    %c0_i32_0 = arith.constant 0 : i32
    %c0_i32_1 = arith.constant 0 : i32
    return %arg0, %c0_i32, %c0_i32_0 : i32, i32, i32
  }
  func.func @transform_1(%arg0: i32) -> (i32, i32, i32) {
    %c0_i32 = arith.constant 0 : i32
    %c0_i32_0 = arith.constant 0 : i32
    %c0_i32_1 = arith.constant 0 : i32
    return %arg0, %c0_i32, %c0_i32_0 : i32, i32, i32
  }
  func.func @transform_2(%arg0: i32) -> (i32, i32, i32) {
    %c0_i32 = arith.constant 0 : i32
    %c0_i32_0 = arith.constant 0 : i32
    %c0_i32_1 = arith.constant 0 : i32
    return %arg0, %c0_i32, %c0_i32_0 : i32, i32, i32
  }
  func.func @transform_3(%arg0: i32) -> (i32, i32, i32) {
    %c0_i32 = arith.constant 0 : i32
    %c0_i32_0 = arith.constant 0 : i32
    %c0_i32_1 = arith.constant 0 : i32
    return %arg0, %c0_i32, %c0_i32_0 : i32, i32, i32
  }
}

module attributes {stable_mosaic.version = 11 : i64} {
  func.func @kernel(%arg0: i32, %arg1: i32, %arg2: memref<128x128xbf16, #tpu.memory_space<vmem>>, %arg3: memref<128x128xbf16, #tpu.memory_space<vmem>>, %arg4: memref<1x128xf32, #tpu.memory_space<vmem>>, %arg5: memref<128x128xf32, #tpu.memory_space<vmem>>, %arg6: memref<128x128xf32, #tpu.memory_space<vmem>>) attributes {dimension_semantics = [#tpu.dimension_semantics<parallel>, #tpu.dimension_semantics<parallel>], iteration_bounds = array<i64: 1, 1>, scalar_prefetch = 0 : i64, scratch_operands = 0 : i64, tpu.core_type = #tpu.core_type<tc>, window_params = [{transform_indices = @transform_0, window_bounds = array<i64: 128, 128>}, {transform_indices = @transform_1, window_bounds = array<i64: 128, 128>}, {transform_indices = @transform_2, window_bounds = array<i64: 1, 128>}, {transform_indices = @transform_3, window_bounds = array<i64: 128, 128>}, {transform_indices = @transform_4, window_bounds = array<i64: 128, 128>}]} {
    %c0 = arith.constant 0 : index
    %c0_0 = arith.constant 0 : index
    %0 = vector.load %arg2[%c0, %c0_0] : memref<128x128xbf16, #tpu.memory_space<vmem>>, vector<128x128xbf16>
    %c0_1 = arith.constant 0 : index
    %c0_2 = arith.constant 0 : index
    %1 = vector.load %arg3[%c0_1, %c0_2] : memref<128x128xbf16, #tpu.memory_space<vmem>>, vector<128x128xbf16>
    %cst = arith.constant dense<0.000000e+00> : vector<128x128xf32>
    %2 = tpu.matmul %0, %1, %cst {dimension_numbers = #tpu.dot_dimension_numbers<[1], [0], [0], [1], [0, 0, 1, 1], [], []>} : vector<128x128xbf16>, vector<128x128xbf16>, vector<128x128xf32> -> vector<128x128xf32>
    %c0_3 = arith.constant 0 : index
    %c0_4 = arith.constant 0 : index
    %3 = vector.load %arg4[%c0_3, %c0_4] : memref<1x128xf32, #tpu.memory_space<vmem>>, vector<1x128xf32>
    %4 = vector.broadcast %3 : vector<1x128xf32> to vector<128x128xf32>
    %5 = arith.addf %2, %4 : vector<128x128xf32>
    %c0_5 = arith.constant 0 : index
    %c0_6 = arith.constant 0 : index
    %6 = vector.load %arg5[%c0_5, %c0_6] : memref<128x128xf32, #tpu.memory_space<vmem>>, vector<128x128xf32>
    %7 = arith.addf %5, %6 : vector<128x128xf32>
    %c0_7 = arith.constant 0 : index
    %c0_8 = arith.constant 0 : index
    %8 = vector.load %arg6[%c0_7, %c0_8] : memref<128x128xf32, #tpu.memory_space<vmem>>, vector<128x128xf32>
    tpu.vector_store %arg6[%c0_7, %c0_8], %7 {strides = array<i32>} : memref<128x128xf32, #tpu.memory_space<vmem>>, vector<128x128xf32>,
    return
  }
  func.func @transform_0(%arg0: i32, %arg1: i32) -> (i32, i32) {
    %c0_i32 = arith.constant 0 : i32
    %c0_i32_0 = arith.constant 0 : i32
    return %arg0, %c0_i32 : i32, i32
  }
  func.func @transform_1(%arg0: i32, %arg1: i32) -> (i32, i32) {
    %c0_i32 = arith.constant 0 : i32
    %c0_i32_0 = arith.constant 0 : i32
    return %c0_i32, %arg1 : i32, i32
  }
  func.func @transform_2(%arg0: i32, %arg1: i32) -> (i32, i32) {
    %c0_i32 = arith.constant 0 : i32
    %c0_i32_0 = arith.constant 0 : i32
    return %c0_i32, %arg1 : i32, i32
  }
  func.func @transform_3(%arg0: i32, %arg1: i32) -> (i32, i32) {
    %c0_i32 = arith.constant 0 : i32
    return %arg0, %arg1 : i32, i32
  }
  func.func @transform_4(%arg0: i32, %arg1: i32) -> (i32, i32) {
    %c0_i32 = arith.constant 0 : i32
    return %arg0, %arg1 : i32, i32
  }
}

module attributes {stable_mosaic.version = 11 : i64} {
  func.func @kernel(%arg0: i32, %arg1: i32, %arg2: memref<128x128xf32, #tpu.memory_space<vmem>>, %arg3: memref<1x128xf32, #tpu.memory_space<vmem>>, %arg4: memref<1x128xf32, #tpu.memory_space<vmem>>, %arg5: memref<128x512xbf16, #tpu.memory_space<vmem>>, %arg6: memref<1x512xf32, #tpu.memory_space<vmem>>, %arg7: memref<128x512xbf16, #tpu.memory_space<vmem>>) attributes {dimension_semantics = [#tpu.dimension_semantics<parallel>, #tpu.dimension_semantics<parallel>], iteration_bounds = array<i64: 1, 1>, scalar_prefetch = 0 : i64, scratch_operands = 0 : i64, tpu.core_type = #tpu.core_type<tc>, window_params = [{transform_indices = @transform_0, window_bounds = array<i64: 128, 128>}, {pipeline_mode = #tpu.pipeline_mode<synchronous>, transform_indices = @transform_1, window_bounds = array<i64: 1, 128>}, {pipeline_mode = #tpu.pipeline_mode<synchronous>, transform_indices = @transform_2, window_bounds = array<i64: 1, 128>}, {transform_indices = @transform_3, window_bounds = array<i64: 128, 512>}, {transform_indices = @transform_4, window_bounds = array<i64: 1, 512>}, {transform_indices = @transform_5, window_bounds = array<i64: 128, 512>}]} {
    %c0 = arith.constant 0 : index
    %c0_0 = arith.constant 0 : index
    %0 = vector.load %arg2[%c0, %c0_0] : memref<128x128xf32, #tpu.memory_space<vmem>>, vector<128x128xf32>
    %cst = arith.constant dense<0.000000e+00> : vector<128xf32>
    %1 = vector.multi_reduction <add>, %0, %cst [1] : vector<128x128xf32> to vector<128xf32>
    %2 = vector.shape_cast %1 : vector<128xf32> to vector<128x1xf32>
    %cst_1 = arith.constant 7.812500e-03 : f32
    %3 = vector.broadcast %cst_1 : f32 to vector<128x1xf32>
    %4 = arith.mulf %2, %3 : vector<128x1xf32>
    %5 = arith.mulf %0, %0 : vector<128x128xf32>
    %cst_2 = arith.constant dense<0.000000e+00> : vector<128xf32>
    %6 = vector.multi_reduction <add>, %5, %cst_2 [1] : vector<128x128xf32> to vector<128xf32>
    %7 = vector.shape_cast %6 : vector<128xf32> to vector<128x1xf32>
    %cst_3 = arith.constant 7.812500e-03 : f32
    %8 = vector.broadcast %cst_3 : f32 to vector<128x1xf32>
    %9 = arith.mulf %7, %8 : vector<128x1xf32>
    %10 = arith.mulf %4, %4 : vector<128x1xf32>
    %11 = arith.subf %9, %10 : vector<128x1xf32>
    %12 = vector.broadcast %4 : vector<128x1xf32> to vector<128x128xf32>
    %13 = arith.subf %0, %12 : vector<128x128xf32>
    %cst_4 = arith.constant 9.99999974E-6 : f32
    %14 = vector.broadcast %cst_4 : f32 to vector<128x1xf32>
    %15 = arith.addf %11, %14 : vector<128x1xf32>
    %16 = math.rsqrt %15 : vector<128x1xf32>
    %17 = vector.broadcast %16 : vector<128x1xf32> to vector<128x128xf32>
    %18 = arith.mulf %13, %17 : vector<128x128xf32>
    %c0_5 = arith.constant 0 : index
    %c0_6 = arith.constant 0 : index
    %19 = vector.load %arg3[%c0_5, %c0_6] : memref<1x128xf32, #tpu.memory_space<vmem>>, vector<1x128xf32>
    %20 = vector.broadcast %19 : vector<1x128xf32> to vector<128x128xf32>
    %21 = arith.mulf %18, %20 : vector<128x128xf32>
    %c0_7 = arith.constant 0 : index
    %c0_8 = arith.constant 0 : index
    %22 = vector.load %arg4[%c0_7, %c0_8] : memref<1x128xf32, #tpu.memory_space<vmem>>, vector<1x128xf32>
    %23 = vector.broadcast %22 : vector<1x128xf32> to vector<128x128xf32>
    %24 = arith.addf %21, %23 : vector<128x128xf32>
    %25 = arith.truncf %24 : vector<128x128xf32> to vector<128x128xbf16>
    %c0_9 = arith.constant 0 : index
    %c0_10 = arith.constant 0 : index
    %26 = vector.load %arg5[%c0_9, %c0_10] : memref<128x512xbf16, #tpu.memory_space<vmem>>, vector<128x512xbf16>
    %cst_11 = arith.constant dense<0.000000e+00> : vector<128x512xf32>
    %27 = tpu.matmul %25, %26, %cst_11 {dimension_numbers = #tpu.dot_dimension_numbers<[1], [0], [0], [1], [0, 0, 1, 1], [], []>} : vector<128x128xbf16>, vector<128x512xbf16>, vector<128x512xf32> -> vector<128x512xf32>
    %c0_12 = arith.constant 0 : index
    %c0_13 = arith.constant 0 : index
    %28 = vector.load %arg6[%c0_12, %c0_13] : memref<1x512xf32, #tpu.memory_space<vmem>>, vector<1x512xf32>
    %29 = vector.broadcast %28 : vector<1x512xf32> to vector<128x512xf32>
    %30 = arith.addf %27, %29 : vector<128x512xf32>
    %cst_14 = arith.constant 5.000000e-01 : f32
    %31 = vector.broadcast %cst_14 : f32 to vector<128x512xf32>
    %32 = arith.mulf %31, %30 : vector<128x512xf32>
    %cst_15 = arith.constant 4.471500e-02 : f32
    %33 = vector.broadcast %cst_15 : f32 to vector<128x512xf32>
    %34 = arith.mulf %33, %30 : vector<128x512xf32>
    %35 = arith.mulf %34, %30 : vector<128x512xf32>
    %36 = arith.mulf %35, %30 : vector<128x512xf32>
    %37 = arith.addf %30, %36 : vector<128x512xf32>
    %cst_16 = arith.constant 0.797884583 : f32
    %38 = vector.broadcast %cst_16 : f32 to vector<128x512xf32>
    %39 = arith.mulf %38, %37 : vector<128x512xf32>
    %40 = math.tanh %39 : vector<128x512xf32>
    %cst_17 = arith.constant 1.000000e+00 : f32
    %41 = vector.broadcast %cst_17 : f32 to vector<128x512xf32>
    %42 = arith.addf %41, %40 : vector<128x512xf32>
    %43 = arith.mulf %32, %42 : vector<128x512xf32>
    %44 = arith.truncf %43 : vector<128x512xf32> to vector<128x512xbf16>
    %c0_18 = arith.constant 0 : index
    %c0_19 = arith.constant 0 : index
    %45 = vector.load %arg7[%c0_18, %c0_19] : memref<128x512xbf16, #tpu.memory_space<vmem>>, vector<128x512xbf16>
    tpu.vector_store %arg7[%c0_18, %c0_19], %44 {strides = array<i32>} : memref<128x512xbf16, #tpu.memory_space<vmem>>, vector<128x512xbf16>,
    return
  }
  func.func @transform_0(%arg0: i32, %arg1: i32) -> (i32, i32) {
    %c0_i32 = arith.constant 0 : i32
    %c0_i32_0 = arith.constant 0 : i32
    return %arg0, %c0_i32 : i32, i32
  }
  func.func @transform_1(%arg0: i32, %arg1: i32) -> (i32, i32) {
    %c0_i32 = arith.constant 0 : i32
    %c0_i32_0 = arith.constant 0 : i32
    %c0_i32_1 = arith.constant 0 : i32
    return %c0_i32, %c0_i32_0 : i32, i32
  }
  func.func @transform_2(%arg0: i32, %arg1: i32) -> (i32, i32) {
    %c0_i32 = arith.constant 0 : i32
    %c0_i32_0 = arith.constant 0 : i32
    %c0_i32_1 = arith.constant 0 : i32
    return %c0_i32, %c0_i32_0 : i32, i32
  }
  func.func @transform_3(%arg0: i32, %arg1: i32) -> (i32, i32) {
    %c0_i32 = arith.constant 0 : i32
    %c0_i32_0 = arith.constant 0 : i32
    return %c0_i32, %arg1 : i32, i32
  }
  func.func @transform_4(%arg0: i32, %arg1: i32) -> (i32, i32) {
    %c0_i32 = arith.constant 0 : i32
    %c0_i32_0 = arith.constant 0 : i32
    return %c0_i32, %arg1 : i32, i32
  }
  func.func @transform_5(%arg0: i32, %arg1: i32) -> (i32, i32) {
    %c0_i32 = arith.constant 0 : i32
    return %arg0, %arg1 : i32, i32
  }
}

module attributes {stable_mosaic.version = 11 : i64} {
  func.func @kernel(%arg0: i32, %arg1: i32, %arg2: memref<128x512xbf16, #tpu.memory_space<vmem>>, %arg3: memref<512x128xbf16, #tpu.memory_space<vmem>>, %arg4: memref<1x128xf32, #tpu.memory_space<vmem>>, %arg5: memref<128x128xf32, #tpu.memory_space<vmem>>, %arg6: memref<128x128xf32, #tpu.memory_space<vmem>>) attributes {dimension_semantics = [#tpu.dimension_semantics<parallel>, #tpu.dimension_semantics<parallel>], iteration_bounds = array<i64: 1, 1>, scalar_prefetch = 0 : i64, scratch_operands = 0 : i64, tpu.core_type = #tpu.core_type<tc>, window_params = [{transform_indices = @transform_0, window_bounds = array<i64: 128, 512>}, {transform_indices = @transform_1, window_bounds = array<i64: 512, 128>}, {transform_indices = @transform_2, window_bounds = array<i64: 1, 128>}, {transform_indices = @transform_3, window_bounds = array<i64: 128, 128>}, {transform_indices = @transform_4, window_bounds = array<i64: 128, 128>}]} {
    %c0 = arith.constant 0 : index
    %c0_0 = arith.constant 0 : index
    %0 = vector.load %arg2[%c0, %c0_0] : memref<128x512xbf16, #tpu.memory_space<vmem>>, vector<128x512xbf16>
    %c0_1 = arith.constant 0 : index
    %c0_2 = arith.constant 0 : index
    %1 = vector.load %arg3[%c0_1, %c0_2] : memref<512x128xbf16, #tpu.memory_space<vmem>>, vector<512x128xbf16>
    %cst = arith.constant dense<0.000000e+00> : vector<128x128xf32>
    %2 = tpu.matmul %0, %1, %cst {dimension_numbers = #tpu.dot_dimension_numbers<[1], [0], [0], [1], [0, 0, 1, 1], [], []>} : vector<128x512xbf16>, vector<512x128xbf16>, vector<128x128xf32> -> vector<128x128xf32>
    %c0_3 = arith.constant 0 : index
    %c0_4 = arith.constant 0 : index
    %3 = vector.load %arg4[%c0_3, %c0_4] : memref<1x128xf32, #tpu.memory_space<vmem>>, vector<1x128xf32>
    %4 = vector.broadcast %3 : vector<1x128xf32> to vector<128x128xf32>
    %5 = arith.addf %2, %4 : vector<128x128xf32>
    %c0_5 = arith.constant 0 : index
    %c0_6 = arith.constant 0 : index
    %6 = vector.load %arg5[%c0_5, %c0_6] : memref<128x128xf32, #tpu.memory_space<vmem>>, vector<128x128xf32>
    %7 = arith.addf %5, %6 : vector<128x128xf32>
    %c0_7 = arith.constant 0 : index
    %c0_8 = arith.constant 0 : index
    %8 = vector.load %arg6[%c0_7, %c0_8] : memref<128x128xf32, #tpu.memory_space<vmem>>, vector<128x128xf32>
    tpu.vector_store %arg6[%c0_7, %c0_8], %7 {strides = array<i32>} : memref<128x128xf32, #tpu.memory_space<vmem>>, vector<128x128xf32>,
    return
  }
  func.func @transform_0(%arg0: i32, %arg1: i32) -> (i32, i32) {
    %c0_i32 = arith.constant 0 : i32
    %c0_i32_0 = arith.constant 0 : i32
    return %arg0, %c0_i32 : i32, i32
  }
  func.func @transform_1(%arg0: i32, %arg1: i32) -> (i32, i32) {
    %c0_i32 = arith.constant 0 : i32
    %c0_i32_0 = arith.constant 0 : i32
    return %c0_i32, %arg1 : i32, i32
  }
  func.func @transform_2(%arg0: i32, %arg1: i32) -> (i32, i32) {
    %c0_i32 = arith.constant 0 : i32
    %c0_i32_0 = arith.constant 0 : i32
    return %c0_i32, %arg1 : i32, i32
  }
  func.func @transform_3(%arg0: i32, %arg1: i32) -> (i32, i32) {
    %c0_i32 = arith.constant 0 : i32
    return %arg0, %arg1 : i32, i32
  }
  func.func @transform_4(%arg0: i32, %arg1: i32) -> (i32, i32) {
    %c0_i32 = arith.constant 0 : i32
    return %arg0, %arg1 : i32, i32
  }
}

</mosaic_0001>

<llo_original>
// kernel: _lambda_.5
$region0: #{_lambda_.5}
  #allocation0 [shape = 'u32[]', space=smem, size = 0x4, offset = 0x4, fixed_abs, tag = 'smem constant byte address 0x4 - core index']
  #allocation1 [shape = 'u32[144,128]{1,0:T(1,128)}', space=vmem, size = 0x12000, scoped, tag = 'internal scratch']
  %s0 = inlined_call_operand.hbm [shape: f32[128,128], index: 0, kind: input, shape index: {}]
  %s1 = inlined_call_operand.vmem [shape: f32[1,128], index: 1, kind: input, shape index: {}]
  %s2 = inlined_call_operand.vmem [shape: f32[1,128], index: 2, kind: input, shape index: {}]
  %s3 = inlined_call_operand.hbm [shape: bf16[128,384], index: 3, kind: input, shape index: {}]
  %s4 = inlined_call_operand.vmem [shape: bf16[128,384], index: 4, kind: output, shape index: {}]
  %s5 = sld [smem:[#allocation0]]
  $region34: #{_lambda_.5} parent=0
    _
  %s7 = ssub.s32 1, %s5
  %s8 = scalar_select 0, %s7, %s5
  $region1: #{_lambda_.5} parent=0
    #allocation2 [shape = 'u8[65536]{0}', space=vmem, size = 0x10000, scoped, tag = 'input window, operand 0, single buffered']
    #allocation3 [shape = 's32[1]{0}', space=sflag, size = 0x4, scoped, tag = 'scoped memory for _lambda_.5']
    #allocation4 [shape = 'u8[98304]{0}', space=vmem, size = 0x18000, scoped, tag = 'input window, operand 3, single buffered']
    #allocation5 [shape = 's32[1]{0}', space=sflag, size = 0x4, scoped, tag = 'scoped memory for _lambda_.5']
    %9 = vsyncpa [#allocation3], 0
    %10 = vsyncpa [#allocation5], 0
    // Predicated region
    $region2: #{_lambda_.5} parent=1 // pred_check
      _
    $region3: #{_lambda_.5} parent=1 // pred_check_branch
      %12 = sbr.rel (0) target = $region5
    $region4: #{_lambda_.5} parent=1 // pred_region
      %s14 = ssub.s32 2048, 2048
      %15 = vsyncadd [#allocation3], %s14
      %s16 = sshll.u32 [#allocation2], 4
      %s17 = int_to_ptr.vmem [resolvable:$true] %s16
      %22 = dma.hbm_to_vmem [thread:$0]  %s0, 2048, %s17, [#allocation3], 128, 128, 8
    $region5: #{_lambda_.5} parent=1 // pred_fallthru
      _
    // Predicated region
    $region6: #{_lambda_.5} parent=1 // pred_check
      _
    $region7: #{_lambda_.5} parent=1 // pred_check_branch
      %24 = sbr.rel (0) target = $region9
    $region8: #{_lambda_.5} parent=1 // pred_region
      _
    $region9: #{_lambda_.5} parent=1 // pred_fallthru
      _
    // Predicated region
    $region10: #{_lambda_.5} parent=1 // pred_check
      _
    $region11: #{_lambda_.5} parent=1 // pred_check_branch
      %26 = sbr.rel (0) target = $region13
    $region12: #{_lambda_.5} parent=1 // pred_region
      _
    $region13: #{_lambda_.5} parent=1 // pred_fallthru
      _
    // Predicated region
    $region14: #{_lambda_.5} parent=1 // pred_check
      _
    $region15: #{_lambda_.5} parent=1 // pred_check_branch
      %28 = sbr.rel (0) target = $region17
    $region16: #{_lambda_.5} parent=1 // pred_region
      %s30 = ssub.s32 3072, 3072
      %31 = vsyncadd [#allocation5], %s30
      %s32 = sshll.u32 [#allocation4], 4
      %s33 = int_to_ptr.vmem [resolvable:$true] %s32
      %38 = dma.hbm_to_vmem [thread:$0]  %s3, 3072, %s33, [#allocation5], 192, 192, 12
    $region17: #{_lambda_.5} parent=1 // pred_fallthru
      _
    // Predicated region
    $region18: #{_lambda_.5} parent=1 // pred_check
      _
    $region19: #{_lambda_.5} parent=1 // pred_check_branch
      %40 = sbr.rel (0) target = $region21
    $region20: #{_lambda_.5} parent=1 // pred_region
      %41 = dma.done [#allocation3], 2048
    $region21: #{_lambda_.5} parent=1 // pred_fallthru
      _
    // Predicated region
    $region22: #{_lambda_.5} parent=1 // pred_check
      _
    $region23: #{_lambda_.5} parent=1 // pred_check_branch
      %43 = sbr.rel (0) target = $region25
    $region24: #{_lambda_.5} parent=1 // pred_region
      %44 = dma.done [#allocation5], 3072
    $region25: #{_lambda_.5} parent=1 // pred_fallthru
      _
    %v46 = vld [vmem:[#allocation2] sm:$0xff]
    %v47 = vld [vmem:[#allocation2 + $0x8] sm:$0xff]
    %v48 = vld [vmem:[#allocation2 + $0x10] sm:$0xff]
    %v49 = vld [vmem:[#allocation2 + $0x18] sm:$0xff]
    %v50 = vld [vmem:[#allocation2 + $0x20] sm:$0xff]
    %v51 = vld [vmem:[#allocation2 + $0x28] sm:$0xff]
    %v52 = vld [vmem:[#allocation2 + $0x30] sm:$0xff]
    %v53 = vld [vmem:[#allocation2 + $0x38] sm:$0xff]
    %v54 = vld [vmem:[#allocation2 + $0x40] sm:$0xff]
    %v55 = vld [vmem:[#allocation2 + $0x48] sm:$0xff]
    %v56 = vld [vmem:[#allocation2 + $0x50] sm:$0xff]
    %v57 = vld [vmem:[#allocation2 + $0x58] sm:$0xff]
    %v58 = vld [vmem:[#allocation2 + $0x60] sm:$0xff]
    %v59 = vld [vmem:[#allocation2 + $0x68] sm:$0xff]
    %v60 = vld [vmem:[#allocation2 + $0x70] sm:$0xff]
    %v61 = vld [vmem:[#allocation2 + $0x78] sm:$0xff]
    %62 = vadd.xlane.f32.xlu0 %v46
    %v63 = vpop.xlane.xlu0 %62
    %64 = vadd.xlane.f32.xlu0 %v47
    %v65 = vpop.xlane.xlu0 %64
    %66 = vadd.xlane.f32.xlu0 %v48
    %v67 = vpop.xlane.xlu0 %66
    %68 = vadd.xlane.f32.xlu0 %v49
    %v69 = vpop.xlane.xlu0 %68
    %70 = vadd.xlane.f32.xlu0 %v50
    %v71 = vpop.xlane.xlu0 %70
    %72 = vadd.xlane.f32.xlu0 %v51
    %v73 = vpop.xlane.xlu0 %72
    %74 = vadd.xlane.f32.xlu0 %v52
    %v75 = vpop.xlane.xlu0 %74
    %76 = vadd.xlane.f32.xlu0 %v53
    %v77 = vpop.xlane.xlu0 %76
    %78 = vadd.xlane.f32.xlu0 %v54
    %v79 = vpop.xlane.xlu0 %78
    %80 = vadd.xlane.f32.xlu0 %v55
    %v81 = vpop.xlane.xlu0 %80
    %82 = vadd.xlane.f32.xlu0 %v56
    %v83 = vpop.xlane.xlu0 %82
    %84 = vadd.xlane.f32.xlu0 %v57
    %v85 = vpop.xlane.xlu0 %84
    %86 = vadd.xlane.f32.xlu0 %v58
    %v87 = vpop.xlane.xlu0 %86
    %88 = vadd.xlane.f32.xlu0 %v59
    %v89 = vpop.xlane.xlu0 %88
    %90 = vadd.xlane.f32.xlu0 %v60
    %v91 = vpop.xlane.xlu0 %90
    %92 = vadd.xlane.f32.xlu0 %v61
    %v93 = vpop.xlane.xlu0 %92
    %v94 = vmul.f32 %v63, 0.0078125
    %v95 = vmul.f32 %v65, 0.0078125
    %v96 = vmul.f32 %v67, 0.0078125
    %v97 = vmul.f32 %v69, 0.0078125
    %v98 = vmul.f32 %v71, 0.0078125
    %v99 = vmul.f32 %v73, 0.0078125
    %v100 = vmul.f32 %v75, 0.0078125
    %v101 = vmul.f32 %v77, 0.0078125
    %v102 = vmul.f32 %v79, 0.0078125
    %v103 = vmul.f32 %v81, 0.0078125
    %v104 = vmul.f32 %v83, 0.0078125
    %v105 = vmul.f32 %v85, 0.0078125
    %v106 = vmul.f32 %v87, 0.0078125
    %v107 = vmul.f32 %v89, 0.0078125
    %v108 = vmul.f32 %v91, 0.0078125
    %v109 = vmul.f32 %v93, 0.0078125
    %v110 = vmul.f32 %v46, %v46
    %v111 = vmul.f32 %v47, %v47
    %v112 = vmul.f32 %v48, %v48
    %v113 = vmul.f32 %v49, %v49
    %v114 = vmul.f32 %v50, %v50
    %v115 = vmul.f32 %v51, %v51
    %v116 = vmul.f32 %v52, %v52
    %v117 = vmul.f32 %v53, %v53
    %v118 = vmul.f32 %v54, %v54
    %v119 = vmul.f32 %v55, %v55
    %v120 = vmul.f32 %v56, %v56
    %v121 = vmul.f32 %v57, %v57
    %v122 = vmul.f32 %v58, %v58
    %v123 = vmul.f32 %v59, %v59
    %v124 = vmul.f32 %v60, %v60
    %v125 = vmul.f32 %v61, %v61
    %126 = vadd.xlane.f32.xlu0 %v110
    %v127 = vpop.xlane.xlu0 %126
    %128 = vadd.xlane.f32.xlu0 %v111
    %v129 = vpop.xlane.xlu0 %128
    %130 = vadd.xlane.f32.xlu0 %v112
    %v131 = vpop.xlane.xlu0 %130
    %132 = vadd.xlane.f32.xlu0 %v113
    %v133 = vpop.xlane.xlu0 %132
    %134 = vadd.xlane.f32.xlu0 %v114
    %v135 = vpop.xlane.xlu0 %134
    %136 = vadd.xlane.f32.xlu0 %v115
    %v137 = vpop.xlane.xlu0 %136
    %138 = vadd.xlane.f32.xlu0 %v116
    %v139 = vpop.xlane.xlu0 %138
    %140 = vadd.xlane.f32.xlu0 %v117
    %v141 = vpop.xlane.xlu0 %140
    %142 = vadd.xlane.f32.xlu0 %v118
    %v143 = vpop.xlane.xlu0 %142
    %144 = vadd.xlane.f32.xlu0 %v119
    %v145 = vpop.xlane.xlu0 %144
    %146 = vadd.xlane.f32.xlu0 %v120
    %v147 = vpop.xlane.xlu0 %146
    %148 = vadd.xlane.f32.xlu0 %v121
    %v149 = vpop.xlane.xlu0 %148
    %150 = vadd.xlane.f32.xlu0 %v122
    %v151 = vpop.xlane.xlu0 %150
    %152 = vadd.xlane.f32.xlu0 %v123
    %v153 = vpop.xlane.xlu0 %152
    %154 = vadd.xlane.f32.xlu0 %v124
    %v155 = vpop.xlane.xlu0 %154
    %156 = vadd.xlane.f32.xlu0 %v125
    %v157 = vpop.xlane.xlu0 %156
    %v158 = vmul.f32 %v127, 0.0078125
    %v159 = vmul.f32 %v129, 0.0078125
    %v160 = vmul.f32 %v131, 0.0078125
    %v161 = vmul.f32 %v133, 0.0078125
    %v162 = vmul.f32 %v135, 0.0078125
    %v163 = vmul.f32 %v137, 0.0078125
    %v164 = vmul.f32 %v139, 0.0078125
    %v165 = vmul.f32 %v141, 0.0078125
    %v166 = vmul.f32 %v143, 0.0078125
    %v167 = vmul.f32 %v145, 0.0078125
    %v168 = vmul.f32 %v147, 0.0078125
    %v169 = vmul.f32 %v149, 0.0078125
    %v170 = vmul.f32 %v151, 0.0078125
    %v171 = vmul.f32 %v153, 0.0078125
    %v172 = vmul.f32 %v155, 0.0078125
    %v173 = vmul.f32 %v157, 0.0078125
    %v174 = vmul.f32 %v94, %v94
    %v175 = vmul.f32 %v95, %v95
    %v176 = vmul.f32 %v96, %v96
    %v177 = vmul.f32 %v97, %v97
    %v178 = vmul.f32 %v98, %v98
    %v179 = vmul.f32 %v99, %v99
    %v180 = vmul.f32 %v100, %v100
    %v181 = vmul.f32 %v101, %v101
    %v182 = vmul.f32 %v102, %v102
    %v183 = vmul.f32 %v103, %v103
    %v184 = vmul.f32 %v104, %v104
    %v185 = vmul.f32 %v105, %v105
    %v186 = vmul.f32 %v106, %v106
    %v187 = vmul.f32 %v107, %v107
    %v188 = vmul.f32 %v108, %v108
    %v189 = vmul.f32 %v109, %v109
    %v190 = vsub.f32 %v158, %v174
    %v191 = vsub.f32 %v159, %v175
    %v192 = vsub.f32 %v160, %v176
    %v193 = vsub.f32 %v161, %v177
    %v194 = vsub.f32 %v162, %v178
    %v195 = vsub.f32 %v163, %v179
    %v196 = vsub.f32 %v164, %v180
    %v197 = vsub.f32 %v165, %v181
    %v198 = vsub.f32 %v166, %v182
    %v199 = vsub.f32 %v167, %v183
    %v200 = vsub.f32 %v168, %v184
    %v201 = vsub.f32 %v169, %v185
    %v202 = vsub.f32 %v170, %v186
    %v203 = vsub.f32 %v171, %v187
    %v204 = vsub.f32 %v172, %v188
    %v205 = vsub.f32 %v173, %v189
    %v206 = vsub.f32 %v46, %v94
    %v207 = vsub.f32 %v47, %v95
    %v208 = vsub.f32 %v48, %v96
    %v209 = vsub.f32 %v49, %v97
    %v210 = vsub.f32 %v50, %v98
    %v211 = vsub.f32 %v51, %v99
    %v212 = vsub.f32 %v52, %v100
    %v213 = vsub.f32 %v53, %v101
    %v214 = vsub.f32 %v54, %v102
    %v215 = vsub.f32 %v55, %v103
    %v216 = vsub.f32 %v56, %v104
    %v217 = vsub.f32 %v57, %v105
    %v218 = vsub.f32 %v58, %v106
    %v219 = vsub.f32 %v59, %v107
    %v220 = vsub.f32 %v60, %v108
    %v221 = vsub.f32 %v61, %v109
    %v222 = vadd.f32 %v190, 1e-05
    %v223 = vadd.f32 %v191, 1e-05
    %v224 = vadd.f32 %v192, 1e-05
    %v225 = vadd.f32 %v193, 1e-05
    %v226 = vadd.f32 %v194, 1e-05
    %v227 = vadd.f32 %v195, 1e-05
    %v228 = vadd.f32 %v196, 1e-05
    %v229 = vadd.f32 %v197, 1e-05
    %v230 = vadd.f32 %v198, 1e-05
    %v231 = vadd.f32 %v199, 1e-05
    %v232 = vadd.f32 %v200, 1e-05
    %v233 = vadd.f32 %v201, 1e-05
    %v234 = vadd.f32 %v202, 1e-05
    %v235 = vadd.f32 %v203, 1e-05
    %v236 = vadd.f32 %v204, 1e-05
    %v237 = vadd.f32 %v205, 1e-05
    %v238 = vrsqrt.pop %v222
    %v239 = vrsqrt.pop %v223
    %v240 = vrsqrt.pop %v224
    %v241 = vrsqrt.pop %v225
    %v242 = vrsqrt.pop %v226
    %v243 = vrsqrt.pop %v227
    %v244 = vrsqrt.pop %v228
    %v245 = vrsqrt.pop %v229
    %v246 = vrsqrt.pop %v230
    %v247 = vrsqrt.pop %v231
    %v248 = vrsqrt.pop %v232
    %v249 = vrsqrt.pop %v233
    %v250 = vrsqrt.pop %v234
    %v251 = vrsqrt.pop %v235
    %v252 = vrsqrt.pop %v236
    %v253 = vrsqrt.pop %v237
    %v254 = vmul.f32 %v206, %v238
    %v255 = vmul.f32 %v207, %v239
    %v256 = vmul.f32 %v208, %v240
    %v257 = vmul.f32 %v209, %v241
    %v258 = vmul.f32 %v210, %v242
    %v259 = vmul.f32 %v211, %v243
    %v260 = vmul.f32 %v212, %v244
    %v261 = vmul.f32 %v213, %v245
    %v262 = vmul.f32 %v214, %v246
    %v263 = vmul.f32 %v215, %v247
    %v264 = vmul.f32 %v216, %v248
    %v265 = vmul.f32 %v217, %v249
    %v266 = vmul.f32 %v218, %v250
    %v267 = vmul.f32 %v219, %v251
    %v268 = vmul.f32 %v220, %v252
    %v269 = vmul.f32 %v221, %v253
    %v270 = vld [vmem:[%s1] sm:$0x1]
    %v272 = vlaneseq
    %v273 = vshrl.u32 %v272, 7
    %v274 = vsub.s32 0, %v273
    %v275 = vrot.slane %v270, %v274
    %v277 = vmul.f32 %v254, %v275
    %v278 = vmul.f32 %v255, %v275
    %v279 = vmul.f32 %v256, %v275
    %v280 = vmul.f32 %v257, %v275
    %v281 = vmul.f32 %v258, %v275
    %v282 = vmul.f32 %v259, %v275
    %v283 = vmul.f32 %v260, %v275
    %v284 = vmul.f32 %v261, %v275
    %v285 = vmul.f32 %v262, %v275
    %v286 = vmul.f32 %v263, %v275
    %v287 = vmul.f32 %v264, %v275
    %v288 = vmul.f32 %v265, %v275
    %v289 = vmul.f32 %v266, %v275
    %v290 = vmul.f32 %v267, %v275
    %v291 = vmul.f32 %v268, %v275
    %v292 = vmul.f32 %v269, %v275
    %v293 = vld [vmem:[%s2] sm:$0x1]
    %v295 = vlaneseq
    %v296 = vshrl.u32 %v295, 7
    %v297 = vsub.s32 0, %v296
    %v298 = vrot.slane %v293, %v297
    %v300 = vadd.f32 %v277, %v298
    %v301 = vadd.f32 %v278, %v298
    %v302 = vadd.f32 %v279, %v298
    %v303 = vadd.f32 %v280, %v298
    %v304 = vadd.f32 %v281, %v298
    %v305 = vadd.f32 %v282, %v298
    %v306 = vadd.f32 %v283, %v298
    %v307 = vadd.f32 %v284, %v298
    %v308 = vadd.f32 %v285, %v298
    %v309 = vadd.f32 %v286, %v298
    %v310 = vadd.f32 %v287, %v298
    %v311 = vadd.f32 %v288, %v298
    %v312 = vadd.f32 %v289, %v298
    %v313 = vadd.f32 %v290, %v298
    %v314 = vadd.f32 %v291, %v298
    %v315 = vadd.f32 %v292, %v298
    %v316 = vpack.c.bf16 %v301, %v300
    %v317 = vpack.c.bf16 %v303, %v302
    %v318 = vpack.c.bf16 %v305, %v304
    %v319 = vpack.c.bf16 %v307, %v306
    %v320 = vpack.c.bf16 %v309, %v308
    %v321 = vpack.c.bf16 %v311, %v310
    %v322 = vpack.c.bf16 %v313, %v312
    %v323 = vpack.c.bf16 %v315, %v314
    %v324 = vld [vmem:[#allocation4] sm:$0xff]
    %v325 = vld [vmem:[#allocation4 + $0x8] sm:$0xf]
    %v326 = vld [vmem:[#allocation4 + $0xc] sm:$0xff]
    %v327 = vld [vmem:[#allocation4 + $0x14] sm:$0xf]
    %v328 = vld [vmem:[#allocation4 + $0x18] sm:$0xff]
    %v329 = vld [vmem:[#allocation4 + $0x20] sm:$0xf]
    %v330 = vld [vmem:[#allocation4 + $0x24] sm:$0xff]
    %v331 = vld [vmem:[#allocation4 + $0x2c] sm:$0xf]
    %v332 = vld [vmem:[#allocation4 + $0x30] sm:$0xff]
    %v333 = vld [vmem:[#allocation4 + $0x38] sm:$0xf]
    %v334 = vld [vmem:[#allocation4 + $0x3c] sm:$0xff]
    %v335 = vld [vmem:[#allocation4 + $0x44] sm:$0xf]
    %v336 = vld [vmem:[#allocation4 + $0x48] sm:$0xff]
    %v337 = vld [vmem:[#allocation4 + $0x50] sm:$0xf]
    %v338 = vld [vmem:[#allocation4 + $0x54] sm:$0xff]
    %v339 = vld [vmem:[#allocation4 + $0x5c] sm:$0xf]
    %v340 = vld [vmem:[#allocation4 + $0x60] sm:$0xff]
    %v341 = vld [vmem:[#allocation4 + $0x68] sm:$0xf]
    %v342 = vld [vmem:[#allocation4 + $0x6c] sm:$0xff]
    %v343 = vld [vmem:[#allocation4 + $0x74] sm:$0xf]
    %v344 = vld [vmem:[#allocation4 + $0x78] sm:$0xff]
    %v345 = vld [vmem:[#allocation4 + $0x80] sm:$0xf]
    %v346 = vld [vmem:[#allocation4 + $0x84] sm:$0xff]
    %v347 = vld [vmem:[#allocation4 + $0x8c] sm:$0xf]
    %v348 = vld [vmem:[#allocation4 + $0x90] sm:$0xff]
    %v349 = vld [vmem:[#allocation4 + $0x98] sm:$0xf]
    %v350 = vld [vmem:[#allocation4 + $0x9c] sm:$0xff]
    %v351 = vld [vmem:[#allocation4 + $0xa4] sm:$0xf]
    %v352 = vld [vmem:[#allocation4 + $0xa8] sm:$0xff]
    %v353 = vld [vmem:[#allocation4 + $0xb0] sm:$0xf]
    %v354 = vld [vmem:[#allocation4 + $0xb4] sm:$0xff]
    %v355 = vld [vmem:[#allocation4 + $0xbc] sm:$0xf]
    %v388 = vunpack.c.l.b16 %v324
    %v389 = vunpack.c.h.b16 %v324
    %v390 = vunpack.c.l.b16 %v325
    %v391 = vunpack.c.l.b16 %v326
    %v392 = vunpack.c.h.b16 %v326
    %v393 = vunpack.c.l.b16 %v327
    %v394 = vunpack.c.l.b16 %v328
    %v395 = vunpack.c.h.b16 %v328
    %v396 = vunpack.c.l.b16 %v329
    %v397 = vunpack.c.l.b16 %v330
    %v398 = vunpack.c.h.b16 %v330
    %v399 = vunpack.c.l.b16 %v331
    %v400 = vunpack.c.l.b16 %v332
    %v401 = vunpack.c.h.b16 %v332
    %v402 = vunpack.c.l.b16 %v333
    %v403 = vunpack.c.l.b16 %v334
    %v404 = vunpack.c.h.b16 %v334
    %v405 = vunpack.c.l.b16 %v335
    %v406 = vunpack.c.l.b16 %v336
    %v407 = vunpack.c.h.b16 %v336
    %v408 = vunpack.c.l.b16 %v337
    %v409 = vunpack.c.l.b16 %v338
    %v410 = vunpack.c.h.b16 %v338
    %v411 = vunpack.c.l.b16 %v339
    %v412 = vunpack.c.l.b16 %v340
    %v413 = vunpack.c.h.b16 %v340
    %v414 = vunpack.c.l.b16 %v341
    %v415 = vunpack.c.l.b16 %v342
    %v416 = vunpack.c.h.b16 %v342
    %v417 = vunpack.c.l.b16 %v343
    %v418 = vunpack.c.l.b16 %v344
    %v419 = vunpack.c.h.b16 %v344
    %v420 = vunpack.c.l.b16 %v345
    %v421 = vunpack.c.l.b16 %v346
    %v422 = vunpack.c.h.b16 %v346
    %v423 = vunpack.c.l.b16 %v347
    %v424 = vunpack.c.l.b16 %v348
    %v425 = vunpack.c.h.b16 %v348
    %v426 = vunpack.c.l.b16 %v349
    %v427 = vunpack.c.l.b16 %v350
    %v428 = vunpack.c.h.b16 %v350
    %v429 = vunpack.c.l.b16 %v351
    %v430 = vunpack.c.l.b16 %v352
    %v431 = vunpack.c.h.b16 %v352
    %v432 = vunpack.c.l.b16 %v353
    %v433 = vunpack.c.l.b16 %v354
    %v434 = vunpack.c.h.b16 %v354
    %v435 = vunpack.c.l.b16 %v355
    %v436 = vpack.c.b16 %v391, %v388
    %v437 = vpack.c.b16 %v392, %v389
    %v438 = vpack.c.b16 %v393, %v390
    %v439 = vpack.c.b16 %v397, %v394
    %v440 = vpack.c.b16 %v398, %v395
    %v441 = vpack.c.b16 %v399, %v396
    %v442 = vpack.c.b16 %v403, %v400
    %v443 = vpack.c.b16 %v404, %v401
    %v444 = vpack.c.b16 %v405, %v402
    %v445 = vpack.c.b16 %v409, %v406
    %v446 = vpack.c.b16 %v410, %v407
    %v447 = vpack.c.b16 %v411, %v408
    %v448 = vpack.c.b16 %v415, %v412
    %v449 = vpack.c.b16 %v416, %v413
    %v450 = vpack.c.b16 %v417, %v414
    %v451 = vpack.c.b16 %v421, %v418
    %v452 = vpack.c.b16 %v422, %v419
    %v453 = vpack.c.b16 %v423, %v420
    %v454 = vpack.c.b16 %v427, %v424
    %v455 = vpack.c.b16 %v428, %v425
    %v456 = vpack.c.b16 %v429, %v426
    %v457 = vpack.c.b16 %v433, %v430
    %v458 = vpack.c.b16 %v434, %v431
    %v459 = vpack.c.b16 %v435, %v432
    %484 = vmatprep.subr.bf16.mxu0 %v458
    %485 = vmatpush1.bf16.msra.mxu0 %v457
    %486 = vmatprep.subr.bf16.mxu0 %v455
    %487 = vmatpush1.bf16.msra.mxu0 %v454
    %488 = vmatprep.subr.bf16.mxu0 %v452
    %489 = vmatpush1.bf16.msra.mxu0 %v451
    %490 = vmatprep.subr.bf16.mxu0 %v449
    %491 = vmatpush1.bf16.msra.mxu0 %v448
    %492 = vmatprep.subr.bf16.mxu0 %v446
    %493 = vmatpush1.bf16.msra.mxu0 %v445
    %494 = vmatprep.subr.bf16.mxu0 %v443
    %495 = vmatpush1.bf16.msra.mxu0 %v442
    %496 = vmatprep.subr.bf16.mxu0 %v440
    %497 = vmatpush1.bf16.msra.mxu0 %v439
    %498 = vmatprep.subr.bf16.mxu0 %v437
    %499 = vmatpush1.bf16.msra.mxu0 %v436
    %500 = vmatprep.subr.bf16.mxu0 0
    %501 = vmatpush2.bf16.msra.mxu0 0
    %502 = vmatprep.subr.bf16.mxu0 0
    %503 = vmatpush2.bf16.msra.mxu0 0
    %504 = vmatprep.subr.bf16.mxu0 0
    %505 = vmatpush2.bf16.msra.mxu0 0
    %506 = vmatprep.subr.bf16.mxu0 0
    %507 = vmatpush2.bf16.msra.mxu0 0
    %508 = vmatprep.subr.bf16.mxu0 0
    %509 = vmatpush2.bf16.msra.mxu0 0
    %510 = vmatprep.subr.bf16.mxu0 0
    %511 = vmatpush2.bf16.msra.mxu0 0
    %512 = vmatprep.subr.bf16.mxu0 0
    %513 = vmatpush2.bf16.msra.mxu0 0
    %514 = vmatprep.subr.bf16.mxu0 0
    %515 = vmatpush2.bf16.msra.mxu0 0
    %516 = vmatprep.mubr.bf16.mxu0 0
    %517 = vmatmul.mubr.bf16.gmra.mxu0 %v316
    %v518 = vpop.f32.mrf.mxu0
    %v519 = vadd.f32 0.0, %v518
    %v520 = vpop.f32.mrf.mxu0
    %v521 = vadd.f32 0.0, %v520
    %v522 = vpop.f32.mrf.mxu0
    %v523 = vadd.f32 0.0, %v522
    %v524 = vpop.f32.mrf.mxu0
    %v525 = vadd.f32 0.0, %v524
    %526 = vmatprep.mubr.bf16.mxu0 0
    %527 = vmatmul.mubr.bf16.gmra.mxu0 %v317
    %v528 = vpop.f32.mrf.mxu0
    %v529 = vadd.f32 0.0, %v528
    %v530 = vpop.f32.mrf.mxu0
    %v531 = vadd.f32 0.0, %v530
    %v532 = vpop.f32.mrf.mxu0
    %v533 = vadd.f32 0.0, %v532
    %v534 = vpop.f32.mrf.mxu0
    %v535 = vadd.f32 0.0, %v534
    %536 = vmatprep.mubr.bf16.mxu0 0
    %537 = vmatmul.mubr.bf16.gmra.mxu0 %v318
    %v538 = vpop.f32.mrf.mxu0
    %v539 = vadd.f32 0.0, %v538
    %v540 = vpop.f32.mrf.mxu0
    %v541 = vadd.f32 0.0, %v540
    %v542 = vpop.f32.mrf.mxu0
    %v543 = vadd.f32 0.0, %v542
    %v544 = vpop.f32.mrf.mxu0
    %v545 = vadd.f32 0.0, %v544
    %546 = vmatprep.mubr.bf16.mxu0 0
    %547 = vmatmul.mubr.bf16.gmra.mxu0 %v319
    %v548 = vpop.f32.mrf.mxu0
    %v549 = vadd.f32 0.0, %v548
    %v550 = vpop.f32.mrf.mxu0
    %v551 = vadd.f32 0.0, %v550
    %v552 = vpop.f32.mrf.mxu0
    %v553 = vadd.f32 0.0, %v552
    %v554 = vpop.f32.mrf.mxu0
    %v555 = vadd.f32 0.0, %v554
    %556 = vmatprep.mubr.bf16.mxu0 0
    %557 = vmatmul.mubr.bf16.gmra.mxu0 %v320
    %v558 = vpop.f32.mrf.mxu0
    %v559 = vadd.f32 0.0, %v558
    %v560 = vpop.f32.mrf.mxu0
    %v561 = vadd.f32 0.0, %v560
    %v562 = vpop.f32.mrf.mxu0
    %v563 = vadd.f32 0.0, %v562
    %v564 = vpop.f32.mrf.mxu0
    %v565 = vadd.f32 0.0, %v564
    %566 = vmatprep.mubr.bf16.mxu0 0
    %567 = vmatmul.mubr.bf16.gmra.mxu0 %v321
    %v568 = vpop.f32.mrf.mxu0
    %v569 = vadd.f32 0.0, %v568
    %v570 = vpop.f32.mrf.mxu0
    %v571 = vadd.f32 0.0, %v570
    %v572 = vpop.f32.mrf.mxu0
    %v573 = vadd.f32 0.0, %v572
    %v574 = vpop.f32.mrf.mxu0
    %v575 = vadd.f32 0.0, %v574
    %576 = vmatprep.mubr.bf16.mxu0 0
    %577 = vmatmul.mubr.bf16.gmra.mxu0 %v322
    %v578 = vpop.f32.mrf.mxu0
    %v579 = vadd.f32 0.0, %v578
    %v580 = vpop.f32.mrf.mxu0
    %v581 = vadd.f32 0.0, %v580
    %v582 = vpop.f32.mrf.mxu0
    %v583 = vadd.f32 0.0, %v582
    %v584 = vpop.f32.mrf.mxu0
    %v585 = vadd.f32 0.0, %v584
    %586 = vmatprep.mubr.bf16.mxu0 0
    %587 = vmatmul.mubr.bf16.gmra.mxu0 %v323
    %v588 = vpop.f32.mrf.mxu0
    %v589 = vadd.f32 0.0, %v588
    %v590 = vpop.f32.mrf.mxu0
    %v591 = vadd.f32 0.0, %v590
    %v592 = vpop.f32.mrf.mxu0
    %v593 = vadd.f32 0.0, %v592
    %v594 = vpop.f32.mrf.mxu0
    %v595 = vadd.f32 0.0, %v594
    %596 = vdwg.mxu0
    %597 = vmatprep.subr.bf16.mxu0 0
    %598 = vmatpush1.bf16.msra.mxu0 %v459
    %599 = vmatprep.subr.bf16.mxu0 0
    %600 = vmatpush1.bf16.msra.mxu0 %v456
    %601 = vmatprep.subr.bf16.mxu0 0
    %602 = vmatpush1.bf16.msra.mxu0 %v453
    %603 = vmatprep.subr.bf16.mxu0 0
    %604 = vmatpush1.bf16.msra.mxu0 %v450
    %605 = vmatprep.subr.bf16.mxu0 0
    %606 = vmatpush1.bf16.msra.mxu0 %v447
    %607 = vmatprep.subr.bf16.mxu0 0
    %608 = vmatpush1.bf16.msra.mxu0 %v444
    %609 = vmatprep.subr.bf16.mxu0 0
    %610 = vmatpush1.bf16.msra.mxu0 %v441
    %611 = vmatprep.subr.bf16.mxu0 0
    %612 = vmatpush1.bf16.msra.mxu0 %v438
    %613 = vmatprep.subr.bf16.mxu0 0
    %614 = vmatpush2.bf16.msra.mxu0 0
    %615 = vmatprep.subr.bf16.mxu0 0
    %616 = vmatpush2.bf16.msra.mxu0 0
    %617 = vmatprep.subr.bf16.mxu0 0
    %618 = vmatpush2.bf16.msra.mxu0 0
    %619 = vmatprep.subr.bf16.mxu0 0
    %620 = vmatpush2.bf16.msra.mxu0 0
    %621 = vmatprep.subr.bf16.mxu0 0
    %622 = vmatpush2.bf16.msra.mxu0 0
    %623 = vmatprep.subr.bf16.mxu0 0
    %624 = vmatpush2.bf16.msra.mxu0 0
    %625 = vmatprep.subr.bf16.mxu0 0
    %626 = vmatpush2.bf16.msra.mxu0 0
    %627 = vmatprep.subr.bf16.mxu0 0
    %628 = vmatpush2.bf16.msra.mxu0 0
    %629 = vmatprep.mubr.bf16.mxu0 0
    %630 = vmatmul.mubr.bf16.gmra.mxu0 %v316
    %v631 = vpop.f32.mrf.mxu0
    %v632 = vadd.f32 0.0, %v631
    %v633 = vpop.f32.mrf.mxu0
    %v634 = vpop.f32.mrf.mxu0
    %v635 = vadd.f32 0.0, %v634
    %v636 = vpop.f32.mrf.mxu0
    %637 = vmatprep.mubr.bf16.mxu0 0
    %638 = vmatmul.mubr.bf16.gmra.mxu0 %v317
    %v639 = vpop.f32.mrf.mxu0
    %v640 = vadd.f32 0.0, %v639
    %v641 = vpop.f32.mrf.mxu0
    %v642 = vpop.f32.mrf.mxu0
    %v643 = vadd.f32 0.0, %v642
    %v644 = vpop.f32.mrf.mxu0
    %645 = vmatprep.mubr.bf16.mxu0 0
    %646 = vmatmul.mubr.bf16.gmra.mxu0 %v318
    %v647 = vpop.f32.mrf.mxu0
    %v648 = vadd.f32 0.0, %v647
    %v649 = vpop.f32.mrf.mxu0
    %v650 = vpop.f32.mrf.mxu0
    %v651 = vadd.f32 0.0, %v650
    %v652 = vpop.f32.mrf.mxu0
    %653 = vmatprep.mubr.bf16.mxu0 0
    %654 = vmatmul.mubr.bf16.gmra.mxu0 %v319
    %v655 = vpop.f32.mrf.mxu0
    %v656 = vadd.f32 0.0, %v655
    %v657 = vpop.f32.mrf.mxu0
    %v658 = vpop.f32.mrf.mxu0
    %v659 = vadd.f32 0.0, %v658
    %v660 = vpop.f32.mrf.mxu0
    %661 = vmatprep.mubr.bf16.mxu0 0
    %662 = vmatmul.mubr.bf16.gmra.mxu0 %v320
    %v663 = vpop.f32.mrf.mxu0
    %v664 = vadd.f32 0.0, %v663
    %v665 = vpop.f32.mrf.mxu0
    %v666 = vpop.f32.mrf.mxu0
    %v667 = vadd.f32 0.0, %v666
    %v668 = vpop.f32.mrf.mxu0
    %669 = vmatprep.mubr.bf16.mxu0 0
    %670 = vmatmul.mubr.bf16.gmra.mxu0 %v321
    %v671 = vpop.f32.mrf.mxu0
    %v672 = vadd.f32 0.0, %v671
    %v673 = vpop.f32.mrf.mxu0
    %v674 = vpop.f32.mrf.mxu0
    %v675 = vadd.f32 0.0, %v674
    %v676 = vpop.f32.mrf.mxu0
    %677 = vmatprep.mubr.bf16.mxu0 0
    %678 = vmatmul.mubr.bf16.gmra.mxu0 %v322
    %v679 = vpop.f32.mrf.mxu0
    %v680 = vadd.f32 0.0, %v679
    %v681 = vpop.f32.mrf.mxu0
    %v682 = vpop.f32.mrf.mxu0
    %v683 = vadd.f32 0.0, %v682
    %v684 = vpop.f32.mrf.mxu0
    %685 = vmatprep.mubr.bf16.mxu0 0
    %686 = vmatmul.mubr.bf16.gmra.mxu0 %v323
    %v687 = vpop.f32.mrf.mxu0
    %v688 = vadd.f32 0.0, %v687
    %v689 = vpop.f32.mrf.mxu0
    %v690 = vpop.f32.mrf.mxu0
    %v691 = vadd.f32 0.0, %v690
    %v692 = vpop.f32.mrf.mxu0
    %693 = vdwg.mxu0
    %v694 = vpack.c.bf16 %v523, %v519
    %v695 = vpack.c.bf16 %v525, %v521
    %v696 = vpack.c.bf16 %v635, %v632
    %v697 = vpack.c.bf16 %v533, %v529
    %v698 = vpack.c.bf16 %v535, %v531
    %v699 = vpack.c.bf16 %v643, %v640
    %v700 = vpack.c.bf16 %v543, %v539
    %v701 = vpack.c.bf16 %v545, %v541
    %v702 = vpack.c.bf16 %v651, %v648
    %v703 = vpack.c.bf16 %v553, %v549
    %v704 = vpack.c.bf16 %v555, %v551
    %v705 = vpack.c.bf16 %v659, %v656
    %v706 = vpack.c.bf16 %v563, %v559
    %v707 = vpack.c.bf16 %v565, %v561
    %v708 = vpack.c.bf16 %v667, %v664
    %v709 = vpack.c.bf16 %v573, %v569
    %v710 = vpack.c.bf16 %v575, %v571
    %v711 = vpack.c.bf16 %v675, %v672
    %v712 = vpack.c.bf16 %v583, %v579
    %v713 = vpack.c.bf16 %v585, %v581
    %v714 = vpack.c.bf16 %v683, %v680
    %v715 = vpack.c.bf16 %v593, %v589
    %v716 = vpack.c.bf16 %v595, %v591
    %v717 = vpack.c.bf16 %v691, %v688
    %v742 = vunpack.c.l.b16 %v694
    %v743 = vunpack.c.l.b16 %v695
    %v744 = vunpack.c.l.b16 %v696
    %v745 = vunpack.c.h.b16 %v694
    %v746 = vunpack.c.h.b16 %v695
    %v747 = vunpack.c.h.b16 %v696
    %v748 = vunpack.c.l.b16 %v697
    %v749 = vunpack.c.l.b16 %v698
    %v750 = vunpack.c.l.b16 %v699
    %v751 = vunpack.c.h.b16 %v697
    %v752 = vunpack.c.h.b16 %v698
    %v753 = vunpack.c.h.b16 %v699
    %v754 = vunpack.c.l.b16 %v700
    %v755 = vunpack.c.l.b16 %v701
    %v756 = vunpack.c.l.b16 %v702
    %v757 = vunpack.c.h.b16 %v700
    %v758 = vunpack.c.h.b16 %v701
    %v759 = vunpack.c.h.b16 %v702
    %v760 = vunpack.c.l.b16 %v703
    %v761 = vunpack.c.l.b16 %v704
    %v762 = vunpack.c.l.b16 %v705
    %v763 = vunpack.c.h.b16 %v703
    %v764 = vunpack.c.h.b16 %v704
    %v765 = vunpack.c.h.b16 %v705
    %v766 = vunpack.c.l.b16 %v706
    %v767 = vunpack.c.l.b16 %v707
    %v768 = vunpack.c.l.b16 %v708
    %v769 = vunpack.c.h.b16 %v706
    %v770 = vunpack.c.h.b16 %v707
    %v771 = vunpack.c.h.b16 %v708
    %v772 = vunpack.c.l.b16 %v709
    %v773 = vunpack.c.l.b16 %v710
    %v774 = vunpack.c.l.b16 %v711
    %v775 = vunpack.c.h.b16 %v709
    %v776 = vunpack.c.h.b16 %v710
    %v777 = vunpack.c.h.b16 %v711
    %v778 = vunpack.c.l.b16 %v712
    %v779 = vunpack.c.l.b16 %v713
    %v780 = vunpack.c.l.b16 %v714
    %v781 = vunpack.c.h.b16 %v712
    %v782 = vunpack.c.h.b16 %v713
    %v783 = vunpack.c.h.b16 %v714
    %v784 = vunpack.c.l.b16 %v715
    %v785 = vunpack.c.l.b16 %v716
    %v786 = vunpack.c.l.b16 %v717
    %v787 = vunpack.c.h.b16 %v715
    %v788 = vunpack.c.h.b16 %v716
    %v789 = vunpack.c.h.b16 %v717
    %v790 = vpack.c.b16 %v743, %v742
    %v791 = vpack.c.b16 %v744, %v744
    %v792 = vpack.c.b16 %v746, %v745
    %v793 = vpack.c.b16 %v747, %v747
    %v794 = vpack.c.b16 %v749, %v748
    %v795 = vpack.c.b16 %v750, %v750
    %v796 = vpack.c.b16 %v752, %v751
    %v797 = vpack.c.b16 %v753, %v753
    %v798 = vpack.c.b16 %v755, %v754
    %v799 = vpack.c.b16 %v756, %v756
    %v800 = vpack.c.b16 %v758, %v757
    %v801 = vpack.c.b16 %v759, %v759
    %v802 = vpack.c.b16 %v761, %v760
    %v803 = vpack.c.b16 %v762, %v762
    %v804 = vpack.c.b16 %v764, %v763
    %v805 = vpack.c.b16 %v765, %v765
    %v806 = vpack.c.b16 %v767, %v766
    %v807 = vpack.c.b16 %v768, %v768
    %v808 = vpack.c.b16 %v770, %v769
    %v809 = vpack.c.b16 %v771, %v771
    %v810 = vpack.c.b16 %v773, %v772
    %v811 = vpack.c.b16 %v774, %v774
    %v812 = vpack.c.b16 %v776, %v775
    %v813 = vpack.c.b16 %v777, %v777
    %v814 = vpack.c.b16 %v779, %v778
    %v815 = vpack.c.b16 %v780, %v780
    %v816 = vpack.c.b16 %v782, %v781
    %v817 = vpack.c.b16 %v783, %v783
    %v818 = vpack.c.b16 %v785, %v784
    %v819 = vpack.c.b16 %v786, %v786
    %v820 = vpack.c.b16 %v788, %v787
    %v821 = vpack.c.b16 %v789, %v789
    %854 = vst [vmem:[%s4] sm:$0xff] %v790
    %855 = vst [vmem:[%s4 + $0x8] sm:$0xf] %v791
    %856 = vst [vmem:[%s4 + $0xc] sm:$0xff] %v792
    %857 = vst [vmem:[%s4 + $0x14] sm:$0xf] %v793
    %858 = vst [vmem:[%s4 + $0x18] sm:$0xff] %v794
    %859 = vst [vmem:[%s4 + $0x20] sm:$0xf] %v795
    %860 = vst [vmem:[%s4 + $0x24] sm:$0xff] %v796
    %861 = vst [vmem:[%s4 + $0x2c] sm:$0xf] %v797
    %862 = vst [vmem:[%s4 + $0x30] sm:$0xff] %v798
    %863 = vst [vmem:[%s4 + $0x38] sm:$0xf] %v799
    %864 = vst [vmem:[%s4 + $0x3c] sm:$0xff] %v800
    %865 = vst [vmem:[%s4 + $0x44] sm:$0xf] %v801
    %866 = vst [vmem:[%s4 + $0x48] sm:$0xff] %v802
    %867 = vst [vmem:[%s4 + $0x50] sm:$0xf] %v803
    %868 = vst [vmem:[%s4 + $0x54] sm:$0xff] %v804
    %869 = vst [vmem:[%s4 + $0x5c] sm:$0xf] %v805
    %870 = vst [vmem:[%s4 + $0x60] sm:$0xff] %v806
    %871 = vst [vmem:[%s4 + $0x68] sm:$0xf] %v807
    %872 = vst [vmem:[%s4 + $0x6c] sm:$0xff] %v808
    %873 = vst [vmem:[%s4 + $0x74] sm:$0xf] %v809
    %874 = vst [vmem:[%s4 + $0x78] sm:$0xff] %v810
    %875 = vst [vmem:[%s4 + $0x80] sm:$0xf] %v811
    %876 = vst [vmem:[%s4 + $0x84] sm:$0xff] %v812
    %877 = vst [vmem:[%s4 + $0x8c] sm:$0xf] %v813
    %878 = vst [vmem:[%s4 + $0x90] sm:$0xff] %v814
    %879 = vst [vmem:[%s4 + $0x98] sm:$0xf] %v815
    %880 = vst [vmem:[%s4 + $0x9c] sm:$0xff] %v816
    %881 = vst [vmem:[%s4 + $0xa4] sm:$0xf] %v817
    %882 = vst [vmem:[%s4 + $0xa8] sm:$0xff] %v818
    %883 = vst [vmem:[%s4 + $0xb0] sm:$0xf] %v819
    %884 = vst [vmem:[%s4 + $0xb4] sm:$0xff] %v820
    %885 = vst [vmem:[%s4 + $0xbc] sm:$0xf] %v821
    // Predicated region
    $region26: #{_lambda_.5} parent=1 // pred_check
      _
    $region27: #{_lambda_.5} parent=1 // pred_check_branch
      %887 = sbr.rel (0) target = $region29
    $region28: #{_lambda_.5} parent=1 // pred_region
      _
    $region29: #{_lambda_.5} parent=1 // pred_fallthru
      _
    // Predicated region
    $region30: #{_lambda_.5} parent=1 // pred_check
      _
    $region31: #{_lambda_.5} parent=1 // pred_check_branch
      %889 = sbr.rel (0) target = $region33
    $region32: #{_lambda_.5} parent=1 // pred_region
      _
    $region33: #{_lambda_.5} parent=1 // pred_fallthru
      _
    %890 = vsyncpa [#allocation3], 1
    %891 = vsyncpa [#allocation5], 1

// kernel: _lambda_.7
$region0: #{_lambda_.7}
  #allocation0 [shape = 'u32[]', space=smem, size = 0x4, offset = 0x4, fixed_abs, tag = 'smem constant byte address 0x4 - core index']
  #allocation1 [shape = 'u32[144,128]{1,0:T(1,128)}', space=vmem, size = 0x12000, scoped, tag = 'internal scratch']
  %s0 = inlined_call_operand.vmem [shape: bf16[128,128], index: 0, kind: input, shape index: {}]
  %s1 = inlined_call_operand.vmem [shape: bf16[128,128], index: 1, kind: input, shape index: {}]
  %s2 = inlined_call_operand.vmem [shape: f32[1,128], index: 2, kind: input, shape index: {}]
  %s3 = inlined_call_operand.vmem [shape: f32[128,128], index: 3, kind: input, shape index: {}]
  %s4 = inlined_call_operand.vmem [shape: f32[128,128], index: 4, kind: output, shape index: {}]
  %s5 = sld [smem:[#allocation0]]
  $region26: #{_lambda_.7} parent=0
    _
  %s7 = ssub.s32 1, %s5
  %s8 = scalar_select 0, %s7, %s5
  // Predicated region
  $region2: #{_lambda_.7} parent=0 // pred_check
    _
  $region3: #{_lambda_.7} parent=0 // pred_check_branch
    %10 = sbr.rel (0) target = $region5
  $region4: #{_lambda_.7} parent=0 // pred_region
    _
  $region5: #{_lambda_.7} parent=0 // pred_fallthru
    _
  // Predicated region
  $region6: #{_lambda_.7} parent=0 // pred_check
    _
  $region7: #{_lambda_.7} parent=0 // pred_check_branch
    %12 = sbr.rel (0) target = $region9
  $region8: #{_lambda_.7} parent=0 // pred_region
    _
  $region9: #{_lambda_.7} parent=0 // pred_fallthru
    _
  // Predicated region
  $region10: #{_lambda_.7} parent=0 // pred_check
    _
  $region11: #{_lambda_.7} parent=0 // pred_check_branch
    %14 = sbr.rel (0) target = $region13
  $region12: #{_lambda_.7} parent=0 // pred_region
    _
  $region13: #{_lambda_.7} parent=0 // pred_fallthru
    _
  // Predicated region
  $region14: #{_lambda_.7} parent=0 // pred_check
    _
  $region15: #{_lambda_.7} parent=0 // pred_check_branch
    %16 = sbr.rel (0) target = $region17
  $region16: #{_lambda_.7} parent=0 // pred_region
    _
  $region17: #{_lambda_.7} parent=0 // pred_fallthru
    _
  %v18 = vld [vmem:[%s0] sm:$0xf]
  %v19 = vld [vmem:[%s0 + $0x4] sm:$0xf]
  %v20 = vld [vmem:[%s0 + $0x8] sm:$0xf]
  %v21 = vld [vmem:[%s0 + $0xc] sm:$0xf]
  %v22 = vld [vmem:[%s0 + $0x10] sm:$0xf]
  %v23 = vld [vmem:[%s0 + $0x14] sm:$0xf]
  %v24 = vld [vmem:[%s0 + $0x18] sm:$0xf]
  %v25 = vld [vmem:[%s0 + $0x1c] sm:$0xf]
  %v26 = vld [vmem:[%s0 + $0x20] sm:$0xf]
  %v27 = vld [vmem:[%s0 + $0x24] sm:$0xf]
  %v28 = vld [vmem:[%s0 + $0x28] sm:$0xf]
  %v29 = vld [vmem:[%s0 + $0x2c] sm:$0xf]
  %v30 = vld [vmem:[%s0 + $0x30] sm:$0xf]
  %v31 = vld [vmem:[%s0 + $0x34] sm:$0xf]
  %v32 = vld [vmem:[%s0 + $0x38] sm:$0xf]
  %v33 = vld [vmem:[%s0 + $0x3c] sm:$0xf]
  %v34 = vld [vmem:[%s1] sm:$0xf]
  %v35 = vld [vmem:[%s1 + $0x4] sm:$0xf]
  %v36 = vld [vmem:[%s1 + $0x8] sm:$0xf]
  %v37 = vld [vmem:[%s1 + $0xc] sm:$0xf]
  %v38 = vld [vmem:[%s1 + $0x10] sm:$0xf]
  %v39 = vld [vmem:[%s1 + $0x14] sm:$0xf]
  %v40 = vld [vmem:[%s1 + $0x18] sm:$0xf]
  %v41 = vld [vmem:[%s1 + $0x1c] sm:$0xf]
  %v42 = vld [vmem:[%s1 + $0x20] sm:$0xf]
  %v43 = vld [vmem:[%s1 + $0x24] sm:$0xf]
  %v44 = vld [vmem:[%s1 + $0x28] sm:$0xf]
  %v45 = vld [vmem:[%s1 + $0x2c] sm:$0xf]
  %v46 = vld [vmem:[%s1 + $0x30] sm:$0xf]
  %v47 = vld [vmem:[%s1 + $0x34] sm:$0xf]
  %v48 = vld [vmem:[%s1 + $0x38] sm:$0xf]
  %v49 = vld [vmem:[%s1 + $0x3c] sm:$0xf]
  %v50 = vld [vmem:[%s2] sm:$0x1]
  %v52 = vlaneseq
  %v53 = vshrl.u32 %v52, 7
  %v54 = vsub.s32 0, %v53
  %v55 = vrot.slane %v50, %v54
  %v73 = vunpack.c.l.b16 %v18
  %v74 = vunpack.c.l.b16 %v19
  %v75 = vunpack.c.l.b16 %v20
  %v76 = vunpack.c.l.b16 %v21
  %v77 = vunpack.c.l.b16 %v22
  %v78 = vunpack.c.l.b16 %v23
  %v79 = vunpack.c.l.b16 %v24
  %v80 = vunpack.c.l.b16 %v25
  %v81 = vunpack.c.l.b16 %v26
  %v82 = vunpack.c.l.b16 %v27
  %v83 = vunpack.c.l.b16 %v28
  %v84 = vunpack.c.l.b16 %v29
  %v85 = vunpack.c.l.b16 %v30
  %v86 = vunpack.c.l.b16 %v31
  %v87 = vunpack.c.l.b16 %v32
  %v88 = vunpack.c.l.b16 %v33
  %v89 = vpack.c.b16 %v74, %v73
  %v90 = vpack.c.b16 %v76, %v75
  %v91 = vpack.c.b16 %v78, %v77
  %v92 = vpack.c.b16 %v80, %v79
  %v93 = vpack.c.b16 %v82, %v81
  %v94 = vpack.c.b16 %v84, %v83
  %v95 = vpack.c.b16 %v86, %v85
  %v96 = vpack.c.b16 %v88, %v87
  %v121 = vunpack.c.l.b16 %v34
  %v122 = vunpack.c.l.b16 %v35
  %v123 = vunpack.c.l.b16 %v36
  %v124 = vunpack.c.l.b16 %v37
  %v125 = vunpack.c.l.b16 %v38
  %v126 = vunpack.c.l.b16 %v39
  %v127 = vunpack.c.l.b16 %v40
  %v128 = vunpack.c.l.b16 %v41
  %v129 = vunpack.c.l.b16 %v42
  %v130 = vunpack.c.l.b16 %v43
  %v131 = vunpack.c.l.b16 %v44
  %v132 = vunpack.c.l.b16 %v45
  %v133 = vunpack.c.l.b16 %v46
  %v134 = vunpack.c.l.b16 %v47
  %v135 = vunpack.c.l.b16 %v48
  %v136 = vunpack.c.l.b16 %v49
  %v137 = vpack.c.b16 %v122, %v121
  %v138 = vpack.c.b16 %v124, %v123
  %v139 = vpack.c.b16 %v126, %v125
  %v140 = vpack.c.b16 %v128, %v127
  %v141 = vpack.c.b16 %v130, %v129
  %v142 = vpack.c.b16 %v132, %v131
  %v143 = vpack.c.b16 %v134, %v133
  %v144 = vpack.c.b16 %v136, %v135
  %153 = vmatprep.subr.bf16.mxu0 0
  %154 = vmatpush1.bf16.msra.mxu0 %v144
  %155 = vmatprep.subr.bf16.mxu0 0
  %156 = vmatpush1.bf16.msra.mxu0 %v143
  %157 = vmatprep.subr.bf16.mxu0 0
  %158 = vmatpush1.bf16.msra.mxu0 %v142
  %159 = vmatprep.subr.bf16.mxu0 0
  %160 = vmatpush1.bf16.msra.mxu0 %v141
  %161 = vmatprep.subr.bf16.mxu0 0
  %162 = vmatpush1.bf16.msra.mxu0 %v140
  %163 = vmatprep.subr.bf16.mxu0 0
  %164 = vmatpush1.bf16.msra.mxu0 %v139
  %165 = vmatprep.subr.bf16.mxu0 0
  %166 = vmatpush1.bf16.msra.mxu0 %v138
  %167 = vmatprep.subr.bf16.mxu0 0
  %168 = vmatpush1.bf16.msra.mxu0 %v137
  %169 = vmatprep.subr.bf16.mxu0 0
  %170 = vmatpush2.bf16.msra.mxu0 0
  %171 = vmatprep.subr.bf16.mxu0 0
  %172 = vmatpush2.bf16.msra.mxu0 0
  %173 = vmatprep.subr.bf16.mxu0 0
  %174 = vmatpush2.bf16.msra.mxu0 0
  %175 = vmatprep.subr.bf16.mxu0 0
  %176 = vmatpush2.bf16.msra.mxu0 0
  %177 = vmatprep.subr.bf16.mxu0 0
  %178 = vmatpush2.bf16.msra.mxu0 0
  %179 = vmatprep.subr.bf16.mxu0 0
  %180 = vmatpush2.bf16.msra.mxu0 0
  %181 = vmatprep.subr.bf16.mxu0 0
  %182 = vmatpush2.bf16.msra.mxu0 0
  %183 = vmatprep.subr.bf16.mxu0 0
  %184 = vmatpush2.bf16.msra.mxu0 0
  %185 = vmatprep.mubr.bf16.mxu0 0
  %186 = vmatmul.mubr.bf16.gmra.mxu0 %v89
  %v187 = vpop.f32.mrf.mxu0
  %v188 = vadd.f32 %v55, %v187
  %v189 = vpop.f32.mrf.mxu0
  %v190 = vpop.f32.mrf.mxu0
  %v191 = vadd.f32 %v55, %v190
  %v192 = vpop.f32.mrf.mxu0
  %193 = vmatprep.mubr.bf16.mxu0 0
  %194 = vmatmul.mubr.bf16.gmra.mxu0 %v90
  %v195 = vpop.f32.mrf.mxu0
  %v196 = vadd.f32 %v55, %v195
  %v197 = vpop.f32.mrf.mxu0
  %v198 = vpop.f32.mrf.mxu0
  %v199 = vadd.f32 %v55, %v198
  %v200 = vpop.f32.mrf.mxu0
  %201 = vmatprep.mubr.bf16.mxu0 0
  %202 = vmatmul.mubr.bf16.gmra.mxu0 %v91
  %v203 = vpop.f32.mrf.mxu0
  %v204 = vadd.f32 %v55, %v203
  %v205 = vpop.f32.mrf.mxu0
  %v206 = vpop.f32.mrf.mxu0
  %v207 = vadd.f32 %v55, %v206
  %v208 = vpop.f32.mrf.mxu0
  %209 = vmatprep.mubr.bf16.mxu0 0
  %210 = vmatmul.mubr.bf16.gmra.mxu0 %v92
  %v211 = vpop.f32.mrf.mxu0
  %v212 = vadd.f32 %v55, %v211
  %v213 = vpop.f32.mrf.mxu0
  %v214 = vpop.f32.mrf.mxu0
  %v215 = vadd.f32 %v55, %v214
  %v216 = vpop.f32.mrf.mxu0
  %217 = vmatprep.mubr.bf16.mxu0 0
  %218 = vmatmul.mubr.bf16.gmra.mxu0 %v93
  %v219 = vpop.f32.mrf.mxu0
  %v220 = vadd.f32 %v55, %v219
  %v221 = vpop.f32.mrf.mxu0
  %v222 = vpop.f32.mrf.mxu0
  %v223 = vadd.f32 %v55, %v222
  %v224 = vpop.f32.mrf.mxu0
  %225 = vmatprep.mubr.bf16.mxu0 0
  %226 = vmatmul.mubr.bf16.gmra.mxu0 %v94
  %v227 = vpop.f32.mrf.mxu0
  %v228 = vadd.f32 %v55, %v227
  %v229 = vpop.f32.mrf.mxu0
  %v230 = vpop.f32.mrf.mxu0
  %v231 = vadd.f32 %v55, %v230
  %v232 = vpop.f32.mrf.mxu0
  %233 = vmatprep.mubr.bf16.mxu0 0
  %234 = vmatmul.mubr.bf16.gmra.mxu0 %v95
  %v235 = vpop.f32.mrf.mxu0
  %v236 = vadd.f32 %v55, %v235
  %v237 = vpop.f32.mrf.mxu0
  %v238 = vpop.f32.mrf.mxu0
  %v239 = vadd.f32 %v55, %v238
  %v240 = vpop.f32.mrf.mxu0
  %241 = vmatprep.mubr.bf16.mxu0 0
  %242 = vmatmul.mubr.bf16.gmra.mxu0 %v96
  %v243 = vpop.f32.mrf.mxu0
  %v244 = vadd.f32 %v55, %v243
  %v245 = vpop.f32.mrf.mxu0
  %v246 = vpop.f32.mrf.mxu0
  %v247 = vadd.f32 %v55, %v246
  %v248 = vpop.f32.mrf.mxu0
  %249 = vdwg.mxu0
  %v250 = vld [vmem:[%s3] sm:$0xff]
  %v251 = vld [vmem:[%s3 + $0x8] sm:$0xff]
  %v252 = vld [vmem:[%s3 + $0x10] sm:$0xff]
  %v253 = vld [vmem:[%s3 + $0x18] sm:$0xff]
  %v254 = vld [vmem:[%s3 + $0x20] sm:$0xff]
  %v255 = vld [vmem:[%s3 + $0x28] sm:$0xff]
  %v256 = vld [vmem:[%s3 + $0x30] sm:$0xff]
  %v257 = vld [vmem:[%s3 + $0x38] sm:$0xff]
  %v258 = vld [vmem:[%s3 + $0x40] sm:$0xff]
  %v259 = vld [vmem:[%s3 + $0x48] sm:$0xff]
  %v260 = vld [vmem:[%s3 + $0x50] sm:$0xff]
  %v261 = vld [vmem:[%s3 + $0x58] sm:$0xff]
  %v262 = vld [vmem:[%s3 + $0x60] sm:$0xff]
  %v263 = vld [vmem:[%s3 + $0x68] sm:$0xff]
  %v264 = vld [vmem:[%s3 + $0x70] sm:$0xff]
  %v265 = vld [vmem:[%s3 + $0x78] sm:$0xff]
  %v266 = vadd.f32 %v188, %v250
  %v267 = vadd.f32 %v191, %v251
  %v268 = vadd.f32 %v196, %v252
  %v269 = vadd.f32 %v199, %v253
  %v270 = vadd.f32 %v204, %v254
  %v271 = vadd.f32 %v207, %v255
  %v272 = vadd.f32 %v212, %v256
  %v273 = vadd.f32 %v215, %v257
  %v274 = vadd.f32 %v220, %v258
  %v275 = vadd.f32 %v223, %v259
  %v276 = vadd.f32 %v228, %v260
  %v277 = vadd.f32 %v231, %v261
  %v278 = vadd.f32 %v236, %v262
  %v279 = vadd.f32 %v239, %v263
  %v280 = vadd.f32 %v244, %v264
  %v281 = vadd.f32 %v247, %v265
  %282 = vst [vmem:[%s4] sm:$0xff] %v266
  %283 = vst [vmem:[%s4 + $0x8] sm:$0xff] %v267
  %284 = vst [vmem:[%s4 + $0x10] sm:$0xff] %v268
  %285 = vst [vmem:[%s4 + $0x18] sm:$0xff] %v269
  %286 = vst [vmem:[%s4 + $0x20] sm:$0xff] %v270
  %287 = vst [vmem:[%s4 + $0x28] sm:$0xff] %v271
  %288 = vst [vmem:[%s4 + $0x30] sm:$0xff] %v272
  %289 = vst [vmem:[%s4 + $0x38] sm:$0xff] %v273
  %290 = vst [vmem:[%s4 + $0x40] sm:$0xff] %v274
  %291 = vst [vmem:[%s4 + $0x48] sm:$0xff] %v275
  %292 = vst [vmem:[%s4 + $0x50] sm:$0xff] %v276
  %293 = vst [vmem:[%s4 + $0x58] sm:$0xff] %v277
  %294 = vst [vmem:[%s4 + $0x60] sm:$0xff] %v278
  %295 = vst [vmem:[%s4 + $0x68] sm:$0xff] %v279
  %296 = vst [vmem:[%s4 + $0x70] sm:$0xff] %v280
  %297 = vst [vmem:[%s4 + $0x78] sm:$0xff] %v281
  // Predicated region
  $region18: #{_lambda_.7} parent=0 // pred_check
    _
  $region19: #{_lambda_.7} parent=0 // pred_check_branch
    %299 = sbr.rel (0) target = $region21
  $region20: #{_lambda_.7} parent=0 // pred_region
    _
  $region21: #{_lambda_.7} parent=0 // pred_fallthru
    _
  // Predicated region
  $region22: #{_lambda_.7} parent=0 // pred_check
    _
  $region23: #{_lambda_.7} parent=0 // pred_check_branch
    %301 = sbr.rel (0) target = $region25
  $region24: #{_lambda_.7} parent=0 // pred_region
    _
  $region25: #{_lambda_.7} parent=0 // pred_fallthru
    _

// kernel: _lambda_.6
$region0: #{_lambda_.6}
  #allocation0 [shape = 'u32[]', space=smem, size = 0x4, offset = 0x4, fixed_abs, tag = 'smem constant byte address 0x4 - core index']
  #allocation1 [shape = 'u32[144,128]{1,0:T(1,128)}', space=vmem, size = 0x12000, scoped, tag = 'internal scratch']
  %s0 = inlined_call_operand.vmem [shape: bf16[4,64,128], index: 0, kind: input, shape index: {}]
  %s1 = inlined_call_operand.vmem [shape: bf16[4,128,128], index: 1, kind: input, shape index: {}]
  %s2 = inlined_call_operand.vmem [shape: bf16[4,128,128], index: 2, kind: input, shape index: {}]
  %s3 = inlined_call_operand.vmem [shape: bf16[4,64,128], index: 3, kind: output, shape index: {}]
  %s4 = sld [smem:[#allocation0]]
  $region22: #{_lambda_.6} parent=0
    _
  %s6 = ssub.s32 1, %s4
  %s7 = scalar_select 0, %s6, %s4
  // Predicated region
  $region2: #{_lambda_.6} parent=0 // pred_check
    _
  $region3: #{_lambda_.6} parent=0 // pred_check_branch
    %9 = sbr.rel (0) target = $region5
  $region4: #{_lambda_.6} parent=0 // pred_region
    _
  $region5: #{_lambda_.6} parent=0 // pred_fallthru
    _
  // Predicated region
  $region6: #{_lambda_.6} parent=0 // pred_check
    _
  $region7: #{_lambda_.6} parent=0 // pred_check_branch
    %11 = sbr.rel (0) target = $region9
  $region8: #{_lambda_.6} parent=0 // pred_region
    _
  $region9: #{_lambda_.6} parent=0 // pred_fallthru
    _
  // Predicated region
  $region10: #{_lambda_.6} parent=0 // pred_check
    _
  $region11: #{_lambda_.6} parent=0 // pred_check_branch
    %13 = sbr.rel (0) target = $region13
  $region12: #{_lambda_.6} parent=0 // pred_region
    _
  $region13: #{_lambda_.6} parent=0 // pred_fallthru
    _
  %v15 = vld [vmem:[%s0] sm:$0xf]
  %v16 = vld [vmem:[%s0 + $0x4] sm:$0xf]
  %v17 = vld [vmem:[%s0 + $0x8] sm:$0xf]
  %v18 = vld [vmem:[%s0 + $0xc] sm:$0xf]
  %v19 = vld [vmem:[%s0 + $0x10] sm:$0xf]
  %v20 = vld [vmem:[%s0 + $0x14] sm:$0xf]
  %v21 = vld [vmem:[%s0 + $0x18] sm:$0xf]
  %v22 = vld [vmem:[%s0 + $0x1c] sm:$0xf]
  %v23 = vld [vmem:[%s0 + $0x20] sm:$0xf]
  %v24 = vld [vmem:[%s0 + $0x24] sm:$0xf]
  %v25 = vld [vmem:[%s0 + $0x28] sm:$0xf]
  %v26 = vld [vmem:[%s0 + $0x2c] sm:$0xf]
  %v27 = vld [vmem:[%s0 + $0x30] sm:$0xf]
  %v28 = vld [vmem:[%s0 + $0x34] sm:$0xf]
  %v29 = vld [vmem:[%s0 + $0x38] sm:$0xf]
  %v30 = vld [vmem:[%s0 + $0x3c] sm:$0xf]
  %v31 = vld [vmem:[%s0 + $0x40] sm:$0xf]
  %v32 = vld [vmem:[%s0 + $0x44] sm:$0xf]
  %v33 = vld [vmem:[%s0 + $0x48] sm:$0xf]
  %v34 = vld [vmem:[%s0 + $0x4c] sm:$0xf]
  %v35 = vld [vmem:[%s0 + $0x50] sm:$0xf]
  %v36 = vld [vmem:[%s0 + $0x54] sm:$0xf]
  %v37 = vld [vmem:[%s0 + $0x58] sm:$0xf]
  %v38 = vld [vmem:[%s0 + $0x5c] sm:$0xf]
  %v39 = vld [vmem:[%s0 + $0x60] sm:$0xf]
  %v40 = vld [vmem:[%s0 + $0x64] sm:$0xf]
  %v41 = vld [vmem:[%s0 + $0x68] sm:$0xf]
  %v42 = vld [vmem:[%s0 + $0x6c] sm:$0xf]
  %v43 = vld [vmem:[%s0 + $0x70] sm:$0xf]
  %v44 = vld [vmem:[%s0 + $0x74] sm:$0xf]
  %v45 = vld [vmem:[%s0 + $0x78] sm:$0xf]
  %v46 = vld [vmem:[%s0 + $0x7c] sm:$0xf]
  %v47 = vunpack.c.l.bf16 %v15
  %v48 = vunpack.c.l.bf16 %v16
  %v49 = vunpack.c.l.bf16 %v17
  %v50 = vunpack.c.l.bf16 %v18
  %v51 = vunpack.c.l.bf16 %v19
  %v52 = vunpack.c.l.bf16 %v20
  %v53 = vunpack.c.l.bf16 %v21
  %v54 = vunpack.c.l.bf16 %v22
  %v55 = vunpack.c.l.bf16 %v23
  %v56 = vunpack.c.l.bf16 %v24
  %v57 = vunpack.c.l.bf16 %v25
  %v58 = vunpack.c.l.bf16 %v26
  %v59 = vunpack.c.l.bf16 %v27
  %v60 = vunpack.c.l.bf16 %v28
  %v61 = vunpack.c.l.bf16 %v29
  %v62 = vunpack.c.l.bf16 %v30
  %v63 = vunpack.c.l.bf16 %v31
  %v64 = vunpack.c.l.bf16 %v32
  %v65 = vunpack.c.l.bf16 %v33
  %v66 = vunpack.c.l.bf16 %v34
  %v67 = vunpack.c.l.bf16 %v35
  %v68 = vunpack.c.l.bf16 %v36
  %v69 = vunpack.c.l.bf16 %v37
  %v70 = vunpack.c.l.bf16 %v38
  %v71 = vunpack.c.l.bf16 %v39
  %v72 = vunpack.c.l.bf16 %v40
  %v73 = vunpack.c.l.bf16 %v41
  %v74 = vunpack.c.l.bf16 %v42
  %v75 = vunpack.c.l.bf16 %v43
  %v76 = vunpack.c.l.bf16 %v44
  %v77 = vunpack.c.l.bf16 %v45
  %v78 = vunpack.c.l.bf16 %v46
  %v79 = vmul.f32 %v47, 0.125
  %v80 = vmul.f32 %v48, 0.125
  %v81 = vmul.f32 %v49, 0.125
  %v82 = vmul.f32 %v50, 0.125
  %v83 = vmul.f32 %v51, 0.125
  %v84 = vmul.f32 %v52, 0.125
  %v85 = vmul.f32 %v53, 0.125
  %v86 = vmul.f32 %v54, 0.125
  %v87 = vmul.f32 %v55, 0.125
  %v88 = vmul.f32 %v56, 0.125
  %v89 = vmul.f32 %v57, 0.125
  %v90 = vmul.f32 %v58, 0.125
  %v91 = vmul.f32 %v59, 0.125
  %v92 = vmul.f32 %v60, 0.125
  %v93 = vmul.f32 %v61, 0.125
  %v94 = vmul.f32 %v62, 0.125
  %v95 = vmul.f32 %v63, 0.125
  %v96 = vmul.f32 %v64, 0.125
  %v97 = vmul.f32 %v65, 0.125
  %v98 = vmul.f32 %v66, 0.125
  %v99 = vmul.f32 %v67, 0.125
  %v100 = vmul.f32 %v68, 0.125
  %v101 = vmul.f32 %v69, 0.125
  %v102 = vmul.f32 %v70, 0.125
  %v103 = vmul.f32 %v71, 0.125
  %v104 = vmul.f32 %v72, 0.125
  %v105 = vmul.f32 %v73, 0.125
  %v106 = vmul.f32 %v74, 0.125
  %v107 = vmul.f32 %v75, 0.125
  %v108 = vmul.f32 %v76, 0.125
  %v109 = vmul.f32 %v77, 0.125
  %v110 = vmul.f32 %v78, 0.125
  %v111 = vpack.c.bf16 %v80, %v79
  %v112 = vpack.c.bf16 %v82, %v81
  %v113 = vpack.c.bf16 %v84, %v83
  %v114 = vpack.c.bf16 %v86, %v85
  %v115 = vpack.c.bf16 %v88, %v87
  %v116 = vpack.c.bf16 %v90, %v89
  %v117 = vpack.c.bf16 %v92, %v91
  %v118 = vpack.c.bf16 %v94, %v93
  %v119 = vpack.c.bf16 %v96, %v95
  %v120 = vpack.c.bf16 %v98, %v97
  %v121 = vpack.c.bf16 %v100, %v99
  %v122 = vpack.c.bf16 %v102, %v101
  %v123 = vpack.c.bf16 %v104, %v103
  %v124 = vpack.c.bf16 %v106, %v105
  %v125 = vpack.c.bf16 %v108, %v107
  %v126 = vpack.c.bf16 %v110, %v109
  %v127 = vld [vmem:[%s1] sm:$0xf]
  %v128 = vld [vmem:[%s1 + $0x4] sm:$0xf]
  %v129 = vld [vmem:[%s1 + $0x8] sm:$0xf]
  %v130 = vld [vmem:[%s1 + $0xc] sm:$0xf]
  %v131 = vld [vmem:[%s1 + $0x10] sm:$0xf]
  %v132 = vld [vmem:[%s1 + $0x14] sm:$0xf]
  %v133 = vld [vmem:[%s1 + $0x18] sm:$0xf]
  %v134 = vld [vmem:[%s1 + $0x1c] sm:$0xf]
  %v135 = vld [vmem:[%s1 + $0x20] sm:$0xf]
  %v136 = vld [vmem:[%s1 + $0x24] sm:$0xf]
  %v137 = vld [vmem:[%s1 + $0x28] sm:$0xf]
  %v138 = vld [vmem:[%s1 + $0x2c] sm:$0xf]
  %v139 = vld [vmem:[%s1 + $0x30] sm:$0xf]
  %v140 = vld [vmem:[%s1 + $0x34] sm:$0xf]
  %v141 = vld [vmem:[%s1 + $0x38] sm:$0xf]
  %v142 = vld [vmem:[%s1 + $0x3c] sm:$0xf]
  %v143 = vld [vmem:[%s1 + $0x40] sm:$0xf]
  %v144 = vld [vmem:[%s1 + $0x44] sm:$0xf]
  %v145 = vld [vmem:[%s1 + $0x48] sm:$0xf]
  %v146 = vld [vmem:[%s1 + $0x4c] sm:$0xf]
  %v147 = vld [vmem:[%s1 + $0x50] sm:$0xf]
  %v148 = vld [vmem:[%s1 + $0x54] sm:$0xf]
  %v149 = vld [vmem:[%s1 + $0x58] sm:$0xf]
  %v150 = vld [vmem:[%s1 + $0x5c] sm:$0xf]
  %v151 = vld [vmem:[%s1 + $0x60] sm:$0xf]
  %v152 = vld [vmem:[%s1 + $0x64] sm:$0xf]
  %v153 = vld [vmem:[%s1 + $0x68] sm:$0xf]
  %v154 = vld [vmem:[%s1 + $0x6c] sm:$0xf]
  %v155 = vld [vmem:[%s1 + $0x70] sm:$0xf]
  %v156 = vld [vmem:[%s1 + $0x74] sm:$0xf]
  %v157 = vld [vmem:[%s1 + $0x78] sm:$0xf]
  %v158 = vld [vmem:[%s1 + $0x7c] sm:$0xf]
  %v159 = vld [vmem:[%s1 + $0x80] sm:$0xf]
  %v160 = vld [vmem:[%s1 + $0x84] sm:$0xf]
  %v161 = vld [vmem:[%s1 + $0x88] sm:$0xf]
  %v162 = vld [vmem:[%s1 + $0x8c] sm:$0xf]
  %v163 = vld [vmem:[%s1 + $0x90] sm:$0xf]
  %v164 = vld [vmem:[%s1 + $0x94] sm:$0xf]
  %v165 = vld [vmem:[%s1 + $0x98] sm:$0xf]
  %v166 = vld [vmem:[%s1 + $0x9c] sm:$0xf]
  %v167 = vld [vmem:[%s1 + $0xa0] sm:$0xf]
  %v168 = vld [vmem:[%s1 + $0xa4] sm:$0xf]
  %v169 = vld [vmem:[%s1 + $0xa8] sm:$0xf]
  %v170 = vld [vmem:[%s1 + $0xac] sm:$0xf]
  %v171 = vld [vmem:[%s1 + $0xb0] sm:$0xf]
  %v172 = vld [vmem:[%s1 + $0xb4] sm:$0xf]
  %v173 = vld [vmem:[%s1 + $0xb8] sm:$0xf]
  %v174 = vld [vmem:[%s1 + $0xbc] sm:$0xf]
  %v175 = vld [vmem:[%s1 + $0xc0] sm:$0xf]
  %v176 = vld [vmem:[%s1 + $0xc4] sm:$0xf]
  %v177 = vld [vmem:[%s1 + $0xc8] sm:$0xf]
  %v178 = vld [vmem:[%s1 + $0xcc] sm:$0xf]
  %v179 = vld [vmem:[%s1 + $0xd0] sm:$0xf]
  %v180 = vld [vmem:[%s1 + $0xd4] sm:$0xf]
  %v181 = vld [vmem:[%s1 + $0xd8] sm:$0xf]
  %v182 = vld [vmem:[%s1 + $0xdc] sm:$0xf]
  %v183 = vld [vmem:[%s1 + $0xe0] sm:$0xf]
  %v184 = vld [vmem:[%s1 + $0xe4] sm:$0xf]
  %v185 = vld [vmem:[%s1 + $0xe8] sm:$0xf]
  %v186 = vld [vmem:[%s1 + $0xec] sm:$0xf]
  %v187 = vld [vmem:[%s1 + $0xf0] sm:$0xf]
  %v188 = vld [vmem:[%s1 + $0xf4] sm:$0xf]
  %v189 = vld [vmem:[%s1 + $0xf8] sm:$0xf]
  %v190 = vld [vmem:[%s1 + $0xfc] sm:$0xf]
  %v191 = vld [vmem:[%s2] sm:$0xf]
  %v192 = vld [vmem:[%s2 + $0x4] sm:$0xf]
  %v193 = vld [vmem:[%s2 + $0x8] sm:$0xf]
  %v194 = vld [vmem:[%s2 + $0xc] sm:$0xf]
  %v195 = vld [vmem:[%s2 + $0x10] sm:$0xf]
  %v196 = vld [vmem:[%s2 + $0x14] sm:$0xf]
  %v197 = vld [vmem:[%s2 + $0x18] sm:$0xf]
  %v198 = vld [vmem:[%s2 + $0x1c] sm:$0xf]
  %v199 = vld [vmem:[%s2 + $0x20] sm:$0xf]
  %v200 = vld [vmem:[%s2 + $0x24] sm:$0xf]
  %v201 = vld [vmem:[%s2 + $0x28] sm:$0xf]
  %v202 = vld [vmem:[%s2 + $0x2c] sm:$0xf]
  %v203 = vld [vmem:[%s2 + $0x30] sm:$0xf]
  %v204 = vld [vmem:[%s2 + $0x34] sm:$0xf]
  %v205 = vld [vmem:[%s2 + $0x38] sm:$0xf]
  %v206 = vld [vmem:[%s2 + $0x3c] sm:$0xf]
  %v207 = vld [vmem:[%s2 + $0x40] sm:$0xf]
  %v208 = vld [vmem:[%s2 + $0x44] sm:$0xf]
  %v209 = vld [vmem:[%s2 + $0x48] sm:$0xf]
  %v210 = vld [vmem:[%s2 + $0x4c] sm:$0xf]
  %v211 = vld [vmem:[%s2 + $0x50] sm:$0xf]
  %v212 = vld [vmem:[%s2 + $0x54] sm:$0xf]
  %v213 = vld [vmem:[%s2 + $0x58] sm:$0xf]
  %v214 = vld [vmem:[%s2 + $0x5c] sm:$0xf]
  %v215 = vld [vmem:[%s2 + $0x60] sm:$0xf]
  %v216 = vld [vmem:[%s2 + $0x64] sm:$0xf]
  %v217 = vld [vmem:[%s2 + $0x68] sm:$0xf]
  %v218 = vld [vmem:[%s2 + $0x6c] sm:$0xf]
  %v219 = vld [vmem:[%s2 + $0x70] sm:$0xf]
  %v220 = vld [vmem:[%s2 + $0x74] sm:$0xf]
  %v221 = vld [vmem:[%s2 + $0x78] sm:$0xf]
  %v222 = vld [vmem:[%s2 + $0x7c] sm:$0xf]
  %v223 = vld [vmem:[%s2 + $0x80] sm:$0xf]
  %v224 = vld [vmem:[%s2 + $0x84] sm:$0xf]
  %v225 = vld [vmem:[%s2 + $0x88] sm:$0xf]
  %v226 = vld [vmem:[%s2 + $0x8c] sm:$0xf]
  %v227 = vld [vmem:[%s2 + $0x90] sm:$0xf]
  %v228 = vld [vmem:[%s2 + $0x94] sm:$0xf]
  %v229 = vld [vmem:[%s2 + $0x98] sm:$0xf]
  %v230 = vld [vmem:[%s2 + $0x9c] sm:$0xf]
  %v231 = vld [vmem:[%s2 + $0xa0] sm:$0xf]
  %v232 = vld [vmem:[%s2 + $0xa4] sm:$0xf]
  %v233 = vld [vmem:[%s2 + $0xa8] sm:$0xf]
  %v234 = vld [vmem:[%s2 + $0xac] sm:$0xf]
  %v235 = vld [vmem:[%s2 + $0xb0] sm:$0xf]
  %v236 = vld [vmem:[%s2 + $0xb4] sm:$0xf]
  %v237 = vld [vmem:[%s2 + $0xb8] sm:$0xf]
  %v238 = vld [vmem:[%s2 + $0xbc] sm:$0xf]
  %v239 = vld [vmem:[%s2 + $0xc0] sm:$0xf]
  %v240 = vld [vmem:[%s2 + $0xc4] sm:$0xf]
  %v241 = vld [vmem:[%s2 + $0xc8] sm:$0xf]
  %v242 = vld [vmem:[%s2 + $0xcc] sm:$0xf]
  %v243 = vld [vmem:[%s2 + $0xd0] sm:$0xf]
  %v244 = vld [vmem:[%s2 + $0xd4] sm:$0xf]
  %v245 = vld [vmem:[%s2 + $0xd8] sm:$0xf]
  %v246 = vld [vmem:[%s2 + $0xdc] sm:$0xf]
  %v247 = vld [vmem:[%s2 + $0xe0] sm:$0xf]
  %v248 = vld [vmem:[%s2 + $0xe4] sm:$0xf]
  %v249 = vld [vmem:[%s2 + $0xe8] sm:$0xf]
  %v250 = vld [vmem:[%s2 + $0xec] sm:$0xf]
  %v251 = vld [vmem:[%s2 + $0xf0] sm:$0xf]
  %v252 = vld [vmem:[%s2 + $0xf4] sm:$0xf]
  %v253 = vld [vmem:[%s2 + $0xf8] sm:$0xf]
  %v254 = vld [vmem:[%s2 + $0xfc] sm:$0xf]
  %v271 = vunpack.c.l.b16 %v127
  %v272 = vunpack.c.l.b16 %v128
  %v273 = vunpack.c.l.b16 %v129
  %v274 = vunpack.c.l.b16 %v130
  %v275 = vunpack.c.l.b16 %v131
  %v276 = vunpack.c.l.b16 %v132
  %v277 = vunpack.c.l.b16 %v133
  %v278 = vunpack.c.l.b16 %v134
  %v279 = vunpack.c.l.b16 %v135
  %v280 = vunpack.c.l.b16 %v136
  %v281 = vunpack.c.l.b16 %v137
  %v282 = vunpack.c.l.b16 %v138
  %v283 = vunpack.c.l.b16 %v139
  %v284 = vunpack.c.l.b16 %v140
  %v285 = vunpack.c.l.b16 %v141
  %v286 = vunpack.c.l.b16 %v142
  %v287 = vpack.c.b16 %v272, %v271
  %v288 = vpack.c.b16 %v274, %v273
  %v289 = vpack.c.b16 %v276, %v275
  %v290 = vpack.c.b16 %v278, %v277
  %v291 = vpack.c.b16 %v280, %v279
  %v292 = vpack.c.b16 %v282, %v281
  %v293 = vpack.c.b16 %v284, %v283
  %v294 = vpack.c.b16 %v286, %v285
  %303 = vmatprep.subr.bf16.mxu0 0
  %304 = vmatpush1.bf16.xpose.msra.mxu0 %v294
  %305 = vmatprep.subr.bf16.mxu0 0
  %306 = vmatpush1.bf16.xpose.msra.mxu0 %v293
  %307 = vmatprep.subr.bf16.mxu0 0
  %308 = vmatpush1.bf16.xpose.msra.mxu0 %v292
  %309 = vmatprep.subr.bf16.mxu0 0
  %310 = vmatpush1.bf16.xpose.msra.mxu0 %v291
  %311 = vmatprep.subr.bf16.mxu0 0
  %312 = vmatpush1.bf16.xpose.msra.mxu0 %v290
  %313 = vmatprep.subr.bf16.mxu0 0
  %314 = vmatpush1.bf16.xpose.msra.mxu0 %v289
  %315 = vmatprep.subr.bf16.mxu0 0
  %316 = vmatpush1.bf16.xpose.msra.mxu0 %v288
  %317 = vmatprep.subr.bf16.mxu0 0
  %318 = vmatpush1.bf16.xpose.msra.mxu0 %v287
  %319 = vmatprep.subr.bf16.mxu0 0
  %320 = vmatpush2.bf16.xpose.msra.mxu0 0
  %321 = vmatprep.subr.bf16.mxu0 0
  %322 = vmatpush2.bf16.xpose.msra.mxu0 0
  %323 = vmatprep.subr.bf16.mxu0 0
  %324 = vmatpush2.bf16.xpose.msra.mxu0 0
  %325 = vmatprep.subr.bf16.mxu0 0
  %326 = vmatpush2.bf16.xpose.msra.mxu0 0
  %327 = vmatprep.subr.bf16.mxu0 0
  %328 = vmatpush2.bf16.xpose.msra.mxu0 0
  %329 = vmatprep.subr.bf16.mxu0 0
  %330 = vmatpush2.bf16.xpose.msra.mxu0 0
  %331 = vmatprep.subr.bf16.mxu0 0
  %332 = vmatpush2.bf16.xpose.msra.mxu0 0
  %333 = vmatprep.subr.bf16.mxu0 0
  %334 = vmatpush2.bf16.xpose.msra.mxu0 0
  %335 = vmatprep.mubr.bf16.mxu0 0
  %336 = vmatmul.mubr.bf16.gmra.mxu0 %v111
  %v337 = vpop.f32.mrf.mxu0
  %v338 = vadd.f32 0.0, %v337
  %v339 = vpop.f32.mrf.mxu0
  %v340 = vpop.f32.mrf.mxu0
  %v341 = vadd.f32 0.0, %v340
  %v342 = vpop.f32.mrf.mxu0
  %343 = vmatprep.mubr.bf16.mxu0 0
  %344 = vmatmul.mubr.bf16.gmra.mxu0 %v112
  %v345 = vpop.f32.mrf.mxu0
  %v346 = vadd.f32 0.0, %v345
  %v347 = vpop.f32.mrf.mxu0
  %v348 = vpop.f32.mrf.mxu0
  %v349 = vadd.f32 0.0, %v348
  %v350 = vpop.f32.mrf.mxu0
  %351 = vmatprep.mubr.bf16.mxu0 0
  %352 = vmatmul.mubr.bf16.gmra.mxu0 %v113
  %v353 = vpop.f32.mrf.mxu0
  %v354 = vadd.f32 0.0, %v353
  %v355 = vpop.f32.mrf.mxu0
  %v356 = vpop.f32.mrf.mxu0
  %v357 = vadd.f32 0.0, %v356
  %v358 = vpop.f32.mrf.mxu0
  %359 = vmatprep.mubr.bf16.mxu0 0
  %360 = vmatmul.mubr.bf16.gmra.mxu0 %v114
  %v361 = vpop.f32.mrf.mxu0
  %v362 = vadd.f32 0.0, %v361
  %v363 = vpop.f32.mrf.mxu0
  %v364 = vpop.f32.mrf.mxu0
  %v365 = vadd.f32 0.0, %v364
  %v366 = vpop.f32.mrf.mxu0
  %367 = vdwg.mxu0
  %v384 = vunpack.c.l.b16 %v143
  %v385 = vunpack.c.l.b16 %v144
  %v386 = vunpack.c.l.b16 %v145
  %v387 = vunpack.c.l.b16 %v146
  %v388 = vunpack.c.l.b16 %v147
  %v389 = vunpack.c.l.b16 %v148
  %v390 = vunpack.c.l.b16 %v149
  %v391 = vunpack.c.l.b16 %v150
  %v392 = vunpack.c.l.b16 %v151
  %v393 = vunpack.c.l.b16 %v152
  %v394 = vunpack.c.l.b16 %v153
  %v395 = vunpack.c.l.b16 %v154
  %v396 = vunpack.c.l.b16 %v155
  %v397 = vunpack.c.l.b16 %v156
  %v398 = vunpack.c.l.b16 %v157
  %v399 = vunpack.c.l.b16 %v158
  %v400 = vpack.c.b16 %v385, %v384
  %v401 = vpack.c.b16 %v387, %v386
  %v402 = vpack.c.b16 %v389, %v388
  %v403 = vpack.c.b16 %v391, %v390
  %v404 = vpack.c.b16 %v393, %v392
  %v405 = vpack.c.b16 %v395, %v394
  %v406 = vpack.c.b16 %v397, %v396
  %v407 = vpack.c.b16 %v399, %v398
  %416 = vmatprep.subr.bf16.mxu0 0
  %417 = vmatpush1.bf16.xpose.msra.mxu0 %v407
  %418 = vmatprep.subr.bf16.mxu0 0
  %419 = vmatpush1.bf16.xpose.msra.mxu0 %v406
  %420 = vmatprep.subr.bf16.mxu0 0
  %421 = vmatpush1.bf16.xpose.msra.mxu0 %v405
  %422 = vmatprep.subr.bf16.mxu0 0
  %423 = vmatpush1.bf16.xpose.msra.mxu0 %v404
  %424 = vmatprep.subr.bf16.mxu0 0
  %425 = vmatpush1.bf16.xpose.msra.mxu0 %v403
  %426 = vmatprep.subr.bf16.mxu0 0
  %427 = vmatpush1.bf16.xpose.msra.mxu0 %v402
  %428 = vmatprep.subr.bf16.mxu0 0
  %429 = vmatpush1.bf16.xpose.msra.mxu0 %v401
  %430 = vmatprep.subr.bf16.mxu0 0
  %431 = vmatpush1.bf16.xpose.msra.mxu0 %v400
  %432 = vmatprep.subr.bf16.mxu0 0
  %433 = vmatpush2.bf16.xpose.msra.mxu0 0
  %434 = vmatprep.subr.bf16.mxu0 0
  %435 = vmatpush2.bf16.xpose.msra.mxu0 0
  %436 = vmatprep.subr.bf16.mxu0 0
  %437 = vmatpush2.bf16.xpose.msra.mxu0 0
  %438 = vmatprep.subr.bf16.mxu0 0
  %439 = vmatpush2.bf16.xpose.msra.mxu0 0
  %440 = vmatprep.subr.bf16.mxu0 0
  %441 = vmatpush2.bf16.xpose.msra.mxu0 0
  %442 = vmatprep.subr.bf16.mxu0 0
  %443 = vmatpush2.bf16.xpose.msra.mxu0 0
  %444 = vmatprep.subr.bf16.mxu0 0
  %445 = vmatpush2.bf16.xpose.msra.mxu0 0
  %446 = vmatprep.subr.bf16.mxu0 0
  %447 = vmatpush2.bf16.xpose.msra.mxu0 0
  %448 = vmatprep.mubr.bf16.mxu0 0
  %449 = vmatmul.mubr.bf16.gmra.mxu0 %v115
  %v450 = vpop.f32.mrf.mxu0
  %v451 = vadd.f32 0.0, %v450
  %v452 = vpop.f32.mrf.mxu0
  %v453 = vpop.f32.mrf.mxu0
  %v454 = vadd.f32 0.0, %v453
  %v455 = vpop.f32.mrf.mxu0
  %456 = vmatprep.mubr.bf16.mxu0 0
  %457 = vmatmul.mubr.bf16.gmra.mxu0 %v116
  %v458 = vpop.f32.mrf.mxu0
  %v459 = vadd.f32 0.0, %v458
  %v460 = vpop.f32.mrf.mxu0
  %v461 = vpop.f32.mrf.mxu0
  %v462 = vadd.f32 0.0, %v461
  %v463 = vpop.f32.mrf.mxu0
  %464 = vmatprep.mubr.bf16.mxu0 0
  %465 = vmatmul.mubr.bf16.gmra.mxu0 %v117
  %v466 = vpop.f32.mrf.mxu0
  %v467 = vadd.f32 0.0, %v466
  %v468 = vpop.f32.mrf.mxu0
  %v469 = vpop.f32.mrf.mxu0
  %v470 = vadd.f32 0.0, %v469
  %v471 = vpop.f32.mrf.mxu0
  %472 = vmatprep.mubr.bf16.mxu0 0
  %473 = vmatmul.mubr.bf16.gmra.mxu0 %v118
  %v474 = vpop.f32.mrf.mxu0
  %v475 = vadd.f32 0.0, %v474
  %v476 = vpop.f32.mrf.mxu0
  %v477 = vpop.f32.mrf.mxu0
  %v478 = vadd.f32 0.0, %v477
  %v479 = vpop.f32.mrf.mxu0
  %480 = vdwg.mxu0
  %v497 = vunpack.c.l.b16 %v159
  %v498 = vunpack.c.l.b16 %v160
  %v499 = vunpack.c.l.b16 %v161
  %v500 = vunpack.c.l.b16 %v162
  %v501 = vunpack.c.l.b16 %v163
  %v502 = vunpack.c.l.b16 %v164
  %v503 = vunpack.c.l.b16 %v165
  %v504 = vunpack.c.l.b16 %v166
  %v505 = vunpack.c.l.b16 %v167
  %v506 = vunpack.c.l.b16 %v168
  %v507 = vunpack.c.l.b16 %v169
  %v508 = vunpack.c.l.b16 %v170
  %v509 = vunpack.c.l.b16 %v171
  %v510 = vunpack.c.l.b16 %v172
  %v511 = vunpack.c.l.b16 %v173
  %v512 = vunpack.c.l.b16 %v174
  %v513 = vpack.c.b16 %v498, %v497
  %v514 = vpack.c.b16 %v500, %v499
  %v515 = vpack.c.b16 %v502, %v501
  %v516 = vpack.c.b16 %v504, %v503
  %v517 = vpack.c.b16 %v506, %v505
  %v518 = vpack.c.b16 %v508, %v507
  %v519 = vpack.c.b16 %v510, %v509
  %v520 = vpack.c.b16 %v512, %v511
  %529 = vmatprep.subr.bf16.mxu0 0
  %530 = vmatpush1.bf16.xpose.msra.mxu0 %v520
  %531 = vmatprep.subr.bf16.mxu0 0
  %532 = vmatpush1.bf16.xpose.msra.mxu0 %v519
  %533 = vmatprep.subr.bf16.mxu0 0
  %534 = vmatpush1.bf16.xpose.msra.mxu0 %v518
  %535 = vmatprep.subr.bf16.mxu0 0
  %536 = vmatpush1.bf16.xpose.msra.mxu0 %v517
  %537 = vmatprep.subr.bf16.mxu0 0
  %538 = vmatpush1.bf16.xpose.msra.mxu0 %v516
  %539 = vmatprep.subr.bf16.mxu0 0
  %540 = vmatpush1.bf16.xpose.msra.mxu0 %v515
  %541 = vmatprep.subr.bf16.mxu0 0
  %542 = vmatpush1.bf16.xpose.msra.mxu0 %v514
  %543 = vmatprep.subr.bf16.mxu0 0
  %544 = vmatpush1.bf16.xpose.msra.mxu0 %v513
  %545 = vmatprep.subr.bf16.mxu0 0
  %546 = vmatpush2.bf16.xpose.msra.mxu0 0
  %547 = vmatprep.subr.bf16.mxu0 0
  %548 = vmatpush2.bf16.xpose.msra.mxu0 0
  %549 = vmatprep.subr.bf16.mxu0 0
  %550 = vmatpush2.bf16.xpose.msra.mxu0 0
  %551 = vmatprep.subr.bf16.mxu0 0
  %552 = vmatpush2.bf16.xpose.msra.mxu0 0
  %553 = vmatprep.subr.bf16.mxu0 0
  %554 = vmatpush2.bf16.xpose.msra.mxu0 0
  %555 = vmatprep.subr.bf16.mxu0 0
  %556 = vmatpush2.bf16.xpose.msra.mxu0 0
  %557 = vmatprep.subr.bf16.mxu0 0
  %558 = vmatpush2.bf16.xpose.msra.mxu0 0
  %559 = vmatprep.subr.bf16.mxu0 0
  %560 = vmatpush2.bf16.xpose.msra.mxu0 0
  %561 = vmatprep.mubr.bf16.mxu0 0
  %562 = vmatmul.mubr.bf16.gmra.mxu0 %v119
  %v563 = vpop.f32.mrf.mxu0
  %v564 = vadd.f32 0.0, %v563
  %v565 = vpop.f32.mrf.mxu0
  %v566 = vpop.f32.mrf.mxu0
  %v567 = vadd.f32 0.0, %v566
  %v568 = vpop.f32.mrf.mxu0
  %569 = vmatprep.mubr.bf16.mxu0 0
  %570 = vmatmul.mubr.bf16.gmra.mxu0 %v120
  %v571 = vpop.f32.mrf.mxu0
  %v572 = vadd.f32 0.0, %v571
  %v573 = vpop.f32.mrf.mxu0
  %v574 = vpop.f32.mrf.mxu0
  %v575 = vadd.f32 0.0, %v574
  %v576 = vpop.f32.mrf.mxu0
  %577 = vmatprep.mubr.bf16.mxu0 0
  %578 = vmatmul.mubr.bf16.gmra.mxu0 %v121
  %v579 = vpop.f32.mrf.mxu0
  %v580 = vadd.f32 0.0, %v579
  %v581 = vpop.f32.mrf.mxu0
  %v582 = vpop.f32.mrf.mxu0
  %v583 = vadd.f32 0.0, %v582
  %v584 = vpop.f32.mrf.mxu0
  %585 = vmatprep.mubr.bf16.mxu0 0
  %586 = vmatmul.mubr.bf16.gmra.mxu0 %v122
  %v587 = vpop.f32.mrf.mxu0
  %v588 = vadd.f32 0.0, %v587
  %v589 = vpop.f32.mrf.mxu0
  %v590 = vpop.f32.mrf.mxu0
  %v591 = vadd.f32 0.0, %v590
  %v592 = vpop.f32.mrf.mxu0
  %593 = vdwg.mxu0
  %v610 = vunpack.c.l.b16 %v175
  %v611 = vunpack.c.l.b16 %v176
  %v612 = vunpack.c.l.b16 %v177
  %v613 = vunpack.c.l.b16 %v178
  %v614 = vunpack.c.l.b16 %v179
  %v615 = vunpack.c.l.b16 %v180
  %v616 = vunpack.c.l.b16 %v181
  %v617 = vunpack.c.l.b16 %v182
  %v618 = vunpack.c.l.b16 %v183
  %v619 = vunpack.c.l.b16 %v184
  %v620 = vunpack.c.l.b16 %v185
  %v621 = vunpack.c.l.b16 %v186
  %v622 = vunpack.c.l.b16 %v187
  %v623 = vunpack.c.l.b16 %v188
  %v624 = vunpack.c.l.b16 %v189
  %v625 = vunpack.c.l.b16 %v190
  %v626 = vpack.c.b16 %v611, %v610
  %v627 = vpack.c.b16 %v613, %v612
  %v628 = vpack.c.b16 %v615, %v614
  %v629 = vpack.c.b16 %v617, %v616
  %v630 = vpack.c.b16 %v619, %v618
  %v631 = vpack.c.b16 %v621, %v620
  %v632 = vpack.c.b16 %v623, %v622
  %v633 = vpack.c.b16 %v625, %v624
  %642 = vmatprep.subr.bf16.mxu0 0
  %643 = vmatpush1.bf16.xpose.msra.mxu0 %v633
  %644 = vmatprep.subr.bf16.mxu0 0
  %645 = vmatpush1.bf16.xpose.msra.mxu0 %v632
  %646 = vmatprep.subr.bf16.mxu0 0
  %647 = vmatpush1.bf16.xpose.msra.mxu0 %v631
  %648 = vmatprep.subr.bf16.mxu0 0
  %649 = vmatpush1.bf16.xpose.msra.mxu0 %v630
  %650 = vmatprep.subr.bf16.mxu0 0
  %651 = vmatpush1.bf16.xpose.msra.mxu0 %v629
  %652 = vmatprep.subr.bf16.mxu0 0
  %653 = vmatpush1.bf16.xpose.msra.mxu0 %v628
  %654 = vmatprep.subr.bf16.mxu0 0
  %655 = vmatpush1.bf16.xpose.msra.mxu0 %v627
  %656 = vmatprep.subr.bf16.mxu0 0
  %657 = vmatpush1.bf16.xpose.msra.mxu0 %v626
  %658 = vmatprep.subr.bf16.mxu0 0
  %659 = vmatpush2.bf16.xpose.msra.mxu0 0
  %660 = vmatprep.subr.bf16.mxu0 0
  %661 = vmatpush2.bf16.xpose.msra.mxu0 0
  %662 = vmatprep.subr.bf16.mxu0 0
  %663 = vmatpush2.bf16.xpose.msra.mxu0 0
  %664 = vmatprep.subr.bf16.mxu0 0
  %665 = vmatpush2.bf16.xpose.msra.mxu0 0
  %666 = vmatprep.subr.bf16.mxu0 0
  %667 = vmatpush2.bf16.xpose.msra.mxu0 0
  %668 = vmatprep.subr.bf16.mxu0 0
  %669 = vmatpush2.bf16.xpose.msra.mxu0 0
  %670 = vmatprep.subr.bf16.mxu0 0
  %671 = vmatpush2.bf16.xpose.msra.mxu0 0
  %672 = vmatprep.subr.bf16.mxu0 0
  %673 = vmatpush2.bf16.xpose.msra.mxu0 0
  %674 = vmatprep.mubr.bf16.mxu0 0
  %675 = vmatmul.mubr.bf16.gmra.mxu0 %v123
  %v676 = vpop.f32.mrf.mxu0
  %v677 = vadd.f32 0.0, %v676
  %v678 = vpop.f32.mrf.mxu0
  %v679 = vpop.f32.mrf.mxu0
  %v680 = vadd.f32 0.0, %v679
  %v681 = vpop.f32.mrf.mxu0
  %682 = vmatprep.mubr.bf16.mxu0 0
  %683 = vmatmul.mubr.bf16.gmra.mxu0 %v124
  %v684 = vpop.f32.mrf.mxu0
  %v685 = vadd.f32 0.0, %v684
  %v686 = vpop.f32.mrf.mxu0
  %v687 = vpop.f32.mrf.mxu0
  %v688 = vadd.f32 0.0, %v687
  %v689 = vpop.f32.mrf.mxu0
  %690 = vmatprep.mubr.bf16.mxu0 0
  %691 = vmatmul.mubr.bf16.gmra.mxu0 %v125
  %v692 = vpop.f32.mrf.mxu0
  %v693 = vadd.f32 0.0, %v692
  %v694 = vpop.f32.mrf.mxu0
  %v695 = vpop.f32.mrf.mxu0
  %v696 = vadd.f32 0.0, %v695
  %v697 = vpop.f32.mrf.mxu0
  %698 = vmatprep.mubr.bf16.mxu0 0
  %699 = vmatmul.mubr.bf16.gmra.mxu0 %v126
  %v700 = vpop.f32.mrf.mxu0
  %v701 = vadd.f32 0.0, %v700
  %v702 = vpop.f32.mrf.mxu0
  %v703 = vpop.f32.mrf.mxu0
  %v704 = vadd.f32 0.0, %v703
  %v705 = vpop.f32.mrf.mxu0
  %706 = vdwg.mxu0
  %v707 = vlaneseq
  %v708 = vand.u32 %v707, 127
  %vm709 = vcmp.lt.s32.totalorder %v708, 64
  %v710 = vsel %vm709, %v338, -1e+30
  %v711 = vsel %vm709, %v341, -1e+30
  %v712 = vsel %vm709, %v346, -1e+30
  %v713 = vsel %vm709, %v349, -1e+30
  %v714 = vsel %vm709, %v354, -1e+30
  %v715 = vsel %vm709, %v357, -1e+30
  %v716 = vsel %vm709, %v362, -1e+30
  %v717 = vsel %vm709, %v365, -1e+30
  %v718 = vsel %vm709, %v451, -1e+30
  %v719 = vsel %vm709, %v454, -1e+30
  %v720 = vsel %vm709, %v459, -1e+30
  %v721 = vsel %vm709, %v462, -1e+30
  %v722 = vsel %vm709, %v467, -1e+30
  %v723 = vsel %vm709, %v470, -1e+30
  %v724 = vsel %vm709, %v475, -1e+30
  %v725 = vsel %vm709, %v478, -1e+30
  %v726 = vsel %vm709, %v564, -1e+30
  %v727 = vsel %vm709, %v567, -1e+30
  %v728 = vsel %vm709, %v572, -1e+30
  %v729 = vsel %vm709, %v575, -1e+30
  %v730 = vsel %vm709, %v580, -1e+30
  %v731 = vsel %vm709, %v583, -1e+30
  %v732 = vsel %vm709, %v588, -1e+30
  %v733 = vsel %vm709, %v591, -1e+30
  %v734 = vsel %vm709, %v677, -1e+30
  %v735 = vsel %vm709, %v680, -1e+30
  %v736 = vsel %vm709, %v685, -1e+30
  %v737 = vsel %vm709, %v688, -1e+30
  %v738 = vsel %vm709, %v693, -1e+30
  %v739 = vsel %vm709, %v696, -1e+30
  %v740 = vsel %vm709, %v701, -1e+30
  %v741 = vsel %vm709, %v704, -1e+30
  %742 = vmax.xlane.f32.xlu0 %v710
  %v743 = vpop.xlane.xlu0 %742
  %744 = vmax.xlane.f32.xlu0 %v711
  %v745 = vpop.xlane.xlu0 %744
  %746 = vmax.xlane.f32.xlu0 %v712
  %v747 = vpop.xlane.xlu0 %746
  %748 = vmax.xlane.f32.xlu0 %v713
  %v749 = vpop.xlane.xlu0 %748
  %750 = vmax.xlane.f32.xlu0 %v714
  %v751 = vpop.xlane.xlu0 %750
  %752 = vmax.xlane.f32.xlu0 %v715
  %v753 = vpop.xlane.xlu0 %752
  %754 = vmax.xlane.f32.xlu0 %v716
  %v755 = vpop.xlane.xlu0 %754
  %756 = vmax.xlane.f32.xlu0 %v717
  %v757 = vpop.xlane.xlu0 %756
  %758 = vmax.xlane.f32.xlu0 %v718
  %v759 = vpop.xlane.xlu0 %758
  %760 = vmax.xlane.f32.xlu0 %v719
  %v761 = vpop.xlane.xlu0 %760
  %762 = vmax.xlane.f32.xlu0 %v720
  %v763 = vpop.xlane.xlu0 %762
  %764 = vmax.xlane.f32.xlu0 %v721
  %v765 = vpop.xlane.xlu0 %764
  %766 = vmax.xlane.f32.xlu0 %v722
  %v767 = vpop.xlane.xlu0 %766
  %768 = vmax.xlane.f32.xlu0 %v723
  %v769 = vpop.xlane.xlu0 %768
  %770 = vmax.xlane.f32.xlu0 %v724
  %v771 = vpop.xlane.xlu0 %770
  %772 = vmax.xlane.f32.xlu0 %v725
  %v773 = vpop.xlane.xlu0 %772
  %774 = vmax.xlane.f32.xlu0 %v726
  %v775 = vpop.xlane.xlu0 %774
  %776 = vmax.xlane.f32.xlu0 %v727
  %v777 = vpop.xlane.xlu0 %776
  %778 = vmax.xlane.f32.xlu0 %v728
  %v779 = vpop.xlane.xlu0 %778
  %780 = vmax.xlane.f32.xlu0 %v729
  %v781 = vpop.xlane.xlu0 %780
  %782 = vmax.xlane.f32.xlu0 %v730
  %v783 = vpop.xlane.xlu0 %782
  %784 = vmax.xlane.f32.xlu0 %v731
  %v785 = vpop.xlane.xlu0 %784
  %786 = vmax.xlane.f32.xlu0 %v732
  %v787 = vpop.xlane.xlu0 %786
  %788 = vmax.xlane.f32.xlu0 %v733
  %v789 = vpop.xlane.xlu0 %788
  %790 = vmax.xlane.f32.xlu0 %v734
  %v791 = vpop.xlane.xlu0 %790
  %792 = vmax.xlane.f32.xlu0 %v735
  %v793 = vpop.xlane.xlu0 %792
  %794 = vmax.xlane.f32.xlu0 %v736
  %v795 = vpop.xlane.xlu0 %794
  %796 = vmax.xlane.f32.xlu0 %v737
  %v797 = vpop.xlane.xlu0 %796
  %798 = vmax.xlane.f32.xlu0 %v738
  %v799 = vpop.xlane.xlu0 %798
  %800 = vmax.xlane.f32.xlu0 %v739
  %v801 = vpop.xlane.xlu0 %800
  %802 = vmax.xlane.f32.xlu0 %v740
  %v803 = vpop.xlane.xlu0 %802
  %804 = vmax.xlane.f32.xlu0 %v741
  %v805 = vpop.xlane.xlu0 %804
  %v806 = vsub.f32 %v710, %v743
  %v807 = vsub.f32 %v711, %v745
  %v808 = vsub.f32 %v712, %v747
  %v809 = vsub.f32 %v713, %v749
  %v810 = vsub.f32 %v714, %v751
  %v811 = vsub.f32 %v715, %v753
  %v812 = vsub.f32 %v716, %v755
  %v813 = vsub.f32 %v717, %v757
  %v814 = vsub.f32 %v718, %v759
  %v815 = vsub.f32 %v719, %v761
  %v816 = vsub.f32 %v720, %v763
  %v817 = vsub.f32 %v721, %v765
  %v818 = vsub.f32 %v722, %v767
  %v819 = vsub.f32 %v723, %v769
  %v820 = vsub.f32 %v724, %v771
  %v821 = vsub.f32 %v725, %v773
  %v822 = vsub.f32 %v726, %v775
  %v823 = vsub.f32 %v727, %v777
  %v824 = vsub.f32 %v728, %v779
  %v825 = vsub.f32 %v729, %v781
  %v826 = vsub.f32 %v730, %v783
  %v827 = vsub.f32 %v731, %v785
  %v828 = vsub.f32 %v732, %v787
  %v829 = vsub.f32 %v733, %v789
  %v830 = vsub.f32 %v734, %v791
  %v831 = vsub.f32 %v735, %v793
  %v832 = vsub.f32 %v736, %v795
  %v833 = vsub.f32 %v737, %v797
  %v834 = vsub.f32 %v738, %v799
  %v835 = vsub.f32 %v739, %v801
  %v836 = vsub.f32 %v740, %v803
  %v837 = vsub.f32 %v741, %v805
  %v838 = vmul.f32 %v806, 1.442695
  %v839 = vpow.pop %v838
  %v840 = vmul.f32 %v807, 1.442695
  %v841 = vpow.pop %v840
  %v842 = vmul.f32 %v808, 1.442695
  %v843 = vpow.pop %v842
  %v844 = vmul.f32 %v809, 1.442695
  %v845 = vpow.pop %v844
  %v846 = vmul.f32 %v810, 1.442695
  %v847 = vpow.pop %v846
  %v848 = vmul.f32 %v811, 1.442695
  %v849 = vpow.pop %v848
  %v850 = vmul.f32 %v812, 1.442695
  %v851 = vpow.pop %v850
  %v852 = vmul.f32 %v813, 1.442695
  %v853 = vpow.pop %v852
  %v854 = vmul.f32 %v814, 1.442695
  %v855 = vpow.pop %v854
  %v856 = vmul.f32 %v815, 1.442695
  %v857 = vpow.pop %v856
  %v858 = vmul.f32 %v816, 1.442695
  %v859 = vpow.pop %v858
  %v860 = vmul.f32 %v817, 1.442695
  %v861 = vpow.pop %v860
  %v862 = vmul.f32 %v818, 1.442695
  %v863 = vpow.pop %v862
  %v864 = vmul.f32 %v819, 1.442695
  %v865 = vpow.pop %v864
  %v866 = vmul.f32 %v820, 1.442695
  %v867 = vpow.pop %v866
  %v868 = vmul.f32 %v821, 1.442695
  %v869 = vpow.pop %v868
  %v870 = vmul.f32 %v822, 1.442695
  %v871 = vpow.pop %v870
  %v872 = vmul.f32 %v823, 1.442695
  %v873 = vpow.pop %v872
  %v874 = vmul.f32 %v824, 1.442695
  %v875 = vpow.pop %v874
  %v876 = vmul.f32 %v825, 1.442695
  %v877 = vpow.pop %v876
  %v878 = vmul.f32 %v826, 1.442695
  %v879 = vpow.pop %v878
  %v880 = vmul.f32 %v827, 1.442695
  %v881 = vpow.pop %v880
  %v882 = vmul.f32 %v828, 1.442695
  %v883 = vpow.pop %v882
  %v884 = vmul.f32 %v829, 1.442695
  %v885 = vpow.pop %v884
  %v886 = vmul.f32 %v830, 1.442695
  %v887 = vpow.pop %v886
  %v888 = vmul.f32 %v831, 1.442695
  %v889 = vpow.pop %v888
  %v890 = vmul.f32 %v832, 1.442695
  %v891 = vpow.pop %v890
  %v892 = vmul.f32 %v833, 1.442695
  %v893 = vpow.pop %v892
  %v894 = vmul.f32 %v834, 1.442695
  %v895 = vpow.pop %v894
  %v896 = vmul.f32 %v835, 1.442695
  %v897 = vpow.pop %v896
  %v898 = vmul.f32 %v836, 1.442695
  %v899 = vpow.pop %v898
  %v900 = vmul.f32 %v837, 1.442695
  %v901 = vpow.pop %v900
  %902 = vadd.xlane.f32.xlu0 %v839
  %v903 = vpop.xlane.xlu0 %902
  %904 = vadd.xlane.f32.xlu0 %v841
  %v905 = vpop.xlane.xlu0 %904
  %906 = vadd.xlane.f32.xlu0 %v843
  %v907 = vpop.xlane.xlu0 %906
  %908 = vadd.xlane.f32.xlu0 %v845
  %v909 = vpop.xlane.xlu0 %908
  %910 = vadd.xlane.f32.xlu0 %v847
  %v911 = vpop.xlane.xlu0 %910
  %912 = vadd.xlane.f32.xlu0 %v849
  %v913 = vpop.xlane.xlu0 %912
  %914 = vadd.xlane.f32.xlu0 %v851
  %v915 = vpop.xlane.xlu0 %914
  %916 = vadd.xlane.f32.xlu0 %v853
  %v917 = vpop.xlane.xlu0 %916
  %918 = vadd.xlane.f32.xlu0 %v855
  %v919 = vpop.xlane.xlu0 %918
  %920 = vadd.xlane.f32.xlu0 %v857
  %v921 = vpop.xlane.xlu0 %920
  %922 = vadd.xlane.f32.xlu0 %v859
  %v923 = vpop.xlane.xlu0 %922
  %924 = vadd.xlane.f32.xlu0 %v861
  %v925 = vpop.xlane.xlu0 %924
  %926 = vadd.xlane.f32.xlu0 %v863
  %v927 = vpop.xlane.xlu0 %926
  %928 = vadd.xlane.f32.xlu0 %v865
  %v929 = vpop.xlane.xlu0 %928
  %930 = vadd.xlane.f32.xlu0 %v867
  %v931 = vpop.xlane.xlu0 %930
  %932 = vadd.xlane.f32.xlu0 %v869
  %v933 = vpop.xlane.xlu0 %932
  %934 = vadd.xlane.f32.xlu0 %v871
  %v935 = vpop.xlane.xlu0 %934
  %936 = vadd.xlane.f32.xlu0 %v873
  %v937 = vpop.xlane.xlu0 %936
  %938 = vadd.xlane.f32.xlu0 %v875
  %v939 = vpop.xlane.xlu0 %938
  %940 = vadd.xlane.f32.xlu0 %v877
  %v941 = vpop.xlane.xlu0 %940
  %942 = vadd.xlane.f32.xlu0 %v879
  %v943 = vpop.xlane.xlu0 %942
  %944 = vadd.xlane.f32.xlu0 %v881
  %v945 = vpop.xlane.xlu0 %944
  %946 = vadd.xlane.f32.xlu0 %v883
  %v947 = vpop.xlane.xlu0 %946
  %948 = vadd.xlane.f32.xlu0 %v885
  %v949 = vpop.xlane.xlu0 %948
  %950 = vadd.xlane.f32.xlu0 %v887
  %v951 = vpop.xlane.xlu0 %950
  %952 = vadd.xlane.f32.xlu0 %v889
  %v953 = vpop.xlane.xlu0 %952
  %954 = vadd.xlane.f32.xlu0 %v891
  %v955 = vpop.xlane.xlu0 %954
  %956 = vadd.xlane.f32.xlu0 %v893
  %v957 = vpop.xlane.xlu0 %956
  %958 = vadd.xlane.f32.xlu0 %v895
  %v959 = vpop.xlane.xlu0 %958
  %960 = vadd.xlane.f32.xlu0 %v897
  %v961 = vpop.xlane.xlu0 %960
  %962 = vadd.xlane.f32.xlu0 %v899
  %v963 = vpop.xlane.xlu0 %962
  %964 = vadd.xlane.f32.xlu0 %v901
  %v965 = vpop.xlane.xlu0 %964
  %v966 = vrcp.pop %v903
  %v967 = vrcp.pop %v905
  %v968 = vrcp.pop %v907
  %v969 = vrcp.pop %v909
  %v970 = vrcp.pop %v911
  %v971 = vrcp.pop %v913
  %v972 = vrcp.pop %v915
  %v973 = vrcp.pop %v917
  %v974 = vrcp.pop %v919
  %v975 = vrcp.pop %v921
  %v976 = vrcp.pop %v923
  %v977 = vrcp.pop %v925
  %v978 = vrcp.pop %v927
  %v979 = vrcp.pop %v929
  %v980 = vrcp.pop %v931
  %v981 = vrcp.pop %v933
  %v982 = vrcp.pop %v935
  %v983 = vrcp.pop %v937
  %v984 = vrcp.pop %v939
  %v985 = vrcp.pop %v941
  %v986 = vrcp.pop %v943
  %v987 = vrcp.pop %v945
  %v988 = vrcp.pop %v947
  %v989 = vrcp.pop %v949
  %v990 = vrcp.pop %v951
  %v991 = vrcp.pop %v953
  %v992 = vrcp.pop %v955
  %v993 = vrcp.pop %v957
  %v994 = vrcp.pop %v959
  %v995 = vrcp.pop %v961
  %v996 = vrcp.pop %v963
  %v997 = vrcp.pop %v965
  %v998 = vmul.f32 %v839, %v966
  %v999 = vmul.f32 %v841, %v967
  %v1000 = vmul.f32 %v843, %v968
  %v1001 = vmul.f32 %v845, %v969
  %v1002 = vmul.f32 %v847, %v970
  %v1003 = vmul.f32 %v849, %v971
  %v1004 = vmul.f32 %v851, %v972
  %v1005 = vmul.f32 %v853, %v973
  %v1006 = vmul.f32 %v855, %v974
  %v1007 = vmul.f32 %v857, %v975
  %v1008 = vmul.f32 %v859, %v976
  %v1009 = vmul.f32 %v861, %v977
  %v1010 = vmul.f32 %v863, %v978
  %v1011 = vmul.f32 %v865, %v979
  %v1012 = vmul.f32 %v867, %v980
  %v1013 = vmul.f32 %v869, %v981
  %v1014 = vmul.f32 %v871, %v982
  %v1015 = vmul.f32 %v873, %v983
  %v1016 = vmul.f32 %v875, %v984
  %v1017 = vmul.f32 %v877, %v985
  %v1018 = vmul.f32 %v879, %v986
  %v1019 = vmul.f32 %v881, %v987
  %v1020 = vmul.f32 %v883, %v988
  %v1021 = vmul.f32 %v885, %v989
  %v1022 = vmul.f32 %v887, %v990
  %v1023 = vmul.f32 %v889, %v991
  %v1024 = vmul.f32 %v891, %v992
  %v1025 = vmul.f32 %v893, %v993
  %v1026 = vmul.f32 %v895, %v994
  %v1027 = vmul.f32 %v897, %v995
  %v1028 = vmul.f32 %v899, %v996
  %v1029 = vmul.f32 %v901, %v997
  %v1030 = vpack.c.bf16 %v999, %v998
  %v1031 = vpack.c.bf16 %v1001, %v1000
  %v1032 = vpack.c.bf16 %v1003, %v1002
  %v1033 = vpack.c.bf16 %v1005, %v1004
  %v1034 = vpack.c.bf16 %v1007, %v1006
  %v1035 = vpack.c.bf16 %v1009, %v1008
  %v1036 = vpack.c.bf16 %v1011, %v1010
  %v1037 = vpack.c.bf16 %v1013, %v1012
  %v1038 = vpack.c.bf16 %v1015, %v1014
  %v1039 = vpack.c.bf16 %v1017, %v1016
  %v1040 = vpack.c.bf16 %v1019, %v1018
  %v1041 = vpack.c.bf16 %v1021, %v1020
  %v1042 = vpack.c.bf16 %v1023, %v1022
  %v1043 = vpack.c.bf16 %v1025, %v1024
  %v1044 = vpack.c.bf16 %v1027, %v1026
  %v1045 = vpack.c.bf16 %v1029, %v1028
  %v1062 = vunpack.c.l.b16 %v191
  %v1063 = vunpack.c.l.b16 %v192
  %v1064 = vunpack.c.l.b16 %v193
  %v1065 = vunpack.c.l.b16 %v194
  %v1066 = vunpack.c.l.b16 %v195
  %v1067 = vunpack.c.l.b16 %v196
  %v1068 = vunpack.c.l.b16 %v197
  %v1069 = vunpack.c.l.b16 %v198
  %v1070 = vunpack.c.l.b16 %v199
  %v1071 = vunpack.c.l.b16 %v200
  %v1072 = vunpack.c.l.b16 %v201
  %v1073 = vunpack.c.l.b16 %v202
  %v1074 = vunpack.c.l.b16 %v203
  %v1075 = vunpack.c.l.b16 %v204
  %v1076 = vunpack.c.l.b16 %v205
  %v1077 = vunpack.c.l.b16 %v206
  %v1078 = vpack.c.b16 %v1063, %v1062
  %v1079 = vpack.c.b16 %v1065, %v1064
  %v1080 = vpack.c.b16 %v1067, %v1066
  %v1081 = vpack.c.b16 %v1069, %v1068
  %v1082 = vpack.c.b16 %v1071, %v1070
  %v1083 = vpack.c.b16 %v1073, %v1072
  %v1084 = vpack.c.b16 %v1075, %v1074
  %v1085 = vpack.c.b16 %v1077, %v1076
  %1094 = vmatprep.subr.bf16.mxu0 0
  %1095 = vmatpush1.bf16.msra.mxu0 %v1085
  %1096 = vmatprep.subr.bf16.mxu0 0
  %1097 = vmatpush1.bf16.msra.mxu0 %v1084
  %1098 = vmatprep.subr.bf16.mxu0 0
  %1099 = vmatpush1.bf16.msra.mxu0 %v1083
  %1100 = vmatprep.subr.bf16.mxu0 0
  %1101 = vmatpush1.bf16.msra.mxu0 %v1082
  %1102 = vmatprep.subr.bf16.mxu0 0
  %1103 = vmatpush1.bf16.msra.mxu0 %v1081
  %1104 = vmatprep.subr.bf16.mxu0 0
  %1105 = vmatpush1.bf16.msra.mxu0 %v1080
  %1106 = vmatprep.subr.bf16.mxu0 0
  %1107 = vmatpush1.bf16.msra.mxu0 %v1079
  %1108 = vmatprep.subr.bf16.mxu0 0
  %1109 = vmatpush1.bf16.msra.mxu0 %v1078
  %1110 = vmatprep.subr.bf16.mxu0 0
  %1111 = vmatpush2.bf16.msra.mxu0 0
  %1112 = vmatprep.subr.bf16.mxu0 0
  %1113 = vmatpush2.bf16.msra.mxu0 0
  %1114 = vmatprep.subr.bf16.mxu0 0
  %1115 = vmatpush2.bf16.msra.mxu0 0
  %1116 = vmatprep.subr.bf16.mxu0 0
  %1117 = vmatpush2.bf16.msra.mxu0 0
  %1118 = vmatprep.subr.bf16.mxu0 0
  %1119 = vmatpush2.bf16.msra.mxu0 0
  %1120 = vmatprep.subr.bf16.mxu0 0
  %1121 = vmatpush2.bf16.msra.mxu0 0
  %1122 = vmatprep.subr.bf16.mxu0 0
  %1123 = vmatpush2.bf16.msra.mxu0 0
  %1124 = vmatprep.subr.bf16.mxu0 0
  %1125 = vmatpush2.bf16.msra.mxu0 0
  %1126 = vmatprep.mubr.bf16.mxu0 0
  %1127 = vmatmul.mubr.bf16.gmra.mxu0 %v1030
  %v1128 = vpop.f32.mrf.mxu0
  %v1129 = vadd.f32 0.0, %v1128
  %v1130 = vpop.f32.mrf.mxu0
  %v1131 = vpop.f32.mrf.mxu0
  %v1132 = vadd.f32 0.0, %v1131
  %v1133 = vpop.f32.mrf.mxu0
  %1134 = vmatprep.mubr.bf16.mxu0 0
  %1135 = vmatmul.mubr.bf16.gmra.mxu0 %v1031
  %v1136 = vpop.f32.mrf.mxu0
  %v1137 = vadd.f32 0.0, %v1136
  %v1138 = vpop.f32.mrf.mxu0
  %v1139 = vpop.f32.mrf.mxu0
  %v1140 = vadd.f32 0.0, %v1139
  %v1141 = vpop.f32.mrf.mxu0
  %1142 = vmatprep.mubr.bf16.mxu0 0
  %1143 = vmatmul.mubr.bf16.gmra.mxu0 %v1032
  %v1144 = vpop.f32.mrf.mxu0
  %v1145 = vadd.f32 0.0, %v1144
  %v1146 = vpop.f32.mrf.mxu0
  %v1147 = vpop.f32.mrf.mxu0
  %v1148 = vadd.f32 0.0, %v1147
  %v1149 = vpop.f32.mrf.mxu0
  %1150 = vmatprep.mubr.bf16.mxu0 0
  %1151 = vmatmul.mubr.bf16.gmra.mxu0 %v1033
  %v1152 = vpop.f32.mrf.mxu0
  %v1153 = vadd.f32 0.0, %v1152
  %v1154 = vpop.f32.mrf.mxu0
  %v1155 = vpop.f32.mrf.mxu0
  %v1156 = vadd.f32 0.0, %v1155
  %v1157 = vpop.f32.mrf.mxu0
  %1158 = vdwg.mxu0
  %v1175 = vunpack.c.l.b16 %v207
  %v1176 = vunpack.c.l.b16 %v208
  %v1177 = vunpack.c.l.b16 %v209
  %v1178 = vunpack.c.l.b16 %v210
  %v1179 = vunpack.c.l.b16 %v211
  %v1180 = vunpack.c.l.b16 %v212
  %v1181 = vunpack.c.l.b16 %v213
  %v1182 = vunpack.c.l.b16 %v214
  %v1183 = vunpack.c.l.b16 %v215
  %v1184 = vunpack.c.l.b16 %v216
  %v1185 = vunpack.c.l.b16 %v217
  %v1186 = vunpack.c.l.b16 %v218
  %v1187 = vunpack.c.l.b16 %v219
  %v1188 = vunpack.c.l.b16 %v220
  %v1189 = vunpack.c.l.b16 %v221
  %v1190 = vunpack.c.l.b16 %v222
  %v1191 = vpack.c.b16 %v1176, %v1175
  %v1192 = vpack.c.b16 %v1178, %v1177
  %v1193 = vpack.c.b16 %v1180, %v1179
  %v1194 = vpack.c.b16 %v1182, %v1181
  %v1195 = vpack.c.b16 %v1184, %v1183
  %v1196 = vpack.c.b16 %v1186, %v1185
  %v1197 = vpack.c.b16 %v1188, %v1187
  %v1198 = vpack.c.b16 %v1190, %v1189
  %1207 = vmatprep.subr.bf16.mxu0 0
  %1208 = vmatpush1.bf16.msra.mxu0 %v1198
  %1209 = vmatprep.subr.bf16.mxu0 0
  %1210 = vmatpush1.bf16.msra.mxu0 %v1197
  %1211 = vmatprep.subr.bf16.mxu0 0
  %1212 = vmatpush1.bf16.msra.mxu0 %v1196
  %1213 = vmatprep.subr.bf16.mxu0 0
  %1214 = vmatpush1.bf16.msra.mxu0 %v1195
  %1215 = vmatprep.subr.bf16.mxu0 0
  %1216 = vmatpush1.bf16.msra.mxu0 %v1194
  %1217 = vmatprep.subr.bf16.mxu0 0
  %1218 = vmatpush1.bf16.msra.mxu0 %v1193
  %1219 = vmatprep.subr.bf16.mxu0 0
  %1220 = vmatpush1.bf16.msra.mxu0 %v1192
  %1221 = vmatprep.subr.bf16.mxu0 0
  %1222 = vmatpush1.bf16.msra.mxu0 %v1191
  %1223 = vmatprep.subr.bf16.mxu0 0
  %1224 = vmatpush2.bf16.msra.mxu0 0
  %1225 = vmatprep.subr.bf16.mxu0 0
  %1226 = vmatpush2.bf16.msra.mxu0 0
  %1227 = vmatprep.subr.bf16.mxu0 0
  %1228 = vmatpush2.bf16.msra.mxu0 0
  %1229 = vmatprep.subr.bf16.mxu0 0
  %1230 = vmatpush2.bf16.msra.mxu0 0
  %1231 = vmatprep.subr.bf16.mxu0 0
  %1232 = vmatpush2.bf16.msra.mxu0 0
  %1233 = vmatprep.subr.bf16.mxu0 0
  %1234 = vmatpush2.bf16.msra.mxu0 0
  %1235 = vmatprep.subr.bf16.mxu0 0
  %1236 = vmatpush2.bf16.msra.mxu0 0
  %1237 = vmatprep.subr.bf16.mxu0 0
  %1238 = vmatpush2.bf16.msra.mxu0 0
  %1239 = vmatprep.mubr.bf16.mxu0 0
  %1240 = vmatmul.mubr.bf16.gmra.mxu0 %v1034
  %v1241 = vpop.f32.mrf.mxu0
  %v1242 = vadd.f32 0.0, %v1241
  %v1243 = vpop.f32.mrf.mxu0
  %v1244 = vpop.f32.mrf.mxu0
  %v1245 = vadd.f32 0.0, %v1244
  %v1246 = vpop.f32.mrf.mxu0
  %1247 = vmatprep.mubr.bf16.mxu0 0
  %1248 = vmatmul.mubr.bf16.gmra.mxu0 %v1035
  %v1249 = vpop.f32.mrf.mxu0
  %v1250 = vadd.f32 0.0, %v1249
  %v1251 = vpop.f32.mrf.mxu0
  %v1252 = vpop.f32.mrf.mxu0
  %v1253 = vadd.f32 0.0, %v1252
  %v1254 = vpop.f32.mrf.mxu0
  %1255 = vmatprep.mubr.bf16.mxu0 0
  %1256 = vmatmul.mubr.bf16.gmra.mxu0 %v1036
  %v1257 = vpop.f32.mrf.mxu0
  %v1258 = vadd.f32 0.0, %v1257
  %v1259 = vpop.f32.mrf.mxu0
  %v1260 = vpop.f32.mrf.mxu0
  %v1261 = vadd.f32 0.0, %v1260
  %v1262 = vpop.f32.mrf.mxu0
  %1263 = vmatprep.mubr.bf16.mxu0 0
  %1264 = vmatmul.mubr.bf16.gmra.mxu0 %v1037
  %v1265 = vpop.f32.mrf.mxu0
  %v1266 = vadd.f32 0.0, %v1265
  %v1267 = vpop.f32.mrf.mxu0
  %v1268 = vpop.f32.mrf.mxu0
  %v1269 = vadd.f32 0.0, %v1268
  %v1270 = vpop.f32.mrf.mxu0
  %1271 = vdwg.mxu0
  %v1288 = vunpack.c.l.b16 %v223
  %v1289 = vunpack.c.l.b16 %v224
  %v1290 = vunpack.c.l.b16 %v225
  %v1291 = vunpack.c.l.b16 %v226
  %v1292 = vunpack.c.l.b16 %v227
  %v1293 = vunpack.c.l.b16 %v228
  %v1294 = vunpack.c.l.b16 %v229
  %v1295 = vunpack.c.l.b16 %v230
  %v1296 = vunpack.c.l.b16 %v231
  %v1297 = vunpack.c.l.b16 %v232
  %v1298 = vunpack.c.l.b16 %v233
  %v1299 = vunpack.c.l.b16 %v234
  %v1300 = vunpack.c.l.b16 %v235
  %v1301 = vunpack.c.l.b16 %v236
  %v1302 = vunpack.c.l.b16 %v237
  %v1303 = vunpack.c.l.b16 %v238
  %v1304 = vpack.c.b16 %v1289, %v1288
  %v1305 = vpack.c.b16 %v1291, %v1290
  %v1306 = vpack.c.b16 %v1293, %v1292
  %v1307 = vpack.c.b16 %v1295, %v1294
  %v1308 = vpack.c.b16 %v1297, %v1296
  %v1309 = vpack.c.b16 %v1299, %v1298
  %v1310 = vpack.c.b16 %v1301, %v1300
  %v1311 = vpack.c.b16 %v1303, %v1302
  %1320 = vmatprep.subr.bf16.mxu0 0
  %1321 = vmatpush1.bf16.msra.mxu0 %v1311
  %1322 = vmatprep.subr.bf16.mxu0 0
  %1323 = vmatpush1.bf16.msra.mxu0 %v1310
  %1324 = vmatprep.subr.bf16.mxu0 0
  %1325 = vmatpush1.bf16.msra.mxu0 %v1309
  %1326 = vmatprep.subr.bf16.mxu0 0
  %1327 = vmatpush1.bf16.msra.mxu0 %v1308
  %1328 = vmatprep.subr.bf16.mxu0 0
  %1329 = vmatpush1.bf16.msra.mxu0 %v1307
  %1330 = vmatprep.subr.bf16.mxu0 0
  %1331 = vmatpush1.bf16.msra.mxu0 %v1306
  %1332 = vmatprep.subr.bf16.mxu0 0
  %1333 = vmatpush1.bf16.msra.mxu0 %v1305
  %1334 = vmatprep.subr.bf16.mxu0 0
  %1335 = vmatpush1.bf16.msra.mxu0 %v1304
  %1336 = vmatprep.subr.bf16.mxu0 0
  %1337 = vmatpush2.bf16.msra.mxu0 0
  %1338 = vmatprep.subr.bf16.mxu0 0
  %1339 = vmatpush2.bf16.msra.mxu0 0
  %1340 = vmatprep.subr.bf16.mxu0 0
  %1341 = vmatpush2.bf16.msra.mxu0 0
  %1342 = vmatprep.subr.bf16.mxu0 0
  %1343 = vmatpush2.bf16.msra.mxu0 0
  %1344 = vmatprep.subr.bf16.mxu0 0
  %1345 = vmatpush2.bf16.msra.mxu0 0
  %1346 = vmatprep.subr.bf16.mxu0 0
  %1347 = vmatpush2.bf16.msra.mxu0 0
  %1348 = vmatprep.subr.bf16.mxu0 0
  %1349 = vmatpush2.bf16.msra.mxu0 0
  %1350 = vmatprep.subr.bf16.mxu0 0
  %1351 = vmatpush2.bf16.msra.mxu0 0
  %1352 = vmatprep.mubr.bf16.mxu0 0
  %1353 = vmatmul.mubr.bf16.gmra.mxu0 %v1038
  %v1354 = vpop.f32.mrf.mxu0
  %v1355 = vadd.f32 0.0, %v1354
  %v1356 = vpop.f32.mrf.mxu0
  %v1357 = vpop.f32.mrf.mxu0
  %v1358 = vadd.f32 0.0, %v1357
  %v1359 = vpop.f32.mrf.mxu0
  %1360 = vmatprep.mubr.bf16.mxu0 0
  %1361 = vmatmul.mubr.bf16.gmra.mxu0 %v1039
  %v1362 = vpop.f32.mrf.mxu0
  %v1363 = vadd.f32 0.0, %v1362
  %v1364 = vpop.f32.mrf.mxu0
  %v1365 = vpop.f32.mrf.mxu0
  %v1366 = vadd.f32 0.0, %v1365
  %v1367 = vpop.f32.mrf.mxu0
  %1368 = vmatprep.mubr.bf16.mxu0 0
  %1369 = vmatmul.mubr.bf16.gmra.mxu0 %v1040
  %v1370 = vpop.f32.mrf.mxu0
  %v1371 = vadd.f32 0.0, %v1370
  %v1372 = vpop.f32.mrf.mxu0
  %v1373 = vpop.f32.mrf.mxu0
  %v1374 = vadd.f32 0.0, %v1373
  %v1375 = vpop.f32.mrf.mxu0
  %1376 = vmatprep.mubr.bf16.mxu0 0
  %1377 = vmatmul.mubr.bf16.gmra.mxu0 %v1041
  %v1378 = vpop.f32.mrf.mxu0
  %v1379 = vadd.f32 0.0, %v1378
  %v1380 = vpop.f32.mrf.mxu0
  %v1381 = vpop.f32.mrf.mxu0
  %v1382 = vadd.f32 0.0, %v1381
  %v1383 = vpop.f32.mrf.mxu0
  %1384 = vdwg.mxu0
  %v1401 = vunpack.c.l.b16 %v239
  %v1402 = vunpack.c.l.b16 %v240
  %v1403 = vunpack.c.l.b16 %v241
  %v1404 = vunpack.c.l.b16 %v242
  %v1405 = vunpack.c.l.b16 %v243
  %v1406 = vunpack.c.l.b16 %v244
  %v1407 = vunpack.c.l.b16 %v245
  %v1408 = vunpack.c.l.b16 %v246
  %v1409 = vunpack.c.l.b16 %v247
  %v1410 = vunpack.c.l.b16 %v248
  %v1411 = vunpack.c.l.b16 %v249
  %v1412 = vunpack.c.l.b16 %v250
  %v1413 = vunpack.c.l.b16 %v251
  %v1414 = vunpack.c.l.b16 %v252
  %v1415 = vunpack.c.l.b16 %v253
  %v1416 = vunpack.c.l.b16 %v254
  %v1417 = vpack.c.b16 %v1402, %v1401
  %v1418 = vpack.c.b16 %v1404, %v1403
  %v1419 = vpack.c.b16 %v1406, %v1405
  %v1420 = vpack.c.b16 %v1408, %v1407
  %v1421 = vpack.c.b16 %v1410, %v1409
  %v1422 = vpack.c.b16 %v1412, %v1411
  %v1423 = vpack.c.b16 %v1414, %v1413
  %v1424 = vpack.c.b16 %v1416, %v1415
  %1433 = vmatprep.subr.bf16.mxu0 0
  %1434 = vmatpush1.bf16.msra.mxu0 %v1424
  %1435 = vmatprep.subr.bf16.mxu0 0
  %1436 = vmatpush1.bf16.msra.mxu0 %v1423
  %1437 = vmatprep.subr.bf16.mxu0 0
  %1438 = vmatpush1.bf16.msra.mxu0 %v1422
  %1439 = vmatprep.subr.bf16.mxu0 0
  %1440 = vmatpush1.bf16.msra.mxu0 %v1421
  %1441 = vmatprep.subr.bf16.mxu0 0
  %1442 = vmatpush1.bf16.msra.mxu0 %v1420
  %1443 = vmatprep.subr.bf16.mxu0 0
  %1444 = vmatpush1.bf16.msra.mxu0 %v1419
  %1445 = vmatprep.subr.bf16.mxu0 0
  %1446 = vmatpush1.bf16.msra.mxu0 %v1418
  %1447 = vmatprep.subr.bf16.mxu0 0
  %1448 = vmatpush1.bf16.msra.mxu0 %v1417
  %1449 = vmatprep.subr.bf16.mxu0 0
  %1450 = vmatpush2.bf16.msra.mxu0 0
  %1451 = vmatprep.subr.bf16.mxu0 0
  %1452 = vmatpush2.bf16.msra.mxu0 0
  %1453 = vmatprep.subr.bf16.mxu0 0
  %1454 = vmatpush2.bf16.msra.mxu0 0
  %1455 = vmatprep.subr.bf16.mxu0 0
  %1456 = vmatpush2.bf16.msra.mxu0 0
  %1457 = vmatprep.subr.bf16.mxu0 0
  %1458 = vmatpush2.bf16.msra.mxu0 0
  %1459 = vmatprep.subr.bf16.mxu0 0
  %1460 = vmatpush2.bf16.msra.mxu0 0
  %1461 = vmatprep.subr.bf16.mxu0 0
  %1462 = vmatpush2.bf16.msra.mxu0 0
  %1463 = vmatprep.subr.bf16.mxu0 0
  %1464 = vmatpush2.bf16.msra.mxu0 0
  %1465 = vmatprep.mubr.bf16.mxu0 0
  %1466 = vmatmul.mubr.bf16.gmra.mxu0 %v1042
  %v1467 = vpop.f32.mrf.mxu0
  %v1468 = vadd.f32 0.0, %v1467
  %v1469 = vpop.f32.mrf.mxu0
  %v1470 = vpop.f32.mrf.mxu0
  %v1471 = vadd.f32 0.0, %v1470
  %v1472 = vpop.f32.mrf.mxu0
  %1473 = vmatprep.mubr.bf16.mxu0 0
  %1474 = vmatmul.mubr.bf16.gmra.mxu0 %v1043
  %v1475 = vpop.f32.mrf.mxu0
  %v1476 = vadd.f32 0.0, %v1475
  %v1477 = vpop.f32.mrf.mxu0
  %v1478 = vpop.f32.mrf.mxu0
  %v1479 = vadd.f32 0.0, %v1478
  %v1480 = vpop.f32.mrf.mxu0
  %1481 = vmatprep.mubr.bf16.mxu0 0
  %1482 = vmatmul.mubr.bf16.gmra.mxu0 %v1044
  %v1483 = vpop.f32.mrf.mxu0
  %v1484 = vadd.f32 0.0, %v1483
  %v1485 = vpop.f32.mrf.mxu0
  %v1486 = vpop.f32.mrf.mxu0
  %v1487 = vadd.f32 0.0, %v1486
  %v1488 = vpop.f32.mrf.mxu0
  %1489 = vmatprep.mubr.bf16.mxu0 0
  %1490 = vmatmul.mubr.bf16.gmra.mxu0 %v1045
  %v1491 = vpop.f32.mrf.mxu0
  %v1492 = vadd.f32 0.0, %v1491
  %v1493 = vpop.f32.mrf.mxu0
  %v1494 = vpop.f32.mrf.mxu0
  %v1495 = vadd.f32 0.0, %v1494
  %v1496 = vpop.f32.mrf.mxu0
  %1497 = vdwg.mxu0
  %v1498 = vpack.c.bf16 %v1132, %v1129
  %v1499 = vpack.c.bf16 %v1140, %v1137
  %v1500 = vpack.c.bf16 %v1148, %v1145
  %v1501 = vpack.c.bf16 %v1156, %v1153
  %v1502 = vpack.c.bf16 %v1245, %v1242
  %v1503 = vpack.c.bf16 %v1253, %v1250
  %v1504 = vpack.c.bf16 %v1261, %v1258
  %v1505 = vpack.c.bf16 %v1269, %v1266
  %v1506 = vpack.c.bf16 %v1358, %v1355
  %v1507 = vpack.c.bf16 %v1366, %v1363
  %v1508 = vpack.c.bf16 %v1374, %v1371
  %v1509 = vpack.c.bf16 %v1382, %v1379
  %v1510 = vpack.c.bf16 %v1471, %v1468
  %v1511 = vpack.c.bf16 %v1479, %v1476
  %v1512 = vpack.c.bf16 %v1487, %v1484
  %v1513 = vpack.c.bf16 %v1495, %v1492
  %v1530 = vunpack.c.l.b16 %v1498
  %v1531 = vunpack.c.h.b16 %v1498
  %v1532 = vunpack.c.l.b16 %v1499
  %v1533 = vunpack.c.h.b16 %v1499
  %v1534 = vunpack.c.l.b16 %v1500
  %v1535 = vunpack.c.h.b16 %v1500
  %v1536 = vunpack.c.l.b16 %v1501
  %v1537 = vunpack.c.h.b16 %v1501
  %v1538 = vunpack.c.l.b16 %v1502
  %v1539 = vunpack.c.h.b16 %v1502
  %v1540 = vunpack.c.l.b16 %v1503
  %v1541 = vunpack.c.h.b16 %v1503
  %v1542 = vunpack.c.l.b16 %v1504
  %v1543 = vunpack.c.h.b16 %v1504
  %v1544 = vunpack.c.l.b16 %v1505
  %v1545 = vunpack.c.h.b16 %v1505
  %v1546 = vunpack.c.l.b16 %v1506
  %v1547 = vunpack.c.h.b16 %v1506
  %v1548 = vunpack.c.l.b16 %v1507
  %v1549 = vunpack.c.h.b16 %v1507
  %v1550 = vunpack.c.l.b16 %v1508
  %v1551 = vunpack.c.h.b16 %v1508
  %v1552 = vunpack.c.l.b16 %v1509
  %v1553 = vunpack.c.h.b16 %v1509
  %v1554 = vunpack.c.l.b16 %v1510
  %v1555 = vunpack.c.h.b16 %v1510
  %v1556 = vunpack.c.l.b16 %v1511
  %v1557 = vunpack.c.h.b16 %v1511
  %v1558 = vunpack.c.l.b16 %v1512
  %v1559 = vunpack.c.h.b16 %v1512
  %v1560 = vunpack.c.l.b16 %v1513
  %v1561 = vunpack.c.h.b16 %v1513
  %v1562 = vpack.c.b16 %v1530, %v1530
  %v1563 = vpack.c.b16 %v1531, %v1531
  %v1564 = vpack.c.b16 %v1532, %v1532
  %v1565 = vpack.c.b16 %v1533, %v1533
  %v1566 = vpack.c.b16 %v1534, %v1534
  %v1567 = vpack.c.b16 %v1535, %v1535
  %v1568 = vpack.c.b16 %v1536, %v1536
  %v1569 = vpack.c.b16 %v1537, %v1537
  %v1570 = vpack.c.b16 %v1538, %v1538
  %v1571 = vpack.c.b16 %v1539, %v1539
  %v1572 = vpack.c.b16 %v1540, %v1540
  %v1573 = vpack.c.b16 %v1541, %v1541
  %v1574 = vpack.c.b16 %v1542, %v1542
  %v1575 = vpack.c.b16 %v1543, %v1543
  %v1576 = vpack.c.b16 %v1544, %v1544
  %v1577 = vpack.c.b16 %v1545, %v1545
  %v1578 = vpack.c.b16 %v1546, %v1546
  %v1579 = vpack.c.b16 %v1547, %v1547
  %v1580 = vpack.c.b16 %v1548, %v1548
  %v1581 = vpack.c.b16 %v1549, %v1549
  %v1582 = vpack.c.b16 %v1550, %v1550
  %v1583 = vpack.c.b16 %v1551, %v1551
  %v1584 = vpack.c.b16 %v1552, %v1552
  %v1585 = vpack.c.b16 %v1553, %v1553
  %v1586 = vpack.c.b16 %v1554, %v1554
  %v1587 = vpack.c.b16 %v1555, %v1555
  %v1588 = vpack.c.b16 %v1556, %v1556
  %v1589 = vpack.c.b16 %v1557, %v1557
  %v1590 = vpack.c.b16 %v1558, %v1558
  %v1591 = vpack.c.b16 %v1559, %v1559
  %v1592 = vpack.c.b16 %v1560, %v1560
  %v1593 = vpack.c.b16 %v1561, %v1561
  %1626 = vst [vmem:[%s3] sm:$0xf] %v1562
  %1627 = vst [vmem:[%s3 + $0x4] sm:$0xf] %v1563
  %1628 = vst [vmem:[%s3 + $0x8] sm:$0xf] %v1564
  %1629 = vst [vmem:[%s3 + $0xc] sm:$0xf] %v1565
  %1630 = vst [vmem:[%s3 + $0x10] sm:$0xf] %v1566
  %1631 = vst [vmem:[%s3 + $0x14] sm:$0xf] %v1567
  %1632 = vst [vmem:[%s3 + $0x18] sm:$0xf] %v1568
  %1633 = vst [vmem:[%s3 + $0x1c] sm:$0xf] %v1569
  %1634 = vst [vmem:[%s3 + $0x20] sm:$0xf] %v1570
  %1635 = vst [vmem:[%s3 + $0x24] sm:$0xf] %v1571
  %1636 = vst [vmem:[%s3 + $0x28] sm:$0xf] %v1572
  %1637 = vst [vmem:[%s3 + $0x2c] sm:$0xf] %v1573
  %1638 = vst [vmem:[%s3 + $0x30] sm:$0xf] %v1574
  %1639 = vst [vmem:[%s3 + $0x34] sm:$0xf] %v1575
  %1640 = vst [vmem:[%s3 + $0x38] sm:$0xf] %v1576
  %1641 = vst [vmem:[%s3 + $0x3c] sm:$0xf] %v1577
  %1642 = vst [vmem:[%s3 + $0x40] sm:$0xf] %v1578
  %1643 = vst [vmem:[%s3 + $0x44] sm:$0xf] %v1579
  %1644 = vst [vmem:[%s3 + $0x48] sm:$0xf] %v1580
  %1645 = vst [vmem:[%s3 + $0x4c] sm:$0xf] %v1581
  %1646 = vst [vmem:[%s3 + $0x50] sm:$0xf] %v1582
  %1647 = vst [vmem:[%s3 + $0x54] sm:$0xf] %v1583
  %1648 = vst [vmem:[%s3 + $0x58] sm:$0xf] %v1584
  %1649 = vst [vmem:[%s3 + $0x5c] sm:$0xf] %v1585
  %1650 = vst [vmem:[%s3 + $0x60] sm:$0xf] %v1586
  %1651 = vst [vmem:[%s3 + $0x64] sm:$0xf] %v1587
  %1652 = vst [vmem:[%s3 + $0x68] sm:$0xf] %v1588
  %1653 = vst [vmem:[%s3 + $0x6c] sm:$0xf] %v1589
  %1654 = vst [vmem:[%s3 + $0x70] sm:$0xf] %v1590
  %1655 = vst [vmem:[%s3 + $0x74] sm:$0xf] %v1591
  %1656 = vst [vmem:[%s3 + $0x78] sm:$0xf] %v1592
  %1657 = vst [vmem:[%s3 + $0x7c] sm:$0xf] %v1593
  // Predicated region
  $region14: #{_lambda_.6} parent=0 // pred_check
    _
  $region15: #{_lambda_.6} parent=0 // pred_check_branch
    %1659 = sbr.rel (0) target = $region17
  $region16: #{_lambda_.6} parent=0 // pred_region
    _
  $region17: #{_lambda_.6} parent=0 // pred_fallthru
    _
  // Predicated region
  $region18: #{_lambda_.6} parent=0 // pred_check
    _
  $region19: #{_lambda_.6} parent=0 // pred_check_branch
    %1661 = sbr.rel (0) target = $region21
  $region20: #{_lambda_.6} parent=0 // pred_region
    _
  $region21: #{_lambda_.6} parent=0 // pred_fallthru
    _

// kernel: _lambda_.9
$region0: #{_lambda_.9}
  #allocation0 [shape = 'u32[]', space=smem, size = 0x4, offset = 0x4, fixed_abs, tag = 'smem constant byte address 0x4 - core index']
  #allocation1 [shape = 'u32[144,128]{1,0:T(1,128)}', space=vmem, size = 0x12000, scoped, tag = 'internal scratch']
  %s0 = inlined_call_operand.vmem [shape: bf16[128,512], index: 0, kind: input, shape index: {}]
  %s1 = inlined_call_operand.vmem [shape: bf16[512,128], index: 1, kind: input, shape index: {}]
  %s2 = inlined_call_operand.vmem [shape: f32[1,128], index: 2, kind: input, shape index: {}]
  %s3 = inlined_call_operand.vmem [shape: f32[128,128], index: 3, kind: input, shape index: {}]
  %s4 = inlined_call_operand.hbm [shape: f32[128,128], index: 4, kind: output, shape index: {}]
  %s5 = sld [smem:[#allocation0]]
  $region26: #{_lambda_.9} parent=0
    _
  %s7 = ssub.s32 1, %s5
  %s8 = scalar_select 0, %s7, %s5
  $region1: #{_lambda_.9} parent=0
    #allocation2 [shape = 'u8[65536]{0}', space=vmem, size = 0x10000, scoped, tag = 'output window, operand 0, single buffered']
    #allocation3 [shape = 's32[1]{0}', space=sflag, size = 0x4, scoped, tag = 'scoped memory for _lambda_.9']
    %9 = vsyncpa [#allocation3], 0
    // Predicated region
    $region2: #{_lambda_.9} parent=1 // pred_check
      _
    $region3: #{_lambda_.9} parent=1 // pred_check_branch
      %11 = sbr.rel (0) target = $region5
    $region4: #{_lambda_.9} parent=1 // pred_region
      _
    $region5: #{_lambda_.9} parent=1 // pred_fallthru
      _
    // Predicated region
    $region6: #{_lambda_.9} parent=1 // pred_check
      _
    $region7: #{_lambda_.9} parent=1 // pred_check_branch
      %13 = sbr.rel (0) target = $region9
    $region8: #{_lambda_.9} parent=1 // pred_region
      _
    $region9: #{_lambda_.9} parent=1 // pred_fallthru
      _
    // Predicated region
    $region10: #{_lambda_.9} parent=1 // pred_check
      _
    $region11: #{_lambda_.9} parent=1 // pred_check_branch
      %15 = sbr.rel (0) target = $region13
    $region12: #{_lambda_.9} parent=1 // pred_region
      _
    $region13: #{_lambda_.9} parent=1 // pred_fallthru
      _
    // Predicated region
    $region14: #{_lambda_.9} parent=1 // pred_check
      _
    $region15: #{_lambda_.9} parent=1 // pred_check_branch
      %17 = sbr.rel (0) target = $region17
    $region16: #{_lambda_.9} parent=1 // pred_region
      _
    $region17: #{_lambda_.9} parent=1 // pred_fallthru
      _
    %v19 = vld [vmem:[%s0] sm:$0xff]
    %v20 = vld [vmem:[%s0 + $0x8] sm:$0xff]
    %v21 = vld [vmem:[%s0 + $0x10] sm:$0xff]
    %v22 = vld [vmem:[%s0 + $0x18] sm:$0xff]
    %v23 = vld [vmem:[%s0 + $0x20] sm:$0xff]
    %v24 = vld [vmem:[%s0 + $0x28] sm:$0xff]
    %v25 = vld [vmem:[%s0 + $0x30] sm:$0xff]
    %v26 = vld [vmem:[%s0 + $0x38] sm:$0xff]
    %v27 = vld [vmem:[%s0 + $0x40] sm:$0xff]
    %v28 = vld [vmem:[%s0 + $0x48] sm:$0xff]
    %v29 = vld [vmem:[%s0 + $0x50] sm:$0xff]
    %v30 = vld [vmem:[%s0 + $0x58] sm:$0xff]
    %v31 = vld [vmem:[%s0 + $0x60] sm:$0xff]
    %v32 = vld [vmem:[%s0 + $0x68] sm:$0xff]
    %v33 = vld [vmem:[%s0 + $0x70] sm:$0xff]
    %v34 = vld [vmem:[%s0 + $0x78] sm:$0xff]
    %v35 = vld [vmem:[%s0 + $0x80] sm:$0xff]
    %v36 = vld [vmem:[%s0 + $0x88] sm:$0xff]
    %v37 = vld [vmem:[%s0 + $0x90] sm:$0xff]
    %v38 = vld [vmem:[%s0 + $0x98] sm:$0xff]
    %v39 = vld [vmem:[%s0 + $0xa0] sm:$0xff]
    %v40 = vld [vmem:[%s0 + $0xa8] sm:$0xff]
    %v41 = vld [vmem:[%s0 + $0xb0] sm:$0xff]
    %v42 = vld [vmem:[%s0 + $0xb8] sm:$0xff]
    %v43 = vld [vmem:[%s0 + $0xc0] sm:$0xff]
    %v44 = vld [vmem:[%s0 + $0xc8] sm:$0xff]
    %v45 = vld [vmem:[%s0 + $0xd0] sm:$0xff]
    %v46 = vld [vmem:[%s0 + $0xd8] sm:$0xff]
    %v47 = vld [vmem:[%s0 + $0xe0] sm:$0xff]
    %v48 = vld [vmem:[%s0 + $0xe8] sm:$0xff]
    %v49 = vld [vmem:[%s0 + $0xf0] sm:$0xff]
    %v50 = vld [vmem:[%s0 + $0xf8] sm:$0xff]
    %v51 = vld [vmem:[%s1] sm:$0xf]
    %v52 = vld [vmem:[%s1 + $0x4] sm:$0xf]
    %v53 = vld [vmem:[%s1 + $0x8] sm:$0xf]
    %v54 = vld [vmem:[%s1 + $0xc] sm:$0xf]
    %v55 = vld [vmem:[%s1 + $0x10] sm:$0xf]
    %v56 = vld [vmem:[%s1 + $0x14] sm:$0xf]
    %v57 = vld [vmem:[%s1 + $0x18] sm:$0xf]
    %v58 = vld [vmem:[%s1 + $0x1c] sm:$0xf]
    %v59 = vld [vmem:[%s1 + $0x20] sm:$0xf]
    %v60 = vld [vmem:[%s1 + $0x24] sm:$0xf]
    %v61 = vld [vmem:[%s1 + $0x28] sm:$0xf]
    %v62 = vld [vmem:[%s1 + $0x2c] sm:$0xf]
    %v63 = vld [vmem:[%s1 + $0x30] sm:$0xf]
    %v64 = vld [vmem:[%s1 + $0x34] sm:$0xf]
    %v65 = vld [vmem:[%s1 + $0x38] sm:$0xf]
    %v66 = vld [vmem:[%s1 + $0x3c] sm:$0xf]
    %v67 = vld [vmem:[%s1 + $0x40] sm:$0xf]
    %v68 = vld [vmem:[%s1 + $0x44] sm:$0xf]
    %v69 = vld [vmem:[%s1 + $0x48] sm:$0xf]
    %v70 = vld [vmem:[%s1 + $0x4c] sm:$0xf]
    %v71 = vld [vmem:[%s1 + $0x50] sm:$0xf]
    %v72 = vld [vmem:[%s1 + $0x54] sm:$0xf]
    %v73 = vld [vmem:[%s1 + $0x58] sm:$0xf]
    %v74 = vld [vmem:[%s1 + $0x5c] sm:$0xf]
    %v75 = vld [vmem:[%s1 + $0x60] sm:$0xf]
    %v76 = vld [vmem:[%s1 + $0x64] sm:$0xf]
    %v77 = vld [vmem:[%s1 + $0x68] sm:$0xf]
    %v78 = vld [vmem:[%s1 + $0x6c] sm:$0xf]
    %v79 = vld [vmem:[%s1 + $0x70] sm:$0xf]
    %v80 = vld [vmem:[%s1 + $0x74] sm:$0xf]
    %v81 = vld [vmem:[%s1 + $0x78] sm:$0xf]
    %v82 = vld [vmem:[%s1 + $0x7c] sm:$0xf]
    %v83 = vld [vmem:[%s1 + $0x80] sm:$0xf]
    %v84 = vld [vmem:[%s1 + $0x84] sm:$0xf]
    %v85 = vld [vmem:[%s1 + $0x88] sm:$0xf]
    %v86 = vld [vmem:[%s1 + $0x8c] sm:$0xf]
    %v87 = vld [vmem:[%s1 + $0x90] sm:$0xf]
    %v88 = vld [vmem:[%s1 + $0x94] sm:$0xf]
    %v89 = vld [vmem:[%s1 + $0x98] sm:$0xf]
    %v90 = vld [vmem:[%s1 + $0x9c] sm:$0xf]
    %v91 = vld [vmem:[%s1 + $0xa0] sm:$0xf]
    %v92 = vld [vmem:[%s1 + $0xa4] sm:$0xf]
    %v93 = vld [vmem:[%s1 + $0xa8] sm:$0xf]
    %v94 = vld [vmem:[%s1 + $0xac] sm:$0xf]
    %v95 = vld [vmem:[%s1 + $0xb0] sm:$0xf]
    %v96 = vld [vmem:[%s1 + $0xb4] sm:$0xf]
    %v97 = vld [vmem:[%s1 + $0xb8] sm:$0xf]
    %v98 = vld [vmem:[%s1 + $0xbc] sm:$0xf]
    %v99 = vld [vmem:[%s1 + $0xc0] sm:$0xf]
    %v100 = vld [vmem:[%s1 + $0xc4] sm:$0xf]
    %v101 = vld [vmem:[%s1 + $0xc8] sm:$0xf]
    %v102 = vld [vmem:[%s1 + $0xcc] sm:$0xf]
    %v103 = vld [vmem:[%s1 + $0xd0] sm:$0xf]
    %v104 = vld [vmem:[%s1 + $0xd4] sm:$0xf]
    %v105 = vld [vmem:[%s1 + $0xd8] sm:$0xf]
    %v106 = vld [vmem:[%s1 + $0xdc] sm:$0xf]
    %v107 = vld [vmem:[%s1 + $0xe0] sm:$0xf]
    %v108 = vld [vmem:[%s1 + $0xe4] sm:$0xf]
    %v109 = vld [vmem:[%s1 + $0xe8] sm:$0xf]
    %v110 = vld [vmem:[%s1 + $0xec] sm:$0xf]
    %v111 = vld [vmem:[%s1 + $0xf0] sm:$0xf]
    %v112 = vld [vmem:[%s1 + $0xf4] sm:$0xf]
    %v113 = vld [vmem:[%s1 + $0xf8] sm:$0xf]
    %v114 = vld [vmem:[%s1 + $0xfc] sm:$0xf]
    %v115 = vld [vmem:[%s2] sm:$0x1]
    %v117 = vlaneseq
    %v118 = vshrl.u32 %v117, 7
    %v119 = vsub.s32 0, %v118
    %v120 = vrot.slane %v115, %v119
    %v154 = vunpack.c.l.b16 %v19
    %v155 = vunpack.c.h.b16 %v19
    %v156 = vunpack.c.l.b16 %v20
    %v157 = vunpack.c.h.b16 %v20
    %v158 = vunpack.c.l.b16 %v21
    %v159 = vunpack.c.h.b16 %v21
    %v160 = vunpack.c.l.b16 %v22
    %v161 = vunpack.c.h.b16 %v22
    %v162 = vunpack.c.l.b16 %v23
    %v163 = vunpack.c.h.b16 %v23
    %v164 = vunpack.c.l.b16 %v24
    %v165 = vunpack.c.h.b16 %v24
    %v166 = vunpack.c.l.b16 %v25
    %v167 = vunpack.c.h.b16 %v25
    %v168 = vunpack.c.l.b16 %v26
    %v169 = vunpack.c.h.b16 %v26
    %v170 = vunpack.c.l.b16 %v27
    %v171 = vunpack.c.h.b16 %v27
    %v172 = vunpack.c.l.b16 %v28
    %v173 = vunpack.c.h.b16 %v28
    %v174 = vunpack.c.l.b16 %v29
    %v175 = vunpack.c.h.b16 %v29
    %v176 = vunpack.c.l.b16 %v30
    %v177 = vunpack.c.h.b16 %v30
    %v178 = vunpack.c.l.b16 %v31
    %v179 = vunpack.c.h.b16 %v31
    %v180 = vunpack.c.l.b16 %v32
    %v181 = vunpack.c.h.b16 %v32
    %v182 = vunpack.c.l.b16 %v33
    %v183 = vunpack.c.h.b16 %v33
    %v184 = vunpack.c.l.b16 %v34
    %v185 = vunpack.c.h.b16 %v34
    %v186 = vunpack.c.l.b16 %v35
    %v187 = vunpack.c.h.b16 %v35
    %v188 = vunpack.c.l.b16 %v36
    %v189 = vunpack.c.h.b16 %v36
    %v190 = vunpack.c.l.b16 %v37
    %v191 = vunpack.c.h.b16 %v37
    %v192 = vunpack.c.l.b16 %v38
    %v193 = vunpack.c.h.b16 %v38
    %v194 = vunpack.c.l.b16 %v39
    %v195 = vunpack.c.h.b16 %v39
    %v196 = vunpack.c.l.b16 %v40
    %v197 = vunpack.c.h.b16 %v40
    %v198 = vunpack.c.l.b16 %v41
    %v199 = vunpack.c.h.b16 %v41
    %v200 = vunpack.c.l.b16 %v42
    %v201 = vunpack.c.h.b16 %v42
    %v202 = vunpack.c.l.b16 %v43
    %v203 = vunpack.c.h.b16 %v43
    %v204 = vunpack.c.l.b16 %v44
    %v205 = vunpack.c.h.b16 %v44
    %v206 = vunpack.c.l.b16 %v45
    %v207 = vunpack.c.h.b16 %v45
    %v208 = vunpack.c.l.b16 %v46
    %v209 = vunpack.c.h.b16 %v46
    %v210 = vunpack.c.l.b16 %v47
    %v211 = vunpack.c.h.b16 %v47
    %v212 = vunpack.c.l.b16 %v48
    %v213 = vunpack.c.h.b16 %v48
    %v214 = vunpack.c.l.b16 %v49
    %v215 = vunpack.c.h.b16 %v49
    %v216 = vunpack.c.l.b16 %v50
    %v217 = vunpack.c.h.b16 %v50
    %v218 = vpack.c.b16 %v158, %v154
    %v219 = vpack.c.b16 %v159, %v155
    %v220 = vpack.c.b16 %v160, %v156
    %v221 = vpack.c.b16 %v161, %v157
    %v222 = vpack.c.b16 %v166, %v162
    %v223 = vpack.c.b16 %v167, %v163
    %v224 = vpack.c.b16 %v168, %v164
    %v225 = vpack.c.b16 %v169, %v165
    %v226 = vpack.c.b16 %v174, %v170
    %v227 = vpack.c.b16 %v175, %v171
    %v228 = vpack.c.b16 %v176, %v172
    %v229 = vpack.c.b16 %v177, %v173
    %v230 = vpack.c.b16 %v182, %v178
    %v231 = vpack.c.b16 %v183, %v179
    %v232 = vpack.c.b16 %v184, %v180
    %v233 = vpack.c.b16 %v185, %v181
    %v234 = vpack.c.b16 %v190, %v186
    %v235 = vpack.c.b16 %v191, %v187
    %v236 = vpack.c.b16 %v192, %v188
    %v237 = vpack.c.b16 %v193, %v189
    %v238 = vpack.c.b16 %v198, %v194
    %v239 = vpack.c.b16 %v199, %v195
    %v240 = vpack.c.b16 %v200, %v196
    %v241 = vpack.c.b16 %v201, %v197
    %v242 = vpack.c.b16 %v206, %v202
    %v243 = vpack.c.b16 %v207, %v203
    %v244 = vpack.c.b16 %v208, %v204
    %v245 = vpack.c.b16 %v209, %v205
    %v246 = vpack.c.b16 %v214, %v210
    %v247 = vpack.c.b16 %v215, %v211
    %v248 = vpack.c.b16 %v216, %v212
    %v249 = vpack.c.b16 %v217, %v213
    %v346 = vunpack.c.l.b16 %v51
    %v347 = vunpack.c.l.b16 %v52
    %v348 = vunpack.c.l.b16 %v53
    %v349 = vunpack.c.l.b16 %v54
    %v350 = vunpack.c.l.b16 %v55
    %v351 = vunpack.c.l.b16 %v56
    %v352 = vunpack.c.l.b16 %v57
    %v353 = vunpack.c.l.b16 %v58
    %v354 = vunpack.c.l.b16 %v59
    %v355 = vunpack.c.l.b16 %v60
    %v356 = vunpack.c.l.b16 %v61
    %v357 = vunpack.c.l.b16 %v62
    %v358 = vunpack.c.l.b16 %v63
    %v359 = vunpack.c.l.b16 %v64
    %v360 = vunpack.c.l.b16 %v65
    %v361 = vunpack.c.l.b16 %v66
    %v362 = vunpack.c.l.b16 %v67
    %v363 = vunpack.c.l.b16 %v68
    %v364 = vunpack.c.l.b16 %v69
    %v365 = vunpack.c.l.b16 %v70
    %v366 = vunpack.c.l.b16 %v71
    %v367 = vunpack.c.l.b16 %v72
    %v368 = vunpack.c.l.b16 %v73
    %v369 = vunpack.c.l.b16 %v74
    %v370 = vunpack.c.l.b16 %v75
    %v371 = vunpack.c.l.b16 %v76
    %v372 = vunpack.c.l.b16 %v77
    %v373 = vunpack.c.l.b16 %v78
    %v374 = vunpack.c.l.b16 %v79
    %v375 = vunpack.c.l.b16 %v80
    %v376 = vunpack.c.l.b16 %v81
    %v377 = vunpack.c.l.b16 %v82
    %v378 = vunpack.c.l.b16 %v83
    %v379 = vunpack.c.l.b16 %v84
    %v380 = vunpack.c.l.b16 %v85
    %v381 = vunpack.c.l.b16 %v86
    %v382 = vunpack.c.l.b16 %v87
    %v383 = vunpack.c.l.b16 %v88
    %v384 = vunpack.c.l.b16 %v89
    %v385 = vunpack.c.l.b16 %v90
    %v386 = vunpack.c.l.b16 %v91
    %v387 = vunpack.c.l.b16 %v92
    %v388 = vunpack.c.l.b16 %v93
    %v389 = vunpack.c.l.b16 %v94
    %v390 = vunpack.c.l.b16 %v95
    %v391 = vunpack.c.l.b16 %v96
    %v392 = vunpack.c.l.b16 %v97
    %v393 = vunpack.c.l.b16 %v98
    %v394 = vunpack.c.l.b16 %v99
    %v395 = vunpack.c.l.b16 %v100
    %v396 = vunpack.c.l.b16 %v101
    %v397 = vunpack.c.l.b16 %v102
    %v398 = vunpack.c.l.b16 %v103
    %v399 = vunpack.c.l.b16 %v104
    %v400 = vunpack.c.l.b16 %v105
    %v401 = vunpack.c.l.b16 %v106
    %v402 = vunpack.c.l.b16 %v107
    %v403 = vunpack.c.l.b16 %v108
    %v404 = vunpack.c.l.b16 %v109
    %v405 = vunpack.c.l.b16 %v110
    %v406 = vunpack.c.l.b16 %v111
    %v407 = vunpack.c.l.b16 %v112
    %v408 = vunpack.c.l.b16 %v113
    %v409 = vunpack.c.l.b16 %v114
    %v410 = vpack.c.b16 %v347, %v346
    %v411 = vpack.c.b16 %v349, %v348
    %v412 = vpack.c.b16 %v351, %v350
    %v413 = vpack.c.b16 %v353, %v352
    %v414 = vpack.c.b16 %v355, %v354
    %v415 = vpack.c.b16 %v357, %v356
    %v416 = vpack.c.b16 %v359, %v358
    %v417 = vpack.c.b16 %v361, %v360
    %v418 = vpack.c.b16 %v363, %v362
    %v419 = vpack.c.b16 %v365, %v364
    %v420 = vpack.c.b16 %v367, %v366
    %v421 = vpack.c.b16 %v369, %v368
    %v422 = vpack.c.b16 %v371, %v370
    %v423 = vpack.c.b16 %v373, %v372
    %v424 = vpack.c.b16 %v375, %v374
    %v425 = vpack.c.b16 %v377, %v376
    %v426 = vpack.c.b16 %v379, %v378
    %v427 = vpack.c.b16 %v381, %v380
    %v428 = vpack.c.b16 %v383, %v382
    %v429 = vpack.c.b16 %v385, %v384
    %v430 = vpack.c.b16 %v387, %v386
    %v431 = vpack.c.b16 %v389, %v388
    %v432 = vpack.c.b16 %v391, %v390
    %v433 = vpack.c.b16 %v393, %v392
    %v434 = vpack.c.b16 %v395, %v394
    %v435 = vpack.c.b16 %v397, %v396
    %v436 = vpack.c.b16 %v399, %v398
    %v437 = vpack.c.b16 %v401, %v400
    %v438 = vpack.c.b16 %v403, %v402
    %v439 = vpack.c.b16 %v405, %v404
    %v440 = vpack.c.b16 %v407, %v406
    %v441 = vpack.c.b16 %v409, %v408
    %474 = vmatprep.subr.bf16.mxu0 0
    %475 = vmatpush1.bf16.msra.mxu0 %v417
    %476 = vmatprep.subr.bf16.mxu0 0
    %477 = vmatpush1.bf16.msra.mxu0 %v416
    %478 = vmatprep.subr.bf16.mxu0 0
    %479 = vmatpush1.bf16.msra.mxu0 %v415
    %480 = vmatprep.subr.bf16.mxu0 0
    %481 = vmatpush1.bf16.msra.mxu0 %v414
    %482 = vmatprep.subr.bf16.mxu0 0
    %483 = vmatpush1.bf16.msra.mxu0 %v413
    %484 = vmatprep.subr.bf16.mxu0 0
    %485 = vmatpush1.bf16.msra.mxu0 %v412
    %486 = vmatprep.subr.bf16.mxu0 0
    %487 = vmatpush1.bf16.msra.mxu0 %v411
    %488 = vmatprep.subr.bf16.mxu0 0
    %489 = vmatpush1.bf16.msra.mxu0 %v410
    %490 = vmatprep.subr.bf16.mxu0 0
    %491 = vmatpush2.bf16.msra.mxu0 %v425
    %492 = vmatprep.subr.bf16.mxu0 0
    %493 = vmatpush2.bf16.msra.mxu0 %v424
    %494 = vmatprep.subr.bf16.mxu0 0
    %495 = vmatpush2.bf16.msra.mxu0 %v423
    %496 = vmatprep.subr.bf16.mxu0 0
    %497 = vmatpush2.bf16.msra.mxu0 %v422
    %498 = vmatprep.subr.bf16.mxu0 0
    %499 = vmatpush2.bf16.msra.mxu0 %v421
    %500 = vmatprep.subr.bf16.mxu0 0
    %501 = vmatpush2.bf16.msra.mxu0 %v420
    %502 = vmatprep.subr.bf16.mxu0 0
    %503 = vmatpush2.bf16.msra.mxu0 %v419
    %504 = vmatprep.subr.bf16.mxu0 0
    %505 = vmatpush2.bf16.msra.mxu0 %v418
    %506 = vmatprep.mubr.bf16.mxu0 %v219
    %507 = vmatmul.mubr.bf16.gmra.mxu0 %v218
    %v508 = vpop.f32.mrf.mxu0
    %v509 = vadd.f32 %v120, %v508
    %v510 = vpop.f32.mrf.mxu0
    %v511 = vpop.f32.mrf.mxu0
    %v512 = vadd.f32 %v120, %v511
    %v513 = vpop.f32.mrf.mxu0
    %514 = vmatprep.mubr.bf16.mxu0 %v223
    %515 = vmatmul.mubr.bf16.gmra.mxu0 %v222
    %v516 = vpop.f32.mrf.mxu0
    %v517 = vadd.f32 %v120, %v516
    %v518 = vpop.f32.mrf.mxu0
    %v519 = vpop.f32.mrf.mxu0
    %v520 = vadd.f32 %v120, %v519
    %v521 = vpop.f32.mrf.mxu0
    %522 = vmatprep.mubr.bf16.mxu0 %v227
    %523 = vmatmul.mubr.bf16.gmra.mxu0 %v226
    %v524 = vpop.f32.mrf.mxu0
    %v525 = vadd.f32 %v120, %v524
    %v526 = vpop.f32.mrf.mxu0
    %v527 = vpop.f32.mrf.mxu0
    %v528 = vadd.f32 %v120, %v527
    %v529 = vpop.f32.mrf.mxu0
    %530 = vmatprep.mubr.bf16.mxu0 %v231
    %531 = vmatmul.mubr.bf16.gmra.mxu0 %v230
    %v532 = vpop.f32.mrf.mxu0
    %v533 = vadd.f32 %v120, %v532
    %v534 = vpop.f32.mrf.mxu0
    %v535 = vpop.f32.mrf.mxu0
    %v536 = vadd.f32 %v120, %v535
    %v537 = vpop.f32.mrf.mxu0
    %538 = vmatprep.mubr.bf16.mxu0 %v235
    %539 = vmatmul.mubr.bf16.gmra.mxu0 %v234
    %v540 = vpop.f32.mrf.mxu0
    %v541 = vadd.f32 %v120, %v540
    %v542 = vpop.f32.mrf.mxu0
    %v543 = vpop.f32.mrf.mxu0
    %v544 = vadd.f32 %v120, %v543
    %v545 = vpop.f32.mrf.mxu0
    %546 = vmatprep.mubr.bf16.mxu0 %v239
    %547 = vmatmul.mubr.bf16.gmra.mxu0 %v238
    %v548 = vpop.f32.mrf.mxu0
    %v549 = vadd.f32 %v120, %v548
    %v550 = vpop.f32.mrf.mxu0
    %v551 = vpop.f32.mrf.mxu0
    %v552 = vadd.f32 %v120, %v551
    %v553 = vpop.f32.mrf.mxu0
    %554 = vmatprep.mubr.bf16.mxu0 %v243
    %555 = vmatmul.mubr.bf16.gmra.mxu0 %v242
    %v556 = vpop.f32.mrf.mxu0
    %v557 = vadd.f32 %v120, %v556
    %v558 = vpop.f32.mrf.mxu0
    %v559 = vpop.f32.mrf.mxu0
    %v560 = vadd.f32 %v120, %v559
    %v561 = vpop.f32.mrf.mxu0
    %562 = vmatprep.mubr.bf16.mxu0 %v247
    %563 = vmatmul.mubr.bf16.gmra.mxu0 %v246
    %v564 = vpop.f32.mrf.mxu0
    %v565 = vadd.f32 %v120, %v564
    %v566 = vpop.f32.mrf.mxu0
    %v567 = vpop.f32.mrf.mxu0
    %v568 = vadd.f32 %v120, %v567
    %v569 = vpop.f32.mrf.mxu0
    %570 = vdwg.mxu0
    %571 = vmatprep.subr.bf16.mxu0 0
    %572 = vmatpush1.bf16.msra.mxu0 %v433
    %573 = vmatprep.subr.bf16.mxu0 0
    %574 = vmatpush1.bf16.msra.mxu0 %v432
    %575 = vmatprep.subr.bf16.mxu0 0
    %576 = vmatpush1.bf16.msra.mxu0 %v431
    %577 = vmatprep.subr.bf16.mxu0 0
    %578 = vmatpush1.bf16.msra.mxu0 %v430
    %579 = vmatprep.subr.bf16.mxu0 0
    %580 = vmatpush1.bf16.msra.mxu0 %v429
    %581 = vmatprep.subr.bf16.mxu0 0
    %582 = vmatpush1.bf16.msra.mxu0 %v428
    %583 = vmatprep.subr.bf16.mxu0 0
    %584 = vmatpush1.bf16.msra.mxu0 %v427
    %585 = vmatprep.subr.bf16.mxu0 0
    %586 = vmatpush1.bf16.msra.mxu0 %v426
    %587 = vmatprep.subr.bf16.mxu0 0
    %588 = vmatpush2.bf16.msra.mxu0 %v441
    %589 = vmatprep.subr.bf16.mxu0 0
    %590 = vmatpush2.bf16.msra.mxu0 %v440
    %591 = vmatprep.subr.bf16.mxu0 0
    %592 = vmatpush2.bf16.msra.mxu0 %v439
    %593 = vmatprep.subr.bf16.mxu0 0
    %594 = vmatpush2.bf16.msra.mxu0 %v438
    %595 = vmatprep.subr.bf16.mxu0 0
    %596 = vmatpush2.bf16.msra.mxu0 %v437
    %597 = vmatprep.subr.bf16.mxu0 0
    %598 = vmatpush2.bf16.msra.mxu0 %v436
    %599 = vmatprep.subr.bf16.mxu0 0
    %600 = vmatpush2.bf16.msra.mxu0 %v435
    %601 = vmatprep.subr.bf16.mxu0 0
    %602 = vmatpush2.bf16.msra.mxu0 %v434
    %603 = vmatprep.mubr.bf16.mxu0 %v221
    %604 = vmatmul.mubr.bf16.gmra.mxu0 %v220
    %v605 = vpop.f32.mrf.mxu0
    %v606 = vadd.f32 %v509, %v605
    %v607 = vpop.f32.mrf.mxu0
    %v608 = vpop.f32.mrf.mxu0
    %v609 = vadd.f32 %v512, %v608
    %v610 = vpop.f32.mrf.mxu0
    %611 = vmatprep.mubr.bf16.mxu0 %v225
    %612 = vmatmul.mubr.bf16.gmra.mxu0 %v224
    %v613 = vpop.f32.mrf.mxu0
    %v614 = vadd.f32 %v517, %v613
    %v615 = vpop.f32.mrf.mxu0
    %v616 = vpop.f32.mrf.mxu0
    %v617 = vadd.f32 %v520, %v616
    %v618 = vpop.f32.mrf.mxu0
    %619 = vmatprep.mubr.bf16.mxu0 %v229
    %620 = vmatmul.mubr.bf16.gmra.mxu0 %v228
    %v621 = vpop.f32.mrf.mxu0
    %v622 = vadd.f32 %v525, %v621
    %v623 = vpop.f32.mrf.mxu0
    %v624 = vpop.f32.mrf.mxu0
    %v625 = vadd.f32 %v528, %v624
    %v626 = vpop.f32.mrf.mxu0
    %627 = vmatprep.mubr.bf16.mxu0 %v233
    %628 = vmatmul.mubr.bf16.gmra.mxu0 %v232
    %v629 = vpop.f32.mrf.mxu0
    %v630 = vadd.f32 %v533, %v629
    %v631 = vpop.f32.mrf.mxu0
    %v632 = vpop.f32.mrf.mxu0
    %v633 = vadd.f32 %v536, %v632
    %v634 = vpop.f32.mrf.mxu0
    %635 = vmatprep.mubr.bf16.mxu0 %v237
    %636 = vmatmul.mubr.bf16.gmra.mxu0 %v236
    %v637 = vpop.f32.mrf.mxu0
    %v638 = vadd.f32 %v541, %v637
    %v639 = vpop.f32.mrf.mxu0
    %v640 = vpop.f32.mrf.mxu0
    %v641 = vadd.f32 %v544, %v640
    %v642 = vpop.f32.mrf.mxu0
    %643 = vmatprep.mubr.bf16.mxu0 %v241
    %644 = vmatmul.mubr.bf16.gmra.mxu0 %v240
    %v645 = vpop.f32.mrf.mxu0
    %v646 = vadd.f32 %v549, %v645
    %v647 = vpop.f32.mrf.mxu0
    %v648 = vpop.f32.mrf.mxu0
    %v649 = vadd.f32 %v552, %v648
    %v650 = vpop.f32.mrf.mxu0
    %651 = vmatprep.mubr.bf16.mxu0 %v245
    %652 = vmatmul.mubr.bf16.gmra.mxu0 %v244
    %v653 = vpop.f32.mrf.mxu0
    %v654 = vadd.f32 %v557, %v653
    %v655 = vpop.f32.mrf.mxu0
    %v656 = vpop.f32.mrf.mxu0
    %v657 = vadd.f32 %v560, %v656
    %v658 = vpop.f32.mrf.mxu0
    %659 = vmatprep.mubr.bf16.mxu0 %v249
    %660 = vmatmul.mubr.bf16.gmra.mxu0 %v248
    %v661 = vpop.f32.mrf.mxu0
    %v662 = vadd.f32 %v565, %v661
    %v663 = vpop.f32.mrf.mxu0
    %v664 = vpop.f32.mrf.mxu0
    %v665 = vadd.f32 %v568, %v664
    %v666 = vpop.f32.mrf.mxu0
    %667 = vdwg.mxu0
    %v668 = vld [vmem:[%s3] sm:$0xff]
    %v669 = vld [vmem:[%s3 + $0x8] sm:$0xff]
    %v670 = vld [vmem:[%s3 + $0x10] sm:$0xff]
    %v671 = vld [vmem:[%s3 + $0x18] sm:$0xff]
    %v672 = vld [vmem:[%s3 + $0x20] sm:$0xff]
    %v673 = vld [vmem:[%s3 + $0x28] sm:$0xff]
    %v674 = vld [vmem:[%s3 + $0x30] sm:$0xff]
    %v675 = vld [vmem:[%s3 + $0x38] sm:$0xff]
    %v676 = vld [vmem:[%s3 + $0x40] sm:$0xff]
    %v677 = vld [vmem:[%s3 + $0x48] sm:$0xff]
    %v678 = vld [vmem:[%s3 + $0x50] sm:$0xff]
    %v679 = vld [vmem:[%s3 + $0x58] sm:$0xff]
    %v680 = vld [vmem:[%s3 + $0x60] sm:$0xff]
    %v681 = vld [vmem:[%s3 + $0x68] sm:$0xff]
    %v682 = vld [vmem:[%s3 + $0x70] sm:$0xff]
    %v683 = vld [vmem:[%s3 + $0x78] sm:$0xff]
    %v684 = vadd.f32 %v606, %v668
    %v685 = vadd.f32 %v609, %v669
    %v686 = vadd.f32 %v614, %v670
    %v687 = vadd.f32 %v617, %v671
    %v688 = vadd.f32 %v622, %v672
    %v689 = vadd.f32 %v625, %v673
    %v690 = vadd.f32 %v630, %v674
    %v691 = vadd.f32 %v633, %v675
    %v692 = vadd.f32 %v638, %v676
    %v693 = vadd.f32 %v641, %v677
    %v694 = vadd.f32 %v646, %v678
    %v695 = vadd.f32 %v649, %v679
    %v696 = vadd.f32 %v654, %v680
    %v697 = vadd.f32 %v657, %v681
    %v698 = vadd.f32 %v662, %v682
    %v699 = vadd.f32 %v665, %v683
    %700 = vst [vmem:[#allocation2] sm:$0xff] %v684
    %701 = vst [vmem:[#allocation2 + $0x8] sm:$0xff] %v685
    %702 = vst [vmem:[#allocation2 + $0x10] sm:$0xff] %v686
    %703 = vst [vmem:[#allocation2 + $0x18] sm:$0xff] %v687
    %704 = vst [vmem:[#allocation2 + $0x20] sm:$0xff] %v688
    %705 = vst [vmem:[#allocation2 + $0x28] sm:$0xff] %v689
    %706 = vst [vmem:[#allocation2 + $0x30] sm:$0xff] %v690
    %707 = vst [vmem:[#allocation2 + $0x38] sm:$0xff] %v691
    %708 = vst [vmem:[#allocation2 + $0x40] sm:$0xff] %v692
    %709 = vst [vmem:[#allocation2 + $0x48] sm:$0xff] %v693
    %710 = vst [vmem:[#allocation2 + $0x50] sm:$0xff] %v694
    %711 = vst [vmem:[#allocation2 + $0x58] sm:$0xff] %v695
    %712 = vst [vmem:[#allocation2 + $0x60] sm:$0xff] %v696
    %713 = vst [vmem:[#allocation2 + $0x68] sm:$0xff] %v697
    %714 = vst [vmem:[#allocation2 + $0x70] sm:$0xff] %v698
    %715 = vst [vmem:[#allocation2 + $0x78] sm:$0xff] %v699
    // Predicated region
    $region18: #{_lambda_.9} parent=1 // pred_check
      _
    $region19: #{_lambda_.9} parent=1 // pred_check_branch
      %717 = sbr.rel (0) target = $region21
    $region20: #{_lambda_.9} parent=1 // pred_region
      %s719 = ssub.s32 2048, 2048
      %720 = vsyncadd [#allocation3], %s719
      %s721 = sshll.u32 [#allocation2], 4
      %s722 = int_to_ptr.vmem [resolvable:$true] %s721
      %727 = dma.vmem_to_hbm [thread:$0]  %s722, 2048, %s4, [#allocation3], 128, 128, 8
    $region21: #{_lambda_.9} parent=1 // pred_fallthru
      _
    // Predicated region
    $region22: #{_lambda_.9} parent=1 // pred_check
      _
    $region23: #{_lambda_.9} parent=1 // pred_check_branch
      %729 = sbr.rel (0) target = $region25
    $region24: #{_lambda_.9} parent=1 // pred_region
      %730 = dma.done [#allocation3], 2048
    $region25: #{_lambda_.9} parent=1 // pred_fallthru
      _
    %731 = vsyncpa [#allocation3], 1

// kernel: _lambda_.8
$region0: #{_lambda_.8}
  #allocation0 [shape = 'u32[]', space=smem, size = 0x4, offset = 0x4, fixed_abs, tag = 'smem constant byte address 0x4 - core index']
  #allocation1 [shape = 'u32[144,128]{1,0:T(1,128)}', space=vmem, size = 0x12000, scoped, tag = 'internal scratch']
  %s0 = inlined_call_operand.vmem [shape: f32[128,128], index: 0, kind: input, shape index: {}]
  %s1 = inlined_call_operand.vmem [shape: f32[1,128], index: 1, kind: input, shape index: {}]
  %s2 = inlined_call_operand.vmem [shape: f32[1,128], index: 2, kind: input, shape index: {}]
  %s3 = inlined_call_operand.vmem [shape: bf16[128,512], index: 3, kind: input, shape index: {}]
  %s4 = inlined_call_operand.vmem [shape: f32[1,512], index: 4, kind: input, shape index: {}]
  %s5 = inlined_call_operand.vmem [shape: bf16[128,512], index: 5, kind: output, shape index: {}]
  %s6 = sld [smem:[#allocation0]]
  $region30: #{_lambda_.8} parent=0
    _
  %s8 = ssub.s32 1, %s6
  %s9 = scalar_select 0, %s8, %s6
  // Predicated region
  $region2: #{_lambda_.8} parent=0 // pred_check
    _
  $region3: #{_lambda_.8} parent=0 // pred_check_branch
    %11 = sbr.rel (0) target = $region5
  $region4: #{_lambda_.8} parent=0 // pred_region
    _
  $region5: #{_lambda_.8} parent=0 // pred_fallthru
    _
  // Predicated region
  $region6: #{_lambda_.8} parent=0 // pred_check
    _
  $region7: #{_lambda_.8} parent=0 // pred_check_branch
    %13 = sbr.rel (0) target = $region9
  $region8: #{_lambda_.8} parent=0 // pred_region
    _
  $region9: #{_lambda_.8} parent=0 // pred_fallthru
    _
  // Predicated region
  $region10: #{_lambda_.8} parent=0 // pred_check
    _
  $region11: #{_lambda_.8} parent=0 // pred_check_branch
    %15 = sbr.rel (0) target = $region13
  $region12: #{_lambda_.8} parent=0 // pred_region
    _
  $region13: #{_lambda_.8} parent=0 // pred_fallthru
    _
  // Predicated region
  $region14: #{_lambda_.8} parent=0 // pred_check
    _
  $region15: #{_lambda_.8} parent=0 // pred_check_branch
    %17 = sbr.rel (0) target = $region17
  $region16: #{_lambda_.8} parent=0 // pred_region
    _
  $region17: #{_lambda_.8} parent=0 // pred_fallthru
    _
  // Predicated region
  $region18: #{_lambda_.8} parent=0 // pred_check
    _
  $region19: #{_lambda_.8} parent=0 // pred_check_branch
    %19 = sbr.rel (0) target = $region21
  $region20: #{_lambda_.8} parent=0 // pred_region
    _
  $region21: #{_lambda_.8} parent=0 // pred_fallthru
    _
  %v21 = vld [vmem:[%s0] sm:$0xff]
  %v22 = vld [vmem:[%s0 + $0x8] sm:$0xff]
  %v23 = vld [vmem:[%s0 + $0x10] sm:$0xff]
  %v24 = vld [vmem:[%s0 + $0x18] sm:$0xff]
  %v25 = vld [vmem:[%s0 + $0x20] sm:$0xff]
  %v26 = vld [vmem:[%s0 + $0x28] sm:$0xff]
  %v27 = vld [vmem:[%s0 + $0x30] sm:$0xff]
  %v28 = vld [vmem:[%s0 + $0x38] sm:$0xff]
  %v29 = vld [vmem:[%s0 + $0x40] sm:$0xff]
  %v30 = vld [vmem:[%s0 + $0x48] sm:$0xff]
  %v31 = vld [vmem:[%s0 + $0x50] sm:$0xff]
  %v32 = vld [vmem:[%s0 + $0x58] sm:$0xff]
  %v33 = vld [vmem:[%s0 + $0x60] sm:$0xff]
  %v34 = vld [vmem:[%s0 + $0x68] sm:$0xff]
  %v35 = vld [vmem:[%s0 + $0x70] sm:$0xff]
  %v36 = vld [vmem:[%s0 + $0x78] sm:$0xff]
  %37 = vadd.xlane.f32.xlu0 %v21
  %v38 = vpop.xlane.xlu0 %37
  %39 = vadd.xlane.f32.xlu0 %v22
  %v40 = vpop.xlane.xlu0 %39
  %41 = vadd.xlane.f32.xlu0 %v23
  %v42 = vpop.xlane.xlu0 %41
  %43 = vadd.xlane.f32.xlu0 %v24
  %v44 = vpop.xlane.xlu0 %43
  %45 = vadd.xlane.f32.xlu0 %v25
  %v46 = vpop.xlane.xlu0 %45
  %47 = vadd.xlane.f32.xlu0 %v26
  %v48 = vpop.xlane.xlu0 %47
  %49 = vadd.xlane.f32.xlu0 %v27
  %v50 = vpop.xlane.xlu0 %49
  %51 = vadd.xlane.f32.xlu0 %v28
  %v52 = vpop.xlane.xlu0 %51
  %53 = vadd.xlane.f32.xlu0 %v29
  %v54 = vpop.xlane.xlu0 %53
  %55 = vadd.xlane.f32.xlu0 %v30
  %v56 = vpop.xlane.xlu0 %55
  %57 = vadd.xlane.f32.xlu0 %v31
  %v58 = vpop.xlane.xlu0 %57
  %59 = vadd.xlane.f32.xlu0 %v32
  %v60 = vpop.xlane.xlu0 %59
  %61 = vadd.xlane.f32.xlu0 %v33
  %v62 = vpop.xlane.xlu0 %61
  %63 = vadd.xlane.f32.xlu0 %v34
  %v64 = vpop.xlane.xlu0 %63
  %65 = vadd.xlane.f32.xlu0 %v35
  %v66 = vpop.xlane.xlu0 %65
  %67 = vadd.xlane.f32.xlu0 %v36
  %v68 = vpop.xlane.xlu0 %67
  %v69 = vmul.f32 %v38, 0.0078125
  %v70 = vmul.f32 %v40, 0.0078125
  %v71 = vmul.f32 %v42, 0.0078125
  %v72 = vmul.f32 %v44, 0.0078125
  %v73 = vmul.f32 %v46, 0.0078125
  %v74 = vmul.f32 %v48, 0.0078125
  %v75 = vmul.f32 %v50, 0.0078125
  %v76 = vmul.f32 %v52, 0.0078125
  %v77 = vmul.f32 %v54, 0.0078125
  %v78 = vmul.f32 %v56, 0.0078125
  %v79 = vmul.f32 %v58, 0.0078125
  %v80 = vmul.f32 %v60, 0.0078125
  %v81 = vmul.f32 %v62, 0.0078125
  %v82 = vmul.f32 %v64, 0.0078125
  %v83 = vmul.f32 %v66, 0.0078125
  %v84 = vmul.f32 %v68, 0.0078125
  %v85 = vmul.f32 %v21, %v21
  %v86 = vmul.f32 %v22, %v22
  %v87 = vmul.f32 %v23, %v23
  %v88 = vmul.f32 %v24, %v24
  %v89 = vmul.f32 %v25, %v25
  %v90 = vmul.f32 %v26, %v26
  %v91 = vmul.f32 %v27, %v27
  %v92 = vmul.f32 %v28, %v28
  %v93 = vmul.f32 %v29, %v29
  %v94 = vmul.f32 %v30, %v30
  %v95 = vmul.f32 %v31, %v31
  %v96 = vmul.f32 %v32, %v32
  %v97 = vmul.f32 %v33, %v33
  %v98 = vmul.f32 %v34, %v34
  %v99 = vmul.f32 %v35, %v35
  %v100 = vmul.f32 %v36, %v36
  %101 = vadd.xlane.f32.xlu0 %v85
  %v102 = vpop.xlane.xlu0 %101
  %103 = vadd.xlane.f32.xlu0 %v86
  %v104 = vpop.xlane.xlu0 %103
  %105 = vadd.xlane.f32.xlu0 %v87
  %v106 = vpop.xlane.xlu0 %105
  %107 = vadd.xlane.f32.xlu0 %v88
  %v108 = vpop.xlane.xlu0 %107
  %109 = vadd.xlane.f32.xlu0 %v89
  %v110 = vpop.xlane.xlu0 %109
  %111 = vadd.xlane.f32.xlu0 %v90
  %v112 = vpop.xlane.xlu0 %111
  %113 = vadd.xlane.f32.xlu0 %v91
  %v114 = vpop.xlane.xlu0 %113
  %115 = vadd.xlane.f32.xlu0 %v92
  %v116 = vpop.xlane.xlu0 %115
  %117 = vadd.xlane.f32.xlu0 %v93
  %v118 = vpop.xlane.xlu0 %117
  %119 = vadd.xlane.f32.xlu0 %v94
  %v120 = vpop.xlane.xlu0 %119
  %121 = vadd.xlane.f32.xlu0 %v95
  %v122 = vpop.xlane.xlu0 %121
  %123 = vadd.xlane.f32.xlu0 %v96
  %v124 = vpop.xlane.xlu0 %123
  %125 = vadd.xlane.f32.xlu0 %v97
  %v126 = vpop.xlane.xlu0 %125
  %127 = vadd.xlane.f32.xlu0 %v98
  %v128 = vpop.xlane.xlu0 %127
  %129 = vadd.xlane.f32.xlu0 %v99
  %v130 = vpop.xlane.xlu0 %129
  %131 = vadd.xlane.f32.xlu0 %v100
  %v132 = vpop.xlane.xlu0 %131
  %v133 = vmul.f32 %v102, 0.0078125
  %v134 = vmul.f32 %v104, 0.0078125
  %v135 = vmul.f32 %v106, 0.0078125
  %v136 = vmul.f32 %v108, 0.0078125
  %v137 = vmul.f32 %v110, 0.0078125
  %v138 = vmul.f32 %v112, 0.0078125
  %v139 = vmul.f32 %v114, 0.0078125
  %v140 = vmul.f32 %v116, 0.0078125
  %v141 = vmul.f32 %v118, 0.0078125
  %v142 = vmul.f32 %v120, 0.0078125
  %v143 = vmul.f32 %v122, 0.0078125
  %v144 = vmul.f32 %v124, 0.0078125
  %v145 = vmul.f32 %v126, 0.0078125
  %v146 = vmul.f32 %v128, 0.0078125
  %v147 = vmul.f32 %v130, 0.0078125
  %v148 = vmul.f32 %v132, 0.0078125
  %v149 = vmul.f32 %v69, %v69
  %v150 = vmul.f32 %v70, %v70
  %v151 = vmul.f32 %v71, %v71
  %v152 = vmul.f32 %v72, %v72
  %v153 = vmul.f32 %v73, %v73
  %v154 = vmul.f32 %v74, %v74
  %v155 = vmul.f32 %v75, %v75
  %v156 = vmul.f32 %v76, %v76
  %v157 = vmul.f32 %v77, %v77
  %v158 = vmul.f32 %v78, %v78
  %v159 = vmul.f32 %v79, %v79
  %v160 = vmul.f32 %v80, %v80
  %v161 = vmul.f32 %v81, %v81
  %v162 = vmul.f32 %v82, %v82
  %v163 = vmul.f32 %v83, %v83
  %v164 = vmul.f32 %v84, %v84
  %v165 = vsub.f32 %v133, %v149
  %v166 = vsub.f32 %v134, %v150
  %v167 = vsub.f32 %v135, %v151
  %v168 = vsub.f32 %v136, %v152
  %v169 = vsub.f32 %v137, %v153
  %v170 = vsub.f32 %v138, %v154
  %v171 = vsub.f32 %v139, %v155
  %v172 = vsub.f32 %v140, %v156
  %v173 = vsub.f32 %v141, %v157
  %v174 = vsub.f32 %v142, %v158
  %v175 = vsub.f32 %v143, %v159
  %v176 = vsub.f32 %v144, %v160
  %v177 = vsub.f32 %v145, %v161
  %v178 = vsub.f32 %v146, %v162
  %v179 = vsub.f32 %v147, %v163
  %v180 = vsub.f32 %v148, %v164
  %v181 = vsub.f32 %v21, %v69
  %v182 = vsub.f32 %v22, %v70
  %v183 = vsub.f32 %v23, %v71
  %v184 = vsub.f32 %v24, %v72
  %v185 = vsub.f32 %v25, %v73
  %v186 = vsub.f32 %v26, %v74
  %v187 = vsub.f32 %v27, %v75
  %v188 = vsub.f32 %v28, %v76
  %v189 = vsub.f32 %v29, %v77
  %v190 = vsub.f32 %v30, %v78
  %v191 = vsub.f32 %v31, %v79
  %v192 = vsub.f32 %v32, %v80
  %v193 = vsub.f32 %v33, %v81
  %v194 = vsub.f32 %v34, %v82
  %v195 = vsub.f32 %v35, %v83
  %v196 = vsub.f32 %v36, %v84
  %v197 = vadd.f32 %v165, 1e-05
  %v198 = vadd.f32 %v166, 1e-05
  %v199 = vadd.f32 %v167, 1e-05
  %v200 = vadd.f32 %v168, 1e-05
  %v201 = vadd.f32 %v169, 1e-05
  %v202 = vadd.f32 %v170, 1e-05
  %v203 = vadd.f32 %v171, 1e-05
  %v204 = vadd.f32 %v172, 1e-05
  %v205 = vadd.f32 %v173, 1e-05
  %v206 = vadd.f32 %v174, 1e-05
  %v207 = vadd.f32 %v175, 1e-05
  %v208 = vadd.f32 %v176, 1e-05
  %v209 = vadd.f32 %v177, 1e-05
  %v210 = vadd.f32 %v178, 1e-05
  %v211 = vadd.f32 %v179, 1e-05
  %v212 = vadd.f32 %v180, 1e-05
  %v213 = vrsqrt.pop %v197
  %v214 = vrsqrt.pop %v198
  %v215 = vrsqrt.pop %v199
  %v216 = vrsqrt.pop %v200
  %v217 = vrsqrt.pop %v201
  %v218 = vrsqrt.pop %v202
  %v219 = vrsqrt.pop %v203
  %v220 = vrsqrt.pop %v204
  %v221 = vrsqrt.pop %v205
  %v222 = vrsqrt.pop %v206
  %v223 = vrsqrt.pop %v207
  %v224 = vrsqrt.pop %v208
  %v225 = vrsqrt.pop %v209
  %v226 = vrsqrt.pop %v210
  %v227 = vrsqrt.pop %v211
  %v228 = vrsqrt.pop %v212
  %v229 = vmul.f32 %v181, %v213
  %v230 = vmul.f32 %v182, %v214
  %v231 = vmul.f32 %v183, %v215
  %v232 = vmul.f32 %v184, %v216
  %v233 = vmul.f32 %v185, %v217
  %v234 = vmul.f32 %v186, %v218
  %v235 = vmul.f32 %v187, %v219
  %v236 = vmul.f32 %v188, %v220
  %v237 = vmul.f32 %v189, %v221
  %v238 = vmul.f32 %v190, %v222
  %v239 = vmul.f32 %v191, %v223
  %v240 = vmul.f32 %v192, %v224
  %v241 = vmul.f32 %v193, %v225
  %v242 = vmul.f32 %v194, %v226
  %v243 = vmul.f32 %v195, %v227
  %v244 = vmul.f32 %v196, %v228
  %v245 = vld [vmem:[%s1] sm:$0x1]
  %v247 = vlaneseq
  %v248 = vshrl.u32 %v247, 7
  %v249 = vsub.s32 0, %v248
  %v250 = vrot.slane %v245, %v249
  %v252 = vmul.f32 %v229, %v250
  %v253 = vmul.f32 %v230, %v250
  %v254 = vmul.f32 %v231, %v250
  %v255 = vmul.f32 %v232, %v250
  %v256 = vmul.f32 %v233, %v250
  %v257 = vmul.f32 %v234, %v250
  %v258 = vmul.f32 %v235, %v250
  %v259 = vmul.f32 %v236, %v250
  %v260 = vmul.f32 %v237, %v250
  %v261 = vmul.f32 %v238, %v250
  %v262 = vmul.f32 %v239, %v250
  %v263 = vmul.f32 %v240, %v250
  %v264 = vmul.f32 %v241, %v250
  %v265 = vmul.f32 %v242, %v250
  %v266 = vmul.f32 %v243, %v250
  %v267 = vmul.f32 %v244, %v250
  %v268 = vld [vmem:[%s2] sm:$0x1]
  %v270 = vlaneseq
  %v271 = vshrl.u32 %v270, 7
  %v272 = vsub.s32 0, %v271
  %v273 = vrot.slane %v268, %v272
  %v275 = vadd.f32 %v252, %v273
  %v276 = vadd.f32 %v253, %v273
  %v277 = vadd.f32 %v254, %v273
  %v278 = vadd.f32 %v255, %v273
  %v279 = vadd.f32 %v256, %v273
  %v280 = vadd.f32 %v257, %v273
  %v281 = vadd.f32 %v258, %v273
  %v282 = vadd.f32 %v259, %v273
  %v283 = vadd.f32 %v260, %v273
  %v284 = vadd.f32 %v261, %v273
  %v285 = vadd.f32 %v262, %v273
  %v286 = vadd.f32 %v263, %v273
  %v287 = vadd.f32 %v264, %v273
  %v288 = vadd.f32 %v265, %v273
  %v289 = vadd.f32 %v266, %v273
  %v290 = vadd.f32 %v267, %v273
  %v291 = vpack.c.bf16 %v276, %v275
  %v292 = vpack.c.bf16 %v278, %v277
  %v293 = vpack.c.bf16 %v280, %v279
  %v294 = vpack.c.bf16 %v282, %v281
  %v295 = vpack.c.bf16 %v284, %v283
  %v296 = vpack.c.bf16 %v286, %v285
  %v297 = vpack.c.bf16 %v288, %v287
  %v298 = vpack.c.bf16 %v290, %v289
  %v299 = vld [vmem:[%s3] sm:$0xff]
  %v300 = vld [vmem:[%s3 + $0x8] sm:$0xff]
  %v301 = vld [vmem:[%s3 + $0x10] sm:$0xff]
  %v302 = vld [vmem:[%s3 + $0x18] sm:$0xff]
  %v303 = vld [vmem:[%s3 + $0x20] sm:$0xff]
  %v304 = vld [vmem:[%s3 + $0x28] sm:$0xff]
  %v305 = vld [vmem:[%s3 + $0x30] sm:$0xff]
  %v306 = vld [vmem:[%s3 + $0x38] sm:$0xff]
  %v307 = vld [vmem:[%s3 + $0x40] sm:$0xff]
  %v308 = vld [vmem:[%s3 + $0x48] sm:$0xff]
  %v309 = vld [vmem:[%s3 + $0x50] sm:$0xff]
  %v310 = vld [vmem:[%s3 + $0x58] sm:$0xff]
  %v311 = vld [vmem:[%s3 + $0x60] sm:$0xff]
  %v312 = vld [vmem:[%s3 + $0x68] sm:$0xff]
  %v313 = vld [vmem:[%s3 + $0x70] sm:$0xff]
  %v314 = vld [vmem:[%s3 + $0x78] sm:$0xff]
  %v315 = vld [vmem:[%s3 + $0x80] sm:$0xff]
  %v316 = vld [vmem:[%s3 + $0x88] sm:$0xff]
  %v317 = vld [vmem:[%s3 + $0x90] sm:$0xff]
  %v318 = vld [vmem:[%s3 + $0x98] sm:$0xff]
  %v319 = vld [vmem:[%s3 + $0xa0] sm:$0xff]
  %v320 = vld [vmem:[%s3 + $0xa8] sm:$0xff]
  %v321 = vld [vmem:[%s3 + $0xb0] sm:$0xff]
  %v322 = vld [vmem:[%s3 + $0xb8] sm:$0xff]
  %v323 = vld [vmem:[%s3 + $0xc0] sm:$0xff]
  %v324 = vld [vmem:[%s3 + $0xc8] sm:$0xff]
  %v325 = vld [vmem:[%s3 + $0xd0] sm:$0xff]
  %v326 = vld [vmem:[%s3 + $0xd8] sm:$0xff]
  %v327 = vld [vmem:[%s3 + $0xe0] sm:$0xff]
  %v328 = vld [vmem:[%s3 + $0xe8] sm:$0xff]
  %v329 = vld [vmem:[%s3 + $0xf0] sm:$0xff]
  %v330 = vld [vmem:[%s3 + $0xf8] sm:$0xff]
  %v331 = vld [vmem:[%s4] sm:$0xf]
  %v333 = vlaneseq
  %v334 = vshrl.u32 %v333, 7
  %v335 = vsub.s32 0, %v334
  %v336 = vrot.slane %v331, %v335
  %v337 = vlaneseq
  %v338 = vshrl.u32 %v337, 7
  %v339 = vsub.s32 1, %v338
  %v340 = vrot.slane %v331, %v339
  %v341 = vlaneseq
  %v342 = vshrl.u32 %v341, 7
  %v343 = vsub.s32 2, %v342
  %v344 = vrot.slane %v331, %v343
  %v345 = vlaneseq
  %v346 = vshrl.u32 %v345, 7
  %v347 = vsub.s32 3, %v346
  %v348 = vrot.slane %v331, %v347
  %v385 = vunpack.c.l.b16 %v299
  %v386 = vunpack.c.h.b16 %v299
  %v387 = vunpack.c.l.b16 %v300
  %v388 = vunpack.c.h.b16 %v300
  %v389 = vunpack.c.l.b16 %v301
  %v390 = vunpack.c.h.b16 %v301
  %v391 = vunpack.c.l.b16 %v302
  %v392 = vunpack.c.h.b16 %v302
  %v393 = vunpack.c.l.b16 %v303
  %v394 = vunpack.c.h.b16 %v303
  %v395 = vunpack.c.l.b16 %v304
  %v396 = vunpack.c.h.b16 %v304
  %v397 = vunpack.c.l.b16 %v305
  %v398 = vunpack.c.h.b16 %v305
  %v399 = vunpack.c.l.b16 %v306
  %v400 = vunpack.c.h.b16 %v306
  %v401 = vunpack.c.l.b16 %v307
  %v402 = vunpack.c.h.b16 %v307
  %v403 = vunpack.c.l.b16 %v308
  %v404 = vunpack.c.h.b16 %v308
  %v405 = vunpack.c.l.b16 %v309
  %v406 = vunpack.c.h.b16 %v309
  %v407 = vunpack.c.l.b16 %v310
  %v408 = vunpack.c.h.b16 %v310
  %v409 = vunpack.c.l.b16 %v311
  %v410 = vunpack.c.h.b16 %v311
  %v411 = vunpack.c.l.b16 %v312
  %v412 = vunpack.c.h.b16 %v312
  %v413 = vunpack.c.l.b16 %v313
  %v414 = vunpack.c.h.b16 %v313
  %v415 = vunpack.c.l.b16 %v314
  %v416 = vunpack.c.h.b16 %v314
  %v417 = vunpack.c.l.b16 %v315
  %v418 = vunpack.c.h.b16 %v315
  %v419 = vunpack.c.l.b16 %v316
  %v420 = vunpack.c.h.b16 %v316
  %v421 = vunpack.c.l.b16 %v317
  %v422 = vunpack.c.h.b16 %v317
  %v423 = vunpack.c.l.b16 %v318
  %v424 = vunpack.c.h.b16 %v318
  %v425 = vunpack.c.l.b16 %v319
  %v426 = vunpack.c.h.b16 %v319
  %v427 = vunpack.c.l.b16 %v320
  %v428 = vunpack.c.h.b16 %v320
  %v429 = vunpack.c.l.b16 %v321
  %v430 = vunpack.c.h.b16 %v321
  %v431 = vunpack.c.l.b16 %v322
  %v432 = vunpack.c.h.b16 %v322
  %v433 = vunpack.c.l.b16 %v323
  %v434 = vunpack.c.h.b16 %v323
  %v435 = vunpack.c.l.b16 %v324
  %v436 = vunpack.c.h.b16 %v324
  %v437 = vunpack.c.l.b16 %v325
  %v438 = vunpack.c.h.b16 %v325
  %v439 = vunpack.c.l.b16 %v326
  %v440 = vunpack.c.h.b16 %v326
  %v441 = vunpack.c.l.b16 %v327
  %v442 = vunpack.c.h.b16 %v327
  %v443 = vunpack.c.l.b16 %v328
  %v444 = vunpack.c.h.b16 %v328
  %v445 = vunpack.c.l.b16 %v329
  %v446 = vunpack.c.h.b16 %v329
  %v447 = vunpack.c.l.b16 %v330
  %v448 = vunpack.c.h.b16 %v330
  %v449 = vpack.c.b16 %v389, %v385
  %v450 = vpack.c.b16 %v390, %v386
  %v451 = vpack.c.b16 %v391, %v387
  %v452 = vpack.c.b16 %v392, %v388
  %v453 = vpack.c.b16 %v397, %v393
  %v454 = vpack.c.b16 %v398, %v394
  %v455 = vpack.c.b16 %v399, %v395
  %v456 = vpack.c.b16 %v400, %v396
  %v457 = vpack.c.b16 %v405, %v401
  %v458 = vpack.c.b16 %v406, %v402
  %v459 = vpack.c.b16 %v407, %v403
  %v460 = vpack.c.b16 %v408, %v404
  %v461 = vpack.c.b16 %v413, %v409
  %v462 = vpack.c.b16 %v414, %v410
  %v463 = vpack.c.b16 %v415, %v411
  %v464 = vpack.c.b16 %v416, %v412
  %v465 = vpack.c.b16 %v421, %v417
  %v466 = vpack.c.b16 %v422, %v418
  %v467 = vpack.c.b16 %v423, %v419
  %v468 = vpack.c.b16 %v424, %v420
  %v469 = vpack.c.b16 %v429, %v425
  %v470 = vpack.c.b16 %v430, %v426
  %v471 = vpack.c.b16 %v431, %v427
  %v472 = vpack.c.b16 %v432, %v428
  %v473 = vpack.c.b16 %v437, %v433
  %v474 = vpack.c.b16 %v438, %v434
  %v475 = vpack.c.b16 %v439, %v435
  %v476 = vpack.c.b16 %v440, %v436
  %v477 = vpack.c.b16 %v445, %v441
  %v478 = vpack.c.b16 %v446, %v442
  %v479 = vpack.c.b16 %v447, %v443
  %v480 = vpack.c.b16 %v448, %v444
  %513 = vmatprep.subr.bf16.mxu0 %v478
  %514 = vmatpush1.bf16.msra.mxu0 %v477
  %515 = vmatprep.subr.bf16.mxu0 %v474
  %516 = vmatpush1.bf16.msra.mxu0 %v473
  %517 = vmatprep.subr.bf16.mxu0 %v470
  %518 = vmatpush1.bf16.msra.mxu0 %v469
  %519 = vmatprep.subr.bf16.mxu0 %v466
  %520 = vmatpush1.bf16.msra.mxu0 %v465
  %521 = vmatprep.subr.bf16.mxu0 %v462
  %522 = vmatpush1.bf16.msra.mxu0 %v461
  %523 = vmatprep.subr.bf16.mxu0 %v458
  %524 = vmatpush1.bf16.msra.mxu0 %v457
  %525 = vmatprep.subr.bf16.mxu0 %v454
  %526 = vmatpush1.bf16.msra.mxu0 %v453
  %527 = vmatprep.subr.bf16.mxu0 %v450
  %528 = vmatpush1.bf16.msra.mxu0 %v449
  %529 = vmatprep.subr.bf16.mxu0 0
  %530 = vmatpush2.bf16.msra.mxu0 0
  %531 = vmatprep.subr.bf16.mxu0 0
  %532 = vmatpush2.bf16.msra.mxu0 0
  %533 = vmatprep.subr.bf16.mxu0 0
  %534 = vmatpush2.bf16.msra.mxu0 0
  %535 = vmatprep.subr.bf16.mxu0 0
  %536 = vmatpush2.bf16.msra.mxu0 0
  %537 = vmatprep.subr.bf16.mxu0 0
  %538 = vmatpush2.bf16.msra.mxu0 0
  %539 = vmatprep.subr.bf16.mxu0 0
  %540 = vmatpush2.bf16.msra.mxu0 0
  %541 = vmatprep.subr.bf16.mxu0 0
  %542 = vmatpush2.bf16.msra.mxu0 0
  %543 = vmatprep.subr.bf16.mxu0 0
  %544 = vmatpush2.bf16.msra.mxu0 0
  %545 = vmatprep.mubr.bf16.mxu0 0
  %546 = vmatmul.mubr.bf16.gmra.mxu0 %v291
  %v547 = vpop.f32.mrf.mxu0
  %v548 = vadd.f32 %v336, %v547
  %v549 = vpop.f32.mrf.mxu0
  %v550 = vadd.f32 %v340, %v549
  %v551 = vpop.f32.mrf.mxu0
  %v552 = vadd.f32 %v336, %v551
  %v553 = vpop.f32.mrf.mxu0
  %v554 = vadd.f32 %v340, %v553
  %555 = vmatprep.mubr.bf16.mxu0 0
  %556 = vmatmul.mubr.bf16.gmra.mxu0 %v292
  %v557 = vpop.f32.mrf.mxu0
  %v558 = vadd.f32 %v336, %v557
  %v559 = vpop.f32.mrf.mxu0
  %v560 = vadd.f32 %v340, %v559
  %v561 = vpop.f32.mrf.mxu0
  %v562 = vadd.f32 %v336, %v561
  %v563 = vpop.f32.mrf.mxu0
  %v564 = vadd.f32 %v340, %v563
  %565 = vmatprep.mubr.bf16.mxu0 0
  %566 = vmatmul.mubr.bf16.gmra.mxu0 %v293
  %v567 = vpop.f32.mrf.mxu0
  %v568 = vadd.f32 %v336, %v567
  %v569 = vpop.f32.mrf.mxu0
  %v570 = vadd.f32 %v340, %v569
  %v571 = vpop.f32.mrf.mxu0
  %v572 = vadd.f32 %v336, %v571
  %v573 = vpop.f32.mrf.mxu0
  %v574 = vadd.f32 %v340, %v573
  %575 = vmatprep.mubr.bf16.mxu0 0
  %576 = vmatmul.mubr.bf16.gmra.mxu0 %v294
  %v577 = vpop.f32.mrf.mxu0
  %v578 = vadd.f32 %v336, %v577
  %v579 = vpop.f32.mrf.mxu0
  %v580 = vadd.f32 %v340, %v579
  %v581 = vpop.f32.mrf.mxu0
  %v582 = vadd.f32 %v336, %v581
  %v583 = vpop.f32.mrf.mxu0
  %v584 = vadd.f32 %v340, %v583
  %585 = vmatprep.mubr.bf16.mxu0 0
  %586 = vmatmul.mubr.bf16.gmra.mxu0 %v295
  %v587 = vpop.f32.mrf.mxu0
  %v588 = vadd.f32 %v336, %v587
  %v589 = vpop.f32.mrf.mxu0
  %v590 = vadd.f32 %v340, %v589
  %v591 = vpop.f32.mrf.mxu0
  %v592 = vadd.f32 %v336, %v591
  %v593 = vpop.f32.mrf.mxu0
  %v594 = vadd.f32 %v340, %v593
  %595 = vmatprep.mubr.bf16.mxu0 0
  %596 = vmatmul.mubr.bf16.gmra.mxu0 %v296
  %v597 = vpop.f32.mrf.mxu0
  %v598 = vadd.f32 %v336, %v597
  %v599 = vpop.f32.mrf.mxu0
  %v600 = vadd.f32 %v340, %v599
  %v601 = vpop.f32.mrf.mxu0
  %v602 = vadd.f32 %v336, %v601
  %v603 = vpop.f32.mrf.mxu0
  %v604 = vadd.f32 %v340, %v603
  %605 = vmatprep.mubr.bf16.mxu0 0
  %606 = vmatmul.mubr.bf16.gmra.mxu0 %v297
  %v607 = vpop.f32.mrf.mxu0
  %v608 = vadd.f32 %v336, %v607
  %v609 = vpop.f32.mrf.mxu0
  %v610 = vadd.f32 %v340, %v609
  %v611 = vpop.f32.mrf.mxu0
  %v612 = vadd.f32 %v336, %v611
  %v613 = vpop.f32.mrf.mxu0
  %v614 = vadd.f32 %v340, %v613
  %615 = vmatprep.mubr.bf16.mxu0 0
  %616 = vmatmul.mubr.bf16.gmra.mxu0 %v298
  %v617 = vpop.f32.mrf.mxu0
  %v618 = vadd.f32 %v336, %v617
  %v619 = vpop.f32.mrf.mxu0
  %v620 = vadd.f32 %v340, %v619
  %v621 = vpop.f32.mrf.mxu0
  %v622 = vadd.f32 %v336, %v621
  %v623 = vpop.f32.mrf.mxu0
  %v624 = vadd.f32 %v340, %v623
  %625 = vdwg.mxu0
  %626 = vmatprep.subr.bf16.mxu0 %v480
  %627 = vmatpush1.bf16.msra.mxu0 %v479
  %628 = vmatprep.subr.bf16.mxu0 %v476
  %629 = vmatpush1.bf16.msra.mxu0 %v475
  %630 = vmatprep.subr.bf16.mxu0 %v472
  %631 = vmatpush1.bf16.msra.mxu0 %v471
  %632 = vmatprep.subr.bf16.mxu0 %v468
  %633 = vmatpush1.bf16.msra.mxu0 %v467
  %634 = vmatprep.subr.bf16.mxu0 %v464
  %635 = vmatpush1.bf16.msra.mxu0 %v463
  %636 = vmatprep.subr.bf16.mxu0 %v460
  %637 = vmatpush1.bf16.msra.mxu0 %v459
  %638 = vmatprep.subr.bf16.mxu0 %v456
  %639 = vmatpush1.bf16.msra.mxu0 %v455
  %640 = vmatprep.subr.bf16.mxu0 %v452
  %641 = vmatpush1.bf16.msra.mxu0 %v451
  %642 = vmatprep.subr.bf16.mxu0 0
  %643 = vmatpush2.bf16.msra.mxu0 0
  %644 = vmatprep.subr.bf16.mxu0 0
  %645 = vmatpush2.bf16.msra.mxu0 0
  %646 = vmatprep.subr.bf16.mxu0 0
  %647 = vmatpush2.bf16.msra.mxu0 0
  %648 = vmatprep.subr.bf16.mxu0 0
  %649 = vmatpush2.bf16.msra.mxu0 0
  %650 = vmatprep.subr.bf16.mxu0 0
  %651 = vmatpush2.bf16.msra.mxu0 0
  %652 = vmatprep.subr.bf16.mxu0 0
  %653 = vmatpush2.bf16.msra.mxu0 0
  %654 = vmatprep.subr.bf16.mxu0 0
  %655 = vmatpush2.bf16.msra.mxu0 0
  %656 = vmatprep.subr.bf16.mxu0 0
  %657 = vmatpush2.bf16.msra.mxu0 0
  %658 = vmatprep.mubr.bf16.mxu0 0
  %659 = vmatmul.mubr.bf16.gmra.mxu0 %v291
  %v660 = vpop.f32.mrf.mxu0
  %v661 = vadd.f32 %v344, %v660
  %v662 = vpop.f32.mrf.mxu0
  %v663 = vadd.f32 %v348, %v662
  %v664 = vpop.f32.mrf.mxu0
  %v665 = vadd.f32 %v344, %v664
  %v666 = vpop.f32.mrf.mxu0
  %v667 = vadd.f32 %v348, %v666
  %668 = vmatprep.mubr.bf16.mxu0 0
  %669 = vmatmul.mubr.bf16.gmra.mxu0 %v292
  %v670 = vpop.f32.mrf.mxu0
  %v671 = vadd.f32 %v344, %v670
  %v672 = vpop.f32.mrf.mxu0
  %v673 = vadd.f32 %v348, %v672
  %v674 = vpop.f32.mrf.mxu0
  %v675 = vadd.f32 %v344, %v674
  %v676 = vpop.f32.mrf.mxu0
  %v677 = vadd.f32 %v348, %v676
  %678 = vmatprep.mubr.bf16.mxu0 0
  %679 = vmatmul.mubr.bf16.gmra.mxu0 %v293
  %v680 = vpop.f32.mrf.mxu0
  %v681 = vadd.f32 %v344, %v680
  %v682 = vpop.f32.mrf.mxu0
  %v683 = vadd.f32 %v348, %v682
  %v684 = vpop.f32.mrf.mxu0
  %v685 = vadd.f32 %v344, %v684
  %v686 = vpop.f32.mrf.mxu0
  %v687 = vadd.f32 %v348, %v686
  %688 = vmatprep.mubr.bf16.mxu0 0
  %689 = vmatmul.mubr.bf16.gmra.mxu0 %v294
  %v690 = vpop.f32.mrf.mxu0
  %v691 = vadd.f32 %v344, %v690
  %v692 = vpop.f32.mrf.mxu0
  %v693 = vadd.f32 %v348, %v692
  %v694 = vpop.f32.mrf.mxu0
  %v695 = vadd.f32 %v344, %v694
  %v696 = vpop.f32.mrf.mxu0
  %v697 = vadd.f32 %v348, %v696
  %698 = vmatprep.mubr.bf16.mxu0 0
  %699 = vmatmul.mubr.bf16.gmra.mxu0 %v295
  %v700 = vpop.f32.mrf.mxu0
  %v701 = vadd.f32 %v344, %v700
  %v702 = vpop.f32.mrf.mxu0
  %v703 = vadd.f32 %v348, %v702
  %v704 = vpop.f32.mrf.mxu0
  %v705 = vadd.f32 %v344, %v704
  %v706 = vpop.f32.mrf.mxu0
  %v707 = vadd.f32 %v348, %v706
  %708 = vmatprep.mubr.bf16.mxu0 0
  %709 = vmatmul.mubr.bf16.gmra.mxu0 %v296
  %v710 = vpop.f32.mrf.mxu0
  %v711 = vadd.f32 %v344, %v710
  %v712 = vpop.f32.mrf.mxu0
  %v713 = vadd.f32 %v348, %v712
  %v714 = vpop.f32.mrf.mxu0
  %v715 = vadd.f32 %v344, %v714
  %v716 = vpop.f32.mrf.mxu0
  %v717 = vadd.f32 %v348, %v716
  %718 = vmatprep.mubr.bf16.mxu0 0
  %719 = vmatmul.mubr.bf16.gmra.mxu0 %v297
  %v720 = vpop.f32.mrf.mxu0
  %v721 = vadd.f32 %v344, %v720
  %v722 = vpop.f32.mrf.mxu0
  %v723 = vadd.f32 %v348, %v722
  %v724 = vpop.f32.mrf.mxu0
  %v725 = vadd.f32 %v344, %v724
  %v726 = vpop.f32.mrf.mxu0
  %v727 = vadd.f32 %v348, %v726
  %728 = vmatprep.mubr.bf16.mxu0 0
  %729 = vmatmul.mubr.bf16.gmra.mxu0 %v298
  %v730 = vpop.f32.mrf.mxu0
  %v731 = vadd.f32 %v344, %v730
  %v732 = vpop.f32.mrf.mxu0
  %v733 = vadd.f32 %v348, %v732
  %v734 = vpop.f32.mrf.mxu0
  %v735 = vadd.f32 %v344, %v734
  %v736 = vpop.f32.mrf.mxu0
  %v737 = vadd.f32 %v348, %v736
  %738 = vdwg.mxu0
  %v739 = vmul.f32 %v548, 0.5
  %v740 = vmul.f32 %v550, 0.5
  %v741 = vmul.f32 %v661, 0.5
  %v742 = vmul.f32 %v663, 0.5
  %v743 = vmul.f32 %v552, 0.5
  %v744 = vmul.f32 %v554, 0.5
  %v745 = vmul.f32 %v665, 0.5
  %v746 = vmul.f32 %v667, 0.5
  %v747 = vmul.f32 %v558, 0.5
  %v748 = vmul.f32 %v560, 0.5
  %v749 = vmul.f32 %v671, 0.5
  %v750 = vmul.f32 %v673, 0.5
  %v751 = vmul.f32 %v562, 0.5
  %v752 = vmul.f32 %v564, 0.5
  %v753 = vmul.f32 %v675, 0.5
  %v754 = vmul.f32 %v677, 0.5
  %v755 = vmul.f32 %v568, 0.5
  %v756 = vmul.f32 %v570, 0.5
  %v757 = vmul.f32 %v681, 0.5
  %v758 = vmul.f32 %v683, 0.5
  %v759 = vmul.f32 %v572, 0.5
  %v760 = vmul.f32 %v574, 0.5
  %v761 = vmul.f32 %v685, 0.5
  %v762 = vmul.f32 %v687, 0.5
  %v763 = vmul.f32 %v578, 0.5
  %v764 = vmul.f32 %v580, 0.5
  %v765 = vmul.f32 %v691, 0.5
  %v766 = vmul.f32 %v693, 0.5
  %v767 = vmul.f32 %v582, 0.5
  %v768 = vmul.f32 %v584, 0.5
  %v769 = vmul.f32 %v695, 0.5
  %v770 = vmul.f32 %v697, 0.5
  %v771 = vmul.f32 %v588, 0.5
  %v772 = vmul.f32 %v590, 0.5
  %v773 = vmul.f32 %v701, 0.5
  %v774 = vmul.f32 %v703, 0.5
  %v775 = vmul.f32 %v592, 0.5
  %v776 = vmul.f32 %v594, 0.5
  %v777 = vmul.f32 %v705, 0.5
  %v778 = vmul.f32 %v707, 0.5
  %v779 = vmul.f32 %v598, 0.5
  %v780 = vmul.f32 %v600, 0.5
  %v781 = vmul.f32 %v711, 0.5
  %v782 = vmul.f32 %v713, 0.5
  %v783 = vmul.f32 %v602, 0.5
  %v784 = vmul.f32 %v604, 0.5
  %v785 = vmul.f32 %v715, 0.5
  %v786 = vmul.f32 %v717, 0.5
  %v787 = vmul.f32 %v608, 0.5
  %v788 = vmul.f32 %v610, 0.5
  %v789 = vmul.f32 %v721, 0.5
  %v790 = vmul.f32 %v723, 0.5
  %v791 = vmul.f32 %v612, 0.5
  %v792 = vmul.f32 %v614, 0.5
  %v793 = vmul.f32 %v725, 0.5
  %v794 = vmul.f32 %v727, 0.5
  %v795 = vmul.f32 %v618, 0.5
  %v796 = vmul.f32 %v620, 0.5
  %v797 = vmul.f32 %v731, 0.5
  %v798 = vmul.f32 %v733, 0.5
  %v799 = vmul.f32 %v622, 0.5
  %v800 = vmul.f32 %v624, 0.5
  %v801 = vmul.f32 %v735, 0.5
  %v802 = vmul.f32 %v737, 0.5
  %v803 = vmul.f32 %v548, 0.044715
  %v804 = vmul.f32 %v550, 0.044715
  %v805 = vmul.f32 %v661, 0.044715
  %v806 = vmul.f32 %v663, 0.044715
  %v807 = vmul.f32 %v552, 0.044715
  %v808 = vmul.f32 %v554, 0.044715
  %v809 = vmul.f32 %v665, 0.044715
  %v810 = vmul.f32 %v667, 0.044715
  %v811 = vmul.f32 %v558, 0.044715
  %v812 = vmul.f32 %v560, 0.044715
  %v813 = vmul.f32 %v671, 0.044715
  %v814 = vmul.f32 %v673, 0.044715
  %v815 = vmul.f32 %v562, 0.044715
  %v816 = vmul.f32 %v564, 0.044715
  %v817 = vmul.f32 %v675, 0.044715
  %v818 = vmul.f32 %v677, 0.044715
  %v819 = vmul.f32 %v568, 0.044715
  %v820 = vmul.f32 %v570, 0.044715
  %v821 = vmul.f32 %v681, 0.044715
  %v822 = vmul.f32 %v683, 0.044715
  %v823 = vmul.f32 %v572, 0.044715
  %v824 = vmul.f32 %v574, 0.044715
  %v825 = vmul.f32 %v685, 0.044715
  %v826 = vmul.f32 %v687, 0.044715
  %v827 = vmul.f32 %v578, 0.044715
  %v828 = vmul.f32 %v580, 0.044715
  %v829 = vmul.f32 %v691, 0.044715
  %v830 = vmul.f32 %v693, 0.044715
  %v831 = vmul.f32 %v582, 0.044715
  %v832 = vmul.f32 %v584, 0.044715
  %v833 = vmul.f32 %v695, 0.044715
  %v834 = vmul.f32 %v697, 0.044715
  %v835 = vmul.f32 %v588, 0.044715
  %v836 = vmul.f32 %v590, 0.044715
  %v837 = vmul.f32 %v701, 0.044715
  %v838 = vmul.f32 %v703, 0.044715
  %v839 = vmul.f32 %v592, 0.044715
  %v840 = vmul.f32 %v594, 0.044715
  %v841 = vmul.f32 %v705, 0.044715
  %v842 = vmul.f32 %v707, 0.044715
  %v843 = vmul.f32 %v598, 0.044715
  %v844 = vmul.f32 %v600, 0.044715
  %v845 = vmul.f32 %v711, 0.044715
  %v846 = vmul.f32 %v713, 0.044715
  %v847 = vmul.f32 %v602, 0.044715
  %v848 = vmul.f32 %v604, 0.044715
  %v849 = vmul.f32 %v715, 0.044715
  %v850 = vmul.f32 %v717, 0.044715
  %v851 = vmul.f32 %v608, 0.044715
  %v852 = vmul.f32 %v610, 0.044715
  %v853 = vmul.f32 %v721, 0.044715
  %v854 = vmul.f32 %v723, 0.044715
  %v855 = vmul.f32 %v612, 0.044715
  %v856 = vmul.f32 %v614, 0.044715
  %v857 = vmul.f32 %v725, 0.044715
  %v858 = vmul.f32 %v727, 0.044715
  %v859 = vmul.f32 %v618, 0.044715
  %v860 = vmul.f32 %v620, 0.044715
  %v861 = vmul.f32 %v731, 0.044715
  %v862 = vmul.f32 %v733, 0.044715
  %v863 = vmul.f32 %v622, 0.044715
  %v864 = vmul.f32 %v624, 0.044715
  %v865 = vmul.f32 %v735, 0.044715
  %v866 = vmul.f32 %v737, 0.044715
  %v867 = vmul.f32 %v803, %v548
  %v868 = vmul.f32 %v804, %v550
  %v869 = vmul.f32 %v805, %v661
  %v870 = vmul.f32 %v806, %v663
  %v871 = vmul.f32 %v807, %v552
  %v872 = vmul.f32 %v808, %v554
  %v873 = vmul.f32 %v809, %v665
  %v874 = vmul.f32 %v810, %v667
  %v875 = vmul.f32 %v811, %v558
  %v876 = vmul.f32 %v812, %v560
  %v877 = vmul.f32 %v813, %v671
  %v878 = vmul.f32 %v814, %v673
  %v879 = vmul.f32 %v815, %v562
  %v880 = vmul.f32 %v816, %v564
  %v881 = vmul.f32 %v817, %v675
  %v882 = vmul.f32 %v818, %v677
  %v883 = vmul.f32 %v819, %v568
  %v884 = vmul.f32 %v820, %v570
  %v885 = vmul.f32 %v821, %v681
  %v886 = vmul.f32 %v822, %v683
  %v887 = vmul.f32 %v823, %v572
  %v888 = vmul.f32 %v824, %v574
  %v889 = vmul.f32 %v825, %v685
  %v890 = vmul.f32 %v826, %v687
  %v891 = vmul.f32 %v827, %v578
  %v892 = vmul.f32 %v828, %v580
  %v893 = vmul.f32 %v829, %v691
  %v894 = vmul.f32 %v830, %v693
  %v895 = vmul.f32 %v831, %v582
  %v896 = vmul.f32 %v832, %v584
  %v897 = vmul.f32 %v833, %v695
  %v898 = vmul.f32 %v834, %v697
  %v899 = vmul.f32 %v835, %v588
  %v900 = vmul.f32 %v836, %v590
  %v901 = vmul.f32 %v837, %v701
  %v902 = vmul.f32 %v838, %v703
  %v903 = vmul.f32 %v839, %v592
  %v904 = vmul.f32 %v840, %v594
  %v905 = vmul.f32 %v841, %v705
  %v906 = vmul.f32 %v842, %v707
  %v907 = vmul.f32 %v843, %v598
  %v908 = vmul.f32 %v844, %v600
  %v909 = vmul.f32 %v845, %v711
  %v910 = vmul.f32 %v846, %v713
  %v911 = vmul.f32 %v847, %v602
  %v912 = vmul.f32 %v848, %v604
  %v913 = vmul.f32 %v849, %v715
  %v914 = vmul.f32 %v850, %v717
  %v915 = vmul.f32 %v851, %v608
  %v916 = vmul.f32 %v852, %v610
  %v917 = vmul.f32 %v853, %v721
  %v918 = vmul.f32 %v854, %v723
  %v919 = vmul.f32 %v855, %v612
  %v920 = vmul.f32 %v856, %v614
  %v921 = vmul.f32 %v857, %v725
  %v922 = vmul.f32 %v858, %v727
  %v923 = vmul.f32 %v859, %v618
  %v924 = vmul.f32 %v860, %v620
  %v925 = vmul.f32 %v861, %v731
  %v926 = vmul.f32 %v862, %v733
  %v927 = vmul.f32 %v863, %v622
  %v928 = vmul.f32 %v864, %v624
  %v929 = vmul.f32 %v865, %v735
  %v930 = vmul.f32 %v866, %v737
  %v931 = vmul.f32 %v867, %v548
  %v932 = vmul.f32 %v868, %v550
  %v933 = vmul.f32 %v869, %v661
  %v934 = vmul.f32 %v870, %v663
  %v935 = vmul.f32 %v871, %v552
  %v936 = vmul.f32 %v872, %v554
  %v937 = vmul.f32 %v873, %v665
  %v938 = vmul.f32 %v874, %v667
  %v939 = vmul.f32 %v875, %v558
  %v940 = vmul.f32 %v876, %v560
  %v941 = vmul.f32 %v877, %v671
  %v942 = vmul.f32 %v878, %v673
  %v943 = vmul.f32 %v879, %v562
  %v944 = vmul.f32 %v880, %v564
  %v945 = vmul.f32 %v881, %v675
  %v946 = vmul.f32 %v882, %v677
  %v947 = vmul.f32 %v883, %v568
  %v948 = vmul.f32 %v884, %v570
  %v949 = vmul.f32 %v885, %v681
  %v950 = vmul.f32 %v886, %v683
  %v951 = vmul.f32 %v887, %v572
  %v952 = vmul.f32 %v888, %v574
  %v953 = vmul.f32 %v889, %v685
  %v954 = vmul.f32 %v890, %v687
  %v955 = vmul.f32 %v891, %v578
  %v956 = vmul.f32 %v892, %v580
  %v957 = vmul.f32 %v893, %v691
  %v958 = vmul.f32 %v894, %v693
  %v959 = vmul.f32 %v895, %v582
  %v960 = vmul.f32 %v896, %v584
  %v961 = vmul.f32 %v897, %v695
  %v962 = vmul.f32 %v898, %v697
  %v963 = vmul.f32 %v899, %v588
  %v964 = vmul.f32 %v900, %v590
  %v965 = vmul.f32 %v901, %v701
  %v966 = vmul.f32 %v902, %v703
  %v967 = vmul.f32 %v903, %v592
  %v968 = vmul.f32 %v904, %v594
  %v969 = vmul.f32 %v905, %v705
  %v970 = vmul.f32 %v906, %v707
  %v971 = vmul.f32 %v907, %v598
  %v972 = vmul.f32 %v908, %v600
  %v973 = vmul.f32 %v909, %v711
  %v974 = vmul.f32 %v910, %v713
  %v975 = vmul.f32 %v911, %v602
  %v976 = vmul.f32 %v912, %v604
  %v977 = vmul.f32 %v913, %v715
  %v978 = vmul.f32 %v914, %v717
  %v979 = vmul.f32 %v915, %v608
  %v980 = vmul.f32 %v916, %v610
  %v981 = vmul.f32 %v917, %v721
  %v982 = vmul.f32 %v918, %v723
  %v983 = vmul.f32 %v919, %v612
  %v984 = vmul.f32 %v920, %v614
  %v985 = vmul.f32 %v921, %v725
  %v986 = vmul.f32 %v922, %v727
  %v987 = vmul.f32 %v923, %v618
  %v988 = vmul.f32 %v924, %v620
  %v989 = vmul.f32 %v925, %v731
  %v990 = vmul.f32 %v926, %v733
  %v991 = vmul.f32 %v927, %v622
  %v992 = vmul.f32 %v928, %v624
  %v993 = vmul.f32 %v929, %v735
  %v994 = vmul.f32 %v930, %v737
  %v995 = vadd.f32 %v548, %v931
  %v996 = vadd.f32 %v550, %v932
  %v997 = vadd.f32 %v661, %v933
  %v998 = vadd.f32 %v663, %v934
  %v999 = vadd.f32 %v552, %v935
  %v1000 = vadd.f32 %v554, %v936
  %v1001 = vadd.f32 %v665, %v937
  %v1002 = vadd.f32 %v667, %v938
  %v1003 = vadd.f32 %v558, %v939
  %v1004 = vadd.f32 %v560, %v940
  %v1005 = vadd.f32 %v671, %v941
  %v1006 = vadd.f32 %v673, %v942
  %v1007 = vadd.f32 %v562, %v943
  %v1008 = vadd.f32 %v564, %v944
  %v1009 = vadd.f32 %v675, %v945
  %v1010 = vadd.f32 %v677, %v946
  %v1011 = vadd.f32 %v568, %v947
  %v1012 = vadd.f32 %v570, %v948
  %v1013 = vadd.f32 %v681, %v949
  %v1014 = vadd.f32 %v683, %v950
  %v1015 = vadd.f32 %v572, %v951
  %v1016 = vadd.f32 %v574, %v952
  %v1017 = vadd.f32 %v685, %v953
  %v1018 = vadd.f32 %v687, %v954
  %v1019 = vadd.f32 %v578, %v955
  %v1020 = vadd.f32 %v580, %v956
  %v1021 = vadd.f32 %v691, %v957
  %v1022 = vadd.f32 %v693, %v958
  %v1023 = vadd.f32 %v582, %v959
  %v1024 = vadd.f32 %v584, %v960
  %v1025 = vadd.f32 %v695, %v961
  %v1026 = vadd.f32 %v697, %v962
  %v1027 = vadd.f32 %v588, %v963
  %v1028 = vadd.f32 %v590, %v964
  %v1029 = vadd.f32 %v701, %v965
  %v1030 = vadd.f32 %v703, %v966
  %v1031 = vadd.f32 %v592, %v967
  %v1032 = vadd.f32 %v594, %v968
  %v1033 = vadd.f32 %v705, %v969
  %v1034 = vadd.f32 %v707, %v970
  %v1035 = vadd.f32 %v598, %v971
  %v1036 = vadd.f32 %v600, %v972
  %v1037 = vadd.f32 %v711, %v973
  %v1038 = vadd.f32 %v713, %v974
  %v1039 = vadd.f32 %v602, %v975
  %v1040 = vadd.f32 %v604, %v976
  %v1041 = vadd.f32 %v715, %v977
  %v1042 = vadd.f32 %v717, %v978
  %v1043 = vadd.f32 %v608, %v979
  %v1044 = vadd.f32 %v610, %v980
  %v1045 = vadd.f32 %v721, %v981
  %v1046 = vadd.f32 %v723, %v982
  %v1047 = vadd.f32 %v612, %v983
  %v1048 = vadd.f32 %v614, %v984
  %v1049 = vadd.f32 %v725, %v985
  %v1050 = vadd.f32 %v727, %v986
  %v1051 = vadd.f32 %v618, %v987
  %v1052 = vadd.f32 %v620, %v988
  %v1053 = vadd.f32 %v731, %v989
  %v1054 = vadd.f32 %v733, %v990
  %v1055 = vadd.f32 %v622, %v991
  %v1056 = vadd.f32 %v624, %v992
  %v1057 = vadd.f32 %v735, %v993
  %v1058 = vadd.f32 %v737, %v994
  %v1059 = vmul.f32 %v995, 0.7978846
  %v1060 = vmul.f32 %v996, 0.7978846
  %v1061 = vmul.f32 %v997, 0.7978846
  %v1062 = vmul.f32 %v998, 0.7978846
  %v1063 = vmul.f32 %v999, 0.7978846
  %v1064 = vmul.f32 %v1000, 0.7978846
  %v1065 = vmul.f32 %v1001, 0.7978846
  %v1066 = vmul.f32 %v1002, 0.7978846
  %v1067 = vmul.f32 %v1003, 0.7978846
  %v1068 = vmul.f32 %v1004, 0.7978846
  %v1069 = vmul.f32 %v1005, 0.7978846
  %v1070 = vmul.f32 %v1006, 0.7978846
  %v1071 = vmul.f32 %v1007, 0.7978846
  %v1072 = vmul.f32 %v1008, 0.7978846
  %v1073 = vmul.f32 %v1009, 0.7978846
  %v1074 = vmul.f32 %v1010, 0.7978846
  %v1075 = vmul.f32 %v1011, 0.7978846
  %v1076 = vmul.f32 %v1012, 0.7978846
  %v1077 = vmul.f32 %v1013, 0.7978846
  %v1078 = vmul.f32 %v1014, 0.7978846
  %v1079 = vmul.f32 %v1015, 0.7978846
  %v1080 = vmul.f32 %v1016, 0.7978846
  %v1081 = vmul.f32 %v1017, 0.7978846
  %v1082 = vmul.f32 %v1018, 0.7978846
  %v1083 = vmul.f32 %v1019, 0.7978846
  %v1084 = vmul.f32 %v1020, 0.7978846
  %v1085 = vmul.f32 %v1021, 0.7978846
  %v1086 = vmul.f32 %v1022, 0.7978846
  %v1087 = vmul.f32 %v1023, 0.7978846
  %v1088 = vmul.f32 %v1024, 0.7978846
  %v1089 = vmul.f32 %v1025, 0.7978846
  %v1090 = vmul.f32 %v1026, 0.7978846
  %v1091 = vmul.f32 %v1027, 0.7978846
  %v1092 = vmul.f32 %v1028, 0.7978846
  %v1093 = vmul.f32 %v1029, 0.7978846
  %v1094 = vmul.f32 %v1030, 0.7978846
  %v1095 = vmul.f32 %v1031, 0.7978846
  %v1096 = vmul.f32 %v1032, 0.7978846
  %v1097 = vmul.f32 %v1033, 0.7978846
  %v1098 = vmul.f32 %v1034, 0.7978846
  %v1099 = vmul.f32 %v1035, 0.7978846
  %v1100 = vmul.f32 %v1036, 0.7978846
  %v1101 = vmul.f32 %v1037, 0.7978846
  %v1102 = vmul.f32 %v1038, 0.7978846
  %v1103 = vmul.f32 %v1039, 0.7978846
  %v1104 = vmul.f32 %v1040, 0.7978846
  %v1105 = vmul.f32 %v1041, 0.7978846
  %v1106 = vmul.f32 %v1042, 0.7978846
  %v1107 = vmul.f32 %v1043, 0.7978846
  %v1108 = vmul.f32 %v1044, 0.7978846
  %v1109 = vmul.f32 %v1045, 0.7978846
  %v1110 = vmul.f32 %v1046, 0.7978846
  %v1111 = vmul.f32 %v1047, 0.7978846
  %v1112 = vmul.f32 %v1048, 0.7978846
  %v1113 = vmul.f32 %v1049, 0.7978846
  %v1114 = vmul.f32 %v1050, 0.7978846
  %v1115 = vmul.f32 %v1051, 0.7978846
  %v1116 = vmul.f32 %v1052, 0.7978846
  %v1117 = vmul.f32 %v1053, 0.7978846
  %v1118 = vmul.f32 %v1054, 0.7978846
  %v1119 = vmul.f32 %v1055, 0.7978846
  %v1120 = vmul.f32 %v1056, 0.7978846
  %v1121 = vmul.f32 %v1057, 0.7978846
  %v1122 = vmul.f32 %v1058, 0.7978846
  %v1123 = vtanh.pop %v1059
  %v1124 = vtanh.pop %v1060
  %v1125 = vtanh.pop %v1061
  %v1126 = vtanh.pop %v1062
  %v1127 = vtanh.pop %v1063
  %v1128 = vtanh.pop %v1064
  %v1129 = vtanh.pop %v1065
  %v1130 = vtanh.pop %v1066
  %v1131 = vtanh.pop %v1067
  %v1132 = vtanh.pop %v1068
  %v1133 = vtanh.pop %v1069
  %v1134 = vtanh.pop %v1070
  %v1135 = vtanh.pop %v1071
  %v1136 = vtanh.pop %v1072
  %v1137 = vtanh.pop %v1073
  %v1138 = vtanh.pop %v1074
  %v1139 = vtanh.pop %v1075
  %v1140 = vtanh.pop %v1076
  %v1141 = vtanh.pop %v1077
  %v1142 = vtanh.pop %v1078
  %v1143 = vtanh.pop %v1079
  %v1144 = vtanh.pop %v1080
  %v1145 = vtanh.pop %v1081
  %v1146 = vtanh.pop %v1082
  %v1147 = vtanh.pop %v1083
  %v1148 = vtanh.pop %v1084
  %v1149 = vtanh.pop %v1085
  %v1150 = vtanh.pop %v1086
  %v1151 = vtanh.pop %v1087
  %v1152 = vtanh.pop %v1088
  %v1153 = vtanh.pop %v1089
  %v1154 = vtanh.pop %v1090
  %v1155 = vtanh.pop %v1091
  %v1156 = vtanh.pop %v1092
  %v1157 = vtanh.pop %v1093
  %v1158 = vtanh.pop %v1094
  %v1159 = vtanh.pop %v1095
  %v1160 = vtanh.pop %v1096
  %v1161 = vtanh.pop %v1097
  %v1162 = vtanh.pop %v1098
  %v1163 = vtanh.pop %v1099
  %v1164 = vtanh.pop %v1100
  %v1165 = vtanh.pop %v1101
  %v1166 = vtanh.pop %v1102
  %v1167 = vtanh.pop %v1103
  %v1168 = vtanh.pop %v1104
  %v1169 = vtanh.pop %v1105
  %v1170 = vtanh.pop %v1106
  %v1171 = vtanh.pop %v1107
  %v1172 = vtanh.pop %v1108
  %v1173 = vtanh.pop %v1109
  %v1174 = vtanh.pop %v1110
  %v1175 = vtanh.pop %v1111
  %v1176 = vtanh.pop %v1112
  %v1177 = vtanh.pop %v1113
  %v1178 = vtanh.pop %v1114
  %v1179 = vtanh.pop %v1115
  %v1180 = vtanh.pop %v1116
  %v1181 = vtanh.pop %v1117
  %v1182 = vtanh.pop %v1118
  %v1183 = vtanh.pop %v1119
  %v1184 = vtanh.pop %v1120
  %v1185 = vtanh.pop %v1121
  %v1186 = vtanh.pop %v1122
  %v1187 = vadd.f32 %v1123, 1.0
  %v1188 = vadd.f32 %v1124, 1.0
  %v1189 = vadd.f32 %v1125, 1.0
  %v1190 = vadd.f32 %v1126, 1.0
  %v1191 = vadd.f32 %v1127, 1.0
  %v1192 = vadd.f32 %v1128, 1.0
  %v1193 = vadd.f32 %v1129, 1.0
  %v1194 = vadd.f32 %v1130, 1.0
  %v1195 = vadd.f32 %v1131, 1.0
  %v1196 = vadd.f32 %v1132, 1.0
  %v1197 = vadd.f32 %v1133, 1.0
  %v1198 = vadd.f32 %v1134, 1.0
  %v1199 = vadd.f32 %v1135, 1.0
  %v1200 = vadd.f32 %v1136, 1.0
  %v1201 = vadd.f32 %v1137, 1.0
  %v1202 = vadd.f32 %v1138, 1.0
  %v1203 = vadd.f32 %v1139, 1.0
  %v1204 = vadd.f32 %v1140, 1.0
  %v1205 = vadd.f32 %v1141, 1.0
  %v1206 = vadd.f32 %v1142, 1.0
  %v1207 = vadd.f32 %v1143, 1.0
  %v1208 = vadd.f32 %v1144, 1.0
  %v1209 = vadd.f32 %v1145, 1.0
  %v1210 = vadd.f32 %v1146, 1.0
  %v1211 = vadd.f32 %v1147, 1.0
  %v1212 = vadd.f32 %v1148, 1.0
  %v1213 = vadd.f32 %v1149, 1.0
  %v1214 = vadd.f32 %v1150, 1.0
  %v1215 = vadd.f32 %v1151, 1.0
  %v1216 = vadd.f32 %v1152, 1.0
  %v1217 = vadd.f32 %v1153, 1.0
  %v1218 = vadd.f32 %v1154, 1.0
  %v1219 = vadd.f32 %v1155, 1.0
  %v1220 = vadd.f32 %v1156, 1.0
  %v1221 = vadd.f32 %v1157, 1.0
  %v1222 = vadd.f32 %v1158, 1.0
  %v1223 = vadd.f32 %v1159, 1.0
  %v1224 = vadd.f32 %v1160, 1.0
  %v1225 = vadd.f32 %v1161, 1.0
  %v1226 = vadd.f32 %v1162, 1.0
  %v1227 = vadd.f32 %v1163, 1.0
  %v1228 = vadd.f32 %v1164, 1.0
  %v1229 = vadd.f32 %v1165, 1.0
  %v1230 = vadd.f32 %v1166, 1.0
  %v1231 = vadd.f32 %v1167, 1.0
  %v1232 = vadd.f32 %v1168, 1.0
  %v1233 = vadd.f32 %v1169, 1.0
  %v1234 = vadd.f32 %v1170, 1.0
  %v1235 = vadd.f32 %v1171, 1.0
  %v1236 = vadd.f32 %v1172, 1.0
  %v1237 = vadd.f32 %v1173, 1.0
  %v1238 = vadd.f32 %v1174, 1.0
  %v1239 = vadd.f32 %v1175, 1.0
  %v1240 = vadd.f32 %v1176, 1.0
  %v1241 = vadd.f32 %v1177, 1.0
  %v1242 = vadd.f32 %v1178, 1.0
  %v1243 = vadd.f32 %v1179, 1.0
  %v1244 = vadd.f32 %v1180, 1.0
  %v1245 = vadd.f32 %v1181, 1.0
  %v1246 = vadd.f32 %v1182, 1.0
  %v1247 = vadd.f32 %v1183, 1.0
  %v1248 = vadd.f32 %v1184, 1.0
  %v1249 = vadd.f32 %v1185, 1.0
  %v1250 = vadd.f32 %v1186, 1.0
  %v1251 = vmul.f32 %v739, %v1187
  %v1252 = vmul.f32 %v740, %v1188
  %v1253 = vmul.f32 %v741, %v1189
  %v1254 = vmul.f32 %v742, %v1190
  %v1255 = vmul.f32 %v743, %v1191
  %v1256 = vmul.f32 %v744, %v1192
  %v1257 = vmul.f32 %v745, %v1193
  %v1258 = vmul.f32 %v746, %v1194
  %v1259 = vmul.f32 %v747, %v1195
  %v1260 = vmul.f32 %v748, %v1196
  %v1261 = vmul.f32 %v749, %v1197
  %v1262 = vmul.f32 %v750, %v1198
  %v1263 = vmul.f32 %v751, %v1199
  %v1264 = vmul.f32 %v752, %v1200
  %v1265 = vmul.f32 %v753, %v1201
  %v1266 = vmul.f32 %v754, %v1202
  %v1267 = vmul.f32 %v755, %v1203
  %v1268 = vmul.f32 %v756, %v1204
  %v1269 = vmul.f32 %v757, %v1205
  %v1270 = vmul.f32 %v758, %v1206
  %v1271 = vmul.f32 %v759, %v1207
  %v1272 = vmul.f32 %v760, %v1208
  %v1273 = vmul.f32 %v761, %v1209
  %v1274 = vmul.f32 %v762, %v1210
  %v1275 = vmul.f32 %v763, %v1211
  %v1276 = vmul.f32 %v764, %v1212
  %v1277 = vmul.f32 %v765, %v1213
  %v1278 = vmul.f32 %v766, %v1214
  %v1279 = vmul.f32 %v767, %v1215
  %v1280 = vmul.f32 %v768, %v1216
  %v1281 = vmul.f32 %v769, %v1217
  %v1282 = vmul.f32 %v770, %v1218
  %v1283 = vmul.f32 %v771, %v1219
  %v1284 = vmul.f32 %v772, %v1220
  %v1285 = vmul.f32 %v773, %v1221
  %v1286 = vmul.f32 %v774, %v1222
  %v1287 = vmul.f32 %v775, %v1223
  %v1288 = vmul.f32 %v776, %v1224
  %v1289 = vmul.f32 %v777, %v1225
  %v1290 = vmul.f32 %v778, %v1226
  %v1291 = vmul.f32 %v779, %v1227
  %v1292 = vmul.f32 %v780, %v1228
  %v1293 = vmul.f32 %v781, %v1229
  %v1294 = vmul.f32 %v782, %v1230
  %v1295 = vmul.f32 %v783, %v1231
  %v1296 = vmul.f32 %v784, %v1232
  %v1297 = vmul.f32 %v785, %v1233
  %v1298 = vmul.f32 %v786, %v1234
  %v1299 = vmul.f32 %v787, %v1235
  %v1300 = vmul.f32 %v788, %v1236
  %v1301 = vmul.f32 %v789, %v1237
  %v1302 = vmul.f32 %v790, %v1238
  %v1303 = vmul.f32 %v791, %v1239
  %v1304 = vmul.f32 %v792, %v1240
  %v1305 = vmul.f32 %v793, %v1241
  %v1306 = vmul.f32 %v794, %v1242
  %v1307 = vmul.f32 %v795, %v1243
  %v1308 = vmul.f32 %v796, %v1244
  %v1309 = vmul.f32 %v797, %v1245
  %v1310 = vmul.f32 %v798, %v1246
  %v1311 = vmul.f32 %v799, %v1247
  %v1312 = vmul.f32 %v800, %v1248
  %v1313 = vmul.f32 %v801, %v1249
  %v1314 = vmul.f32 %v802, %v1250
  %v1315 = vpack.c.bf16 %v1255, %v1251
  %v1316 = vpack.c.bf16 %v1256, %v1252
  %v1317 = vpack.c.bf16 %v1257, %v1253
  %v1318 = vpack.c.bf16 %v1258, %v1254
  %v1319 = vpack.c.bf16 %v1263, %v1259
  %v1320 = vpack.c.bf16 %v1264, %v1260
  %v1321 = vpack.c.bf16 %v1265, %v1261
  %v1322 = vpack.c.bf16 %v1266, %v1262
  %v1323 = vpack.c.bf16 %v1271, %v1267
  %v1324 = vpack.c.bf16 %v1272, %v1268
  %v1325 = vpack.c.bf16 %v1273, %v1269
  %v1326 = vpack.c.bf16 %v1274, %v1270
  %v1327 = vpack.c.bf16 %v1279, %v1275
  %v1328 = vpack.c.bf16 %v1280, %v1276
  %v1329 = vpack.c.bf16 %v1281, %v1277
  %v1330 = vpack.c.bf16 %v1282, %v1278
  %v1331 = vpack.c.bf16 %v1287, %v1283
  %v1332 = vpack.c.bf16 %v1288, %v1284
  %v1333 = vpack.c.bf16 %v1289, %v1285
  %v1334 = vpack.c.bf16 %v1290, %v1286
  %v1335 = vpack.c.bf16 %v1295, %v1291
  %v1336 = vpack.c.bf16 %v1296, %v1292
  %v1337 = vpack.c.bf16 %v1297, %v1293
  %v1338 = vpack.c.bf16 %v1298, %v1294
  %v1339 = vpack.c.bf16 %v1303, %v1299
  %v1340 = vpack.c.bf16 %v1304, %v1300
  %v1341 = vpack.c.bf16 %v1305, %v1301
  %v1342 = vpack.c.bf16 %v1306, %v1302
  %v1343 = vpack.c.bf16 %v1311, %v1307
  %v1344 = vpack.c.bf16 %v1312, %v1308
  %v1345 = vpack.c.bf16 %v1313, %v1309
  %v1346 = vpack.c.bf16 %v1314, %v1310
  %v1379 = vunpack.c.l.b16 %v1315
  %v1380 = vunpack.c.l.b16 %v1316
  %v1381 = vunpack.c.l.b16 %v1317
  %v1382 = vunpack.c.l.b16 %v1318
  %v1383 = vunpack.c.h.b16 %v1315
  %v1384 = vunpack.c.h.b16 %v1316
  %v1385 = vunpack.c.h.b16 %v1317
  %v1386 = vunpack.c.h.b16 %v1318
  %v1387 = vunpack.c.l.b16 %v1319
  %v1388 = vunpack.c.l.b16 %v1320
  %v1389 = vunpack.c.l.b16 %v1321
  %v1390 = vunpack.c.l.b16 %v1322
  %v1391 = vunpack.c.h.b16 %v1319
  %v1392 = vunpack.c.h.b16 %v1320
  %v1393 = vunpack.c.h.b16 %v1321
  %v1394 = vunpack.c.h.b16 %v1322
  %v1395 = vunpack.c.l.b16 %v1323
  %v1396 = vunpack.c.l.b16 %v1324
  %v1397 = vunpack.c.l.b16 %v1325
  %v1398 = vunpack.c.l.b16 %v1326
  %v1399 = vunpack.c.h.b16 %v1323
  %v1400 = vunpack.c.h.b16 %v1324
  %v1401 = vunpack.c.h.b16 %v1325
  %v1402 = vunpack.c.h.b16 %v1326
  %v1403 = vunpack.c.l.b16 %v1327
  %v1404 = vunpack.c.l.b16 %v1328
  %v1405 = vunpack.c.l.b16 %v1329
  %v1406 = vunpack.c.l.b16 %v1330
  %v1407 = vunpack.c.h.b16 %v1327
  %v1408 = vunpack.c.h.b16 %v1328
  %v1409 = vunpack.c.h.b16 %v1329
  %v1410 = vunpack.c.h.b16 %v1330
  %v1411 = vunpack.c.l.b16 %v1331
  %v1412 = vunpack.c.l.b16 %v1332
  %v1413 = vunpack.c.l.b16 %v1333
  %v1414 = vunpack.c.l.b16 %v1334
  %v1415 = vunpack.c.h.b16 %v1331
  %v1416 = vunpack.c.h.b16 %v1332
  %v1417 = vunpack.c.h.b16 %v1333
  %v1418 = vunpack.c.h.b16 %v1334
  %v1419 = vunpack.c.l.b16 %v1335
  %v1420 = vunpack.c.l.b16 %v1336
  %v1421 = vunpack.c.l.b16 %v1337
  %v1422 = vunpack.c.l.b16 %v1338
  %v1423 = vunpack.c.h.b16 %v1335
  %v1424 = vunpack.c.h.b16 %v1336
  %v1425 = vunpack.c.h.b16 %v1337
  %v1426 = vunpack.c.h.b16 %v1338
  %v1427 = vunpack.c.l.b16 %v1339
  %v1428 = vunpack.c.l.b16 %v1340
  %v1429 = vunpack.c.l.b16 %v1341
  %v1430 = vunpack.c.l.b16 %v1342
  %v1431 = vunpack.c.h.b16 %v1339
  %v1432 = vunpack.c.h.b16 %v1340
  %v1433 = vunpack.c.h.b16 %v1341
  %v1434 = vunpack.c.h.b16 %v1342
  %v1435 = vunpack.c.l.b16 %v1343
  %v1436 = vunpack.c.l.b16 %v1344
  %v1437 = vunpack.c.l.b16 %v1345
  %v1438 = vunpack.c.l.b16 %v1346
  %v1439 = vunpack.c.h.b16 %v1343
  %v1440 = vunpack.c.h.b16 %v1344
  %v1441 = vunpack.c.h.b16 %v1345
  %v1442 = vunpack.c.h.b16 %v1346
  %v1443 = vpack.c.b16 %v1380, %v1379
  %v1444 = vpack.c.b16 %v1382, %v1381
  %v1445 = vpack.c.b16 %v1384, %v1383
  %v1446 = vpack.c.b16 %v1386, %v1385
  %v1447 = vpack.c.b16 %v1388, %v1387
  %v1448 = vpack.c.b16 %v1390, %v1389
  %v1449 = vpack.c.b16 %v1392, %v1391
  %v1450 = vpack.c.b16 %v1394, %v1393
  %v1451 = vpack.c.b16 %v1396, %v1395
  %v1452 = vpack.c.b16 %v1398, %v1397
  %v1453 = vpack.c.b16 %v1400, %v1399
  %v1454 = vpack.c.b16 %v1402, %v1401
  %v1455 = vpack.c.b16 %v1404, %v1403
  %v1456 = vpack.c.b16 %v1406, %v1405
  %v1457 = vpack.c.b16 %v1408, %v1407
  %v1458 = vpack.c.b16 %v1410, %v1409
  %v1459 = vpack.c.b16 %v1412, %v1411
  %v1460 = vpack.c.b16 %v1414, %v1413
  %v1461 = vpack.c.b16 %v1416, %v1415
  %v1462 = vpack.c.b16 %v1418, %v1417
  %v1463 = vpack.c.b16 %v1420, %v1419
  %v1464 = vpack.c.b16 %v1422, %v1421
  %v1465 = vpack.c.b16 %v1424, %v1423
  %v1466 = vpack.c.b16 %v1426, %v1425
  %v1467 = vpack.c.b16 %v1428, %v1427
  %v1468 = vpack.c.b16 %v1430, %v1429
  %v1469 = vpack.c.b16 %v1432, %v1431
  %v1470 = vpack.c.b16 %v1434, %v1433
  %v1471 = vpack.c.b16 %v1436, %v1435
  %v1472 = vpack.c.b16 %v1438, %v1437
  %v1473 = vpack.c.b16 %v1440, %v1439
  %v1474 = vpack.c.b16 %v1442, %v1441
  %1507 = vst [vmem:[%s5] sm:$0xff] %v1443
  %1508 = vst [vmem:[%s5 + $0x8] sm:$0xff] %v1444
  %1509 = vst [vmem:[%s5 + $0x10] sm:$0xff] %v1445
  %1510 = vst [vmem:[%s5 + $0x18] sm:$0xff] %v1446
  %1511 = vst [vmem:[%s5 + $0x20] sm:$0xff] %v1447
  %1512 = vst [vmem:[%s5 + $0x28] sm:$0xff] %v1448
  %1513 = vst [vmem:[%s5 + $0x30] sm:$0xff] %v1449
  %1514 = vst [vmem:[%s5 + $0x38] sm:$0xff] %v1450
  %1515 = vst [vmem:[%s5 + $0x40] sm:$0xff] %v1451
  %1516 = vst [vmem:[%s5 + $0x48] sm:$0xff] %v1452
  %1517 = vst [vmem:[%s5 + $0x50] sm:$0xff] %v1453
  %1518 = vst [vmem:[%s5 + $0x58] sm:$0xff] %v1454
  %1519 = vst [vmem:[%s5 + $0x60] sm:$0xff] %v1455
  %1520 = vst [vmem:[%s5 + $0x68] sm:$0xff] %v1456
  %1521 = vst [vmem:[%s5 + $0x70] sm:$0xff] %v1457
  %1522 = vst [vmem:[%s5 + $0x78] sm:$0xff] %v1458
  %1523 = vst [vmem:[%s5 + $0x80] sm:$0xff] %v1459
  %1524 = vst [vmem:[%s5 + $0x88] sm:$0xff] %v1460
  %1525 = vst [vmem:[%s5 + $0x90] sm:$0xff] %v1461
  %1526 = vst [vmem:[%s5 + $0x98] sm:$0xff] %v1462
  %1527 = vst [vmem:[%s5 + $0xa0] sm:$0xff] %v1463
  %1528 = vst [vmem:[%s5 + $0xa8] sm:$0xff] %v1464
  %1529 = vst [vmem:[%s5 + $0xb0] sm:$0xff] %v1465
  %1530 = vst [vmem:[%s5 + $0xb8] sm:$0xff] %v1466
  %1531 = vst [vmem:[%s5 + $0xc0] sm:$0xff] %v1467
  %1532 = vst [vmem:[%s5 + $0xc8] sm:$0xff] %v1468
  %1533 = vst [vmem:[%s5 + $0xd0] sm:$0xff] %v1469
  %1534 = vst [vmem:[%s5 + $0xd8] sm:$0xff] %v1470
  %1535 = vst [vmem:[%s5 + $0xe0] sm:$0xff] %v1471
  %1536 = vst [vmem:[%s5 + $0xe8] sm:$0xff] %v1472
  %1537 = vst [vmem:[%s5 + $0xf0] sm:$0xff] %v1473
  %1538 = vst [vmem:[%s5 + $0xf8] sm:$0xff] %v1474
  // Predicated region
  $region22: #{_lambda_.8} parent=0 // pred_check
    _
  $region23: #{_lambda_.8} parent=0 // pred_check_branch
    %1540 = sbr.rel (0) target = $region25
  $region24: #{_lambda_.8} parent=0 // pred_region
    _
  $region25: #{_lambda_.8} parent=0 // pred_fallthru
    _
  // Predicated region
  $region26: #{_lambda_.8} parent=0 // pred_check
    _
  $region27: #{_lambda_.8} parent=0 // pred_check_branch
    %1542 = sbr.rel (0) target = $region29
  $region28: #{_lambda_.8} parent=0 // pred_region
    _
  $region29: #{_lambda_.8} parent=0 // pred_fallthru
    _

</llo_original>
